<compile_context>
chip_gen: v5e
topology: v5e:2x2
jax: 0.10.0
libtpu: 0.0.40
codegen_flags: <defaults>
</compile_context>

<pallas_src>
import math
from types import SimpleNamespace

import jax
import jax.numpy as jnp
from jax.experimental import pallas as pl
from jax.experimental.pallas import tpu as pltpu

VPAD = 128            # lane-dense padded width for fc_out / output store
FFN_CHUNK = 512       # dff walked in chunks of this width (bounds vreg pressure)
FFN_HIDDEN_BF16 = True  # bf16 bias+ReLU over FFN hidden (v6e/v7x); set False on v5e / strict f32


def _pad_to(n, m):
    return ((n + m - 1) // m) * m


# ---------------------------------------------------------------------------
# Packed-parameter layout: one bf16 weight slab [d, WTOT], one f32 vector slab [RTOT, FW]
# ---------------------------------------------------------------------------
def make_layout(input_size, d_model, dff, vocab, pe_len=64, vpad=VPAD):
    d, F = d_model, input_size

    C = {}
    c = 0
    def seg(name, width):
        nonlocal c
        C[name] = c
        c += _pad_to(width, 128)     # 128-aligned lane offsets -> aligned static slices
    seg("WIN", F)                    # input_proj weight, stored transposed   [d, F]
    seg("QKV_E", 3 * d)              # encoder self-attn fused QKV            [d, 3d]
    seg("QKV_D", 3 * d)              # decoder self-attn fused QKV            [d, 3d]
    seg("QX", d)                     # decoder cross-attn Q                   [d, d]
    seg("KVX", 2 * d)                # decoder cross-attn fused KV            [d, 2d]
    seg("WO_E", d); seg("WO_D1", d); seg("WO_D2", d)      # attn out-projections
    seg("WOUT", vpad)                # fc_out, padded to 128 lanes            [d, vpad]
    seg("W1_E", dff); seg("W2T_E", dff)   # encoder FFN (W2 stored transposed / lane-dense)
    seg("W1_D", dff); seg("W2T_D", dff)   # decoder FFN
    wtot = c

    R = {}
    r = 0
    def row(name, n=1):
        nonlocal r
        R[name] = r
        r += n
    row("PE", pe_len)                # positional-encoding table   [pe_len, d]
    row("EMB", vocab)                # decoder embedding table     [vocab, d]
    row("BQKV_E"); row("BQKV_D"); row("BX")       # fused QKV biases (enc, dec-self, cross)
    row("BIN")                                     # input_proj bias
    row("BO_E"); row("BO_D1"); row("BO_D2")        # attn out-proj biases
    row("EG1"); row("EB1"); row("EG2"); row("EB2")                     # encoder LN params
    row("DG1"); row("DB1"); row("DG2"); row("DB2"); row("DG3"); row("DB3")  # decoder LN params
    row("B2_E"); row("B2_D")                       # FFN second-layer biases
    row("BOUT")                                    # fc_out bias (vpad wide)
    rtot = _pad_to(r, 8)
    fw = max(3 * d, vpad)

    return SimpleNamespace(d=d, F=F, dff=dff, vocab=vocab, pe_len=pe_len, vpad=vpad,
                           C=C, WTOT=wtot, R=R, RTOT=rtot, FW=fw)


def make_positional_encoding(seq_len, d_model):
    # NOTE: assumes even d_model (matches the PyTorch buffer for d=32)
    position = jnp.arange(seq_len, dtype=jnp.float32)[:, None]
    div_term = jnp.exp(jnp.arange(0, d_model, 2, dtype=jnp.float32)
                       * (-math.log(10000.0) / d_model))
    pe = jnp.zeros((seq_len, d_model), jnp.float32)
    pe = pe.at[:, 0::2].set(jnp.sin(position * div_term))
    pe = pe.at[:, 1::2].set(jnp.cos(position * div_term))
    return pe


def init_params(key, L):
    ks = iter(jax.random.split(key, 48))

    def rnd(shape, scale=0.1):
        return jax.random.normal(next(ks), shape, jnp.float32) * scale

    # ---- bf16 weight slab [d, WTOT]: every matmul RHS, 128-aligned segments ----
    w = jnp.zeros((L.d, L.WTOT), jnp.float32)
    def put(name, arr):
        return w.at[:, L.C[name]:L.C[name] + arr.shape[1]].set(arr)
    w = put("WIN", rnd((L.F, L.d)).T)                   # stored transposed: [d, F]
    w = put("QKV_E", rnd((L.d, 3 * L.d)))
    w = put("QKV_D", rnd((L.d, 3 * L.d)))
    w = put("QX", rnd((L.d, L.d)))
    w = put("KVX", rnd((L.d, 2 * L.d)))
    w = put("WO_E", rnd((L.d, L.d)))
    w = put("WO_D1", rnd((L.d, L.d)))
    w = put("WO_D2", rnd((L.d, L.d)))
    w = put("WOUT", jnp.zeros((L.d, L.vpad), jnp.float32).at[:, :L.vocab].set(rnd((L.d, L.vocab))))
    w = put("W1_E", rnd((L.d, L.dff)))
    w = put("W2T_E", rnd((L.dff, L.d)).T)               # lane-dense (transposed) second FFN weight
    w = put("W1_D", rnd((L.d, L.dff)))
    w = put("W2T_D", rnd((L.dff, L.d)).T)
    w_slab = w.astype(jnp.bfloat16)

    # ---- f32 "vector" slab [RTOT, FW]: PE table, embedding, every bias / LN param ----
    R = L.R
    f = jnp.zeros((L.RTOT, L.FW), jnp.float32)
    f = f.at[R["PE"]:R["PE"] + L.pe_len, :L.d].set(make_positional_encoding(L.pe_len, L.d))
    f = f.at[R["EMB"]:R["EMB"] + L.vocab, :L.d].set(rnd((L.vocab, L.d)))
    for name, width in (("BQKV_E", 3 * L.d), ("BQKV_D", 3 * L.d), ("BX", 3 * L.d),
                        ("BIN", L.d), ("BO_E", L.d), ("BO_D1", L.d), ("BO_D2", L.d),
                        ("B2_E", L.d), ("B2_D", L.d)):
        f = f.at[R[name], :width].set(rnd((width,), 0.02))
    for name in ("EG1", "EG2", "DG1", "DG2", "DG3"):    # LayerNorm gammas = 1, betas stay 0
        f = f.at[R[name], :L.d].set(1.0)
    f = f.at[R["BOUT"], :L.vocab].set(rnd((L.vocab,), 0.02))   # padded lanes stay 0

    b1 = rnd((2, L.dff), 0.02)                          # FFN first-layer biases: rows = enc, dec
    return {"w_slab": w_slab, "fvec": f, "b1": b1}


def _pick_batch_tile(B, S_max):
    # Largest divisor of B with Bt*S_max <= 128 (fills MXU rows), keeping >= 2 grid steps
    # when B >= 2 so both v7x TensorCores get work.
    best = 1
    for bt in range(1, B + 1):
        if bt * S_max > 128:
            break
        if B % bt:
            continue
        if B >= 2 and B // bt < 2:
            continue
        best = bt
    return best


# ---------------------------------------------------------------------------
# Wrapper: builds the fused kernel (encoder + embedding gather + decoder) and calls it.
# ---------------------------------------------------------------------------
def encoder_decoder_forward(signal, target, params, layout, batch_tile=None):
    L = layout
    B, S_enc, F = signal.shape
    S_dec = target.shape[1]
    S_max = max(S_enc, S_dec)
    assert F == L.F and S_max <= L.pe_len
    d, dff, vocab, vpad = L.d, L.dff, L.vocab, L.vpad
    C, R = L.C, L.R

    Bt = batch_tile or _pick_batch_tile(B, S_max)
    assert B % Bt == 0
    Re, Rd = Bt * S_enc, Bt * S_dec
    chunk = FFN_CHUNK if dff % FFN_CHUNK == 0 else dff
    n_chunks = dff // chunk
    sqrt_d = float(math.sqrt(d))
    inv_sqrt_d = float(1.0 / math.sqrt(d))

    def kernel(ids_ref, sig_ref, w_ref, fv_ref, b1_ref, out_ref, emb_scr):
        def mm(a, b):          # a @ b, bf16 MXU inputs, f32 accumulate
            return jnp.dot(a.astype(jnp.bfloat16), b.astype(jnp.bfloat16),
                           preferred_element_type=jnp.float32)

        def mmT(a, b):         # a @ b.T without materializing the transpose
            return jax.lax.dot_general(a.astype(jnp.bfloat16), b.astype(jnp.bfloat16),
                                       (((1,), (1,)), ((), ())),
                                       preferred_element_type=jnp.float32)

        def softmax(s):
            m = jnp.max(s, axis=-1, keepdims=True)
            e = jnp.exp(s - m)
            return e * pl.reciprocal(jnp.sum(e, axis=-1, keepdims=True), approx=True)

        def wseg(name, width):     # bf16 weight segment [d, width] (128-aligned static slice)
            return w_ref[:, C[name]:C[name] + width]

        def vrow(name, width):     # f32 bias / LN row [1, width]
            return fv_ref[R[name]:R[name] + 1, 0:width]

        def layernorm(x, gname, bname):
            mu = jnp.mean(x, axis=-1, keepdims=True)
            var = jnp.mean((x - mu) ** 2, axis=-1, keepdims=True)
            return (x - mu) * jax.lax.rsqrt(var + 1e-5) * vrow(gname, d) + vrow(bname, d)

        def attention(q2, k2, v2, Sq, Sk, mask=None):
            if Bt == 1:            # 2-D fast path (no batch dim)
                s = mmT(q2, k2) * inv_sqrt_d
                if mask is not None:
                    s = s + mask
                return mm(softmax(s), v2)
            q3 = q2.reshape(Bt, Sq, d)
            k3 = k2.reshape(Bt, Sk, d)
            v3 = v2.reshape(Bt, Sk, d)
            s = jnp.einsum('bqd,bkd->bqk', q3.astype(jnp.bfloat16), k3.astype(jnp.bfloat16),
                           preferred_element_type=jnp.float32) * inv_sqrt_d
            if mask is not None:
                s = s + mask[None]
            p = softmax(s)
            o = jnp.einsum('bqk,bkd->bqd', p.astype(jnp.bfloat16), v3.astype(jnp.bfloat16),
                           preferred_element_type=jnp.float32)
            return o.reshape(Bt * Sq, d)

        def ffn(x2, w1n, w2tn, b1row, b2n):
            # dff walked in `chunk`-wide slices: bounds the [rows, dff] hidden live range and
            # lets chunk i's second matmul overlap chunk i+1's bias+ReLU. W2 is stored
            # transposed ([d, dff], lane-dense) so the second matmul is a trans_b contraction.
            xb = x2.astype(jnp.bfloat16)
            acc = jnp.zeros((x2.shape[0], d), jnp.float32)
            for k in range(n_chunks):
                lo = k * chunk
                h = mm(xb, w_ref[:, C[w1n] + lo:C[w1n] + lo + chunk])        # [rows, chunk] f32
                if FFN_HIDDEN_BF16:
                    hb = jnp.maximum(
                        h.astype(jnp.bfloat16)
                        + b1_ref[b1row:b1row + 1, lo:lo + chunk].astype(jnp.bfloat16), 0)
                else:
                    hb = jnp.maximum(
                        h + b1_ref[b1row:b1row + 1, lo:lo + chunk], 0.0).astype(jnp.bfloat16)
                acc = acc + mmT(hb, w_ref[:, C[w2tn] + lo:C[w2tn] + lo + chunk])
            return acc + vrow(b2n, d)

        # positional encodings, tiled over the Bt merged batch rows
        pe_e = fv_ref[R["PE"]:R["PE"] + S_enc, 0:d]
        pe_d = fv_ref[R["PE"]:R["PE"] + S_dec, 0:d]
        if Bt > 1:
            pe_e = jnp.broadcast_to(pe_e[None], (Bt, S_enc, d)).reshape(Re, d)
            pe_d = jnp.broadcast_to(pe_d[None], (Bt, S_dec, d)).reshape(Rd, d)

        # ----------------------------- encoder -----------------------------
        x = mmT(sig_ref[...].reshape(Re, F), wseg("WIN", F)) + vrow("BIN", d)   # input_proj
        x = x * sqrt_d + pe_e

        qkv = mm(x, wseg("QKV_E", 3 * d)) + vrow("BQKV_E", 3 * d)
        sa = attention(qkv[:, 0:d], qkv[:, d:2 * d], qkv[:, 2 * d:3 * d], S_enc, S_enc)
        x = layernorm(x + mm(sa, wseg("WO_E", d)) + vrow("BO_E", d), "EG1", "EB1")
        mem = layernorm(x + ffn(x, "W1_E", "W2T_E", 0, "B2_E"), "EG2", "EB2")   # stays on-chip

        # ----------------------------- decoder -----------------------------
        # embedding lookup: exact f32 row gather driven by scalar-prefetched ids in SMEM
        bofs = pl.program_id(0) * Bt
        for bl in range(Bt):
            for s in range(S_dec):
                tok = ids_ref[bofs + bl, s]
                emb_scr[bl * S_dec + s:bl * S_dec + s + 1, :] = \
                    fv_ref[pl.ds(R["EMB"] + tok, 1), 0:d]
        t = emb_scr[...] * sqrt_d + pe_d

        ri = jax.lax.broadcasted_iota(jnp.int32, (S_dec, S_dec), 0)
        cj = jax.lax.broadcasted_iota(jnp.int32, (S_dec, S_dec), 1)
        causal = jnp.where(cj <= ri, 0.0, -1e30).astype(jnp.float32)

        qkv = mm(t, wseg("QKV_D", 3 * d)) + vrow("BQKV_D", 3 * d)
        sa = attention(qkv[:, 0:d], qkv[:, d:2 * d], qkv[:, 2 * d:3 * d], S_dec, S_dec,
                       mask=causal)
        t = layernorm(t + mm(sa, wseg("WO_D1", d)) + vrow("BO_D1", d), "DG1", "DB1")

        bx = vrow("BX", 3 * d)                              # [bq | bk | bv]
        q = mm(t, wseg("QX", d)) + bx[:, 0:d]
        kv = mm(mem, wseg("KVX", 2 * d)) + bx[:, d:3 * d]
        ca = attention(q, kv[:, 0:d], kv[:, d:2 * d], S_dec, S_enc)
        t = layernorm(t + mm(ca, wseg("WO_D2", d)) + vrow("BO_D2", d), "DG2", "DB2")

        t = layernorm(t + ffn(t, "W1_D", "W2T_D", 1, "B2_D"), "DG3", "DB3")

        # lane-dense output projection (fc_out padded to vpad columns)
        out2 = mm(t, wseg("WOUT", vpad)) + vrow("BOUT", vpad)
        out_ref[...] = out2.reshape(Bt, S_dec, vpad)

    w_slab, fvec, b1 = params["w_slab"], params["fvec"], params["b1"]

    rows_e, rows_d = B * S_enc, B * S_dec
    flops = 2 * (rows_e * d * (F + 3 * d + d + 2 * dff + 2 * d)
                 + rows_d * d * (3 * d + 3 * d + 2 * dff + vpad)
                 + B * d * (2 * S_enc * S_enc + 2 * S_dec * S_dec + 2 * S_dec * S_enc))
    cost = pl.CostEstimate(
        flops=int(flops),
        transcendentals=int(B * (S_enc * S_enc + S_dec * S_dec + S_dec * S_enc)),
        bytes_accessed=int(signal.nbytes + target.size * 4 + w_slab.size * 2
                           + fvec.nbytes + b1.nbytes + B * S_dec * vpad * 4))

    grid_spec = pltpu.PrefetchScalarGridSpec(
        num_scalar_prefetch=1,                    # target ids -> SMEM, drives the embedding gather
        grid=(B // Bt,),
        in_specs=[
            pl.BlockSpec((Bt, S_enc, F), lambda b, ids: (b, 0, 0)),   # signal batch tile
            pl.BlockSpec(w_slab.shape, lambda b, ids: (0, 0)),        # bf16 weight slab
            pl.BlockSpec(fvec.shape, lambda b, ids: (0, 0)),          # f32 PE/emb/bias slab
            pl.BlockSpec(b1.shape, lambda b, ids: (0, 0)),            # FFN first-layer biases
        ],
        out_specs=pl.BlockSpec((Bt, S_dec, vpad), lambda b, ids: (b, 0, 0)),
        scratch_shapes=[pltpu.VMEM((Rd, d), jnp.float32)],            # gathered embeddings
    )

    logits_pad = pl.pallas_call(
        kernel,
        out_shape=jax.ShapeDtypeStruct((B, S_dec, vpad), jnp.float32),
        grid_spec=grid_spec,
        compiler_params=pltpu.CompilerParams(dimension_semantics=("parallel",)),
        cost_estimate=cost,
    )(target.astype(jnp.int32), signal, w_slab, fvec, b1)
    return logits_pad[:, :, :vocab]


# ---------------------------------------------------------------------------
if __name__ == "__main__":
    B, S_enc, S_dec = 2, 16, 8
    input_size, hidden = 8, 32
    dff = 2048                                   # PyTorch TransformerEncoder/DecoderLayer default
    output_dict = {"<SOS>": 0, "<EOS>": 1, "a": 2, "b": 3, "c": 4, "d": 5, "e": 6, "f": 7}
    vocab = len(output_dict)

    key = jax.random.PRNGKey(0)
    k_sig, k_tgt, k_par = jax.random.split(key, 3)
    signal = jax.random.normal(k_sig, (B, S_enc, input_size), jnp.float32)
    target = jax.random.randint(k_tgt, (B, S_dec), 0, vocab, jnp.int32)

    layout = make_layout(input_size, hidden, dff, vocab, pe_len=64)
    params = init_params(k_par, layout)

    logits = encoder_decoder_forward(signal, target, params, layout)
    logits = jax.block_until_ready(logits)
    assert logits.shape == (B, S_dec, vocab)
    assert bool(jnp.all(jnp.isfinite(logits)))
    print("KERNEL_OK")
</pallas_src>

<mosaic_0001>
module attributes {stable_mosaic.version = 11 : i64} {
  func.func @kernel(%arg0: i32, %arg1: memref<2x8xi32, #tpu.memory_space<smem>>, %arg2: memref<1x16x8xf32, #tpu.memory_space<vmem>>, %arg3: memref<32x9344xbf16, #tpu.memory_space<vmem>>, %arg4: memref<96x128xf32, #tpu.memory_space<vmem>>, %arg5: memref<2x2048xf32, #tpu.memory_space<vmem>>, %arg6: memref<1x8x128xf32, #tpu.memory_space<vmem>>, %arg7: memref<8x32xf32, #tpu.memory_space<vmem>>) attributes {dimension_semantics = [#tpu.dimension_semantics<parallel>], iteration_bounds = array<i64: 2>, scalar_prefetch = 1 : i64, scratch_operands = 1 : i64, tpu.core_type = #tpu.core_type<tc>, window_params = [{transform_indices = @transform_0, window_bounds = array<i64: 1, 16, 8>}, {pipeline_mode = #tpu.pipeline_mode<synchronous>, transform_indices = @transform_1, window_bounds = array<i64: 32, 9344>}, {pipeline_mode = #tpu.pipeline_mode<synchronous>, transform_indices = @transform_2, window_bounds = array<i64: 96, 128>}, {pipeline_mode = #tpu.pipeline_mode<synchronous>, transform_indices = @transform_3, window_bounds = array<i64: 2, 2048>}, {transform_indices = @transform_4, window_bounds = array<i64: 1, 8, 128>}]} {
    %c0 = arith.constant 0 : index
    %c0_0 = arith.constant 0 : index
    %0 = vector.load %arg4[%c0, %c0_0] : memref<96x128xf32, #tpu.memory_space<vmem>>, vector<16x32xf32>
    %c0_1 = arith.constant 0 : index
    %c0_2 = arith.constant 0 : index
    %1 = vector.load %arg4[%c0_1, %c0_2] : memref<96x128xf32, #tpu.memory_space<vmem>>, vector<8x32xf32>
    %c0_3 = arith.constant 0 : index
    %c0_4 = arith.constant 0 : index
    %c0_5 = arith.constant 0 : index
    %2 = vector.load %arg2[%c0_3, %c0_4, %c0_5] : memref<1x16x8xf32, #tpu.memory_space<vmem>>, vector<1x16x8xf32>
    %3 = vector.shape_cast %2 : vector<1x16x8xf32> to vector<16x8xf32>
    %c0_6 = arith.constant 0 : index
    %c0_7 = arith.constant 0 : index
    %4 = vector.load %arg3[%c0_6, %c0_7] : memref<32x9344xbf16, #tpu.memory_space<vmem>>, vector<32x8xbf16>
    %5 = arith.truncf %3 : vector<16x8xf32> to vector<16x8xbf16>
    %cst = arith.constant dense<0.000000e+00> : vector<16x32xf32>
    %6 = tpu.matmul %5, %4, %cst {dimension_numbers = #tpu.dot_dimension_numbers<[1], [1], [0], [0], [0, 0, 1, 0], [], []>} : vector<16x8xbf16>, vector<32x8xbf16>, vector<16x32xf32> -> vector<16x32xf32>
    %c75 = arith.constant 75 : index
    %c0_8 = arith.constant 0 : index
    %7 = vector.load %arg4[%c75, %c0_8] : memref<96x128xf32, #tpu.memory_space<vmem>>, vector<1x32xf32>
    %8 = vector.broadcast %7 : vector<1x32xf32> to vector<16x32xf32>
    %9 = arith.addf %6, %8 : vector<16x32xf32>
    %cst_9 = arith.constant 5.65685415 : f32
    %10 = vector.broadcast %cst_9 : f32 to vector<16x32xf32>
    %11 = arith.mulf %9, %10 : vector<16x32xf32>
    %12 = arith.addf %11, %0 : vector<16x32xf32>
    %c0_10 = arith.constant 0 : index
    %c128 = arith.constant 128 : index
    %13 = vector.load %arg3[%c0_10, %c128] : memref<32x9344xbf16, #tpu.memory_space<vmem>>, vector<32x96xbf16>
    %14 = arith.truncf %12 : vector<16x32xf32> to vector<16x32xbf16>
    %cst_11 = arith.constant dense<0.000000e+00> : vector<16x96xf32>
    %15 = tpu.matmul %14, %13, %cst_11 {dimension_numbers = #tpu.dot_dimension_numbers<[1], [0], [0], [1], [0, 0, 1, 1], [], []>} : vector<16x32xbf16>, vector<32x96xbf16>, vector<16x96xf32> -> vector<16x96xf32>
    %c72 = arith.constant 72 : index
    %c0_12 = arith.constant 0 : index
    %16 = vector.load %arg4[%c72, %c0_12] : memref<96x128xf32, #tpu.memory_space<vmem>>, vector<1x96xf32>
    %17 = vector.broadcast %16 : vector<1x96xf32> to vector<16x96xf32>
    %18 = arith.addf %15, %17 : vector<16x96xf32>
    %19 = vector.extract_strided_slice %18 {offsets = [0, 0], sizes = [16, 32], strides = [1, 1]} : vector<16x96xf32> to vector<16x32xf32>
    %20 = vector.extract_strided_slice %18 {offsets = [0, 32], sizes = [16, 32], strides = [1, 1]} : vector<16x96xf32> to vector<16x32xf32>
    %21 = vector.extract_strided_slice %18 {offsets = [0, 64], sizes = [16, 32], strides = [1, 1]} : vector<16x96xf32> to vector<16x32xf32>
    %22 = arith.truncf %19 : vector<16x32xf32> to vector<16x32xbf16>
    %23 = arith.truncf %20 : vector<16x32xf32> to vector<16x32xbf16>
    %cst_13 = arith.constant dense<0.000000e+00> : vector<16x16xf32>
    %24 = tpu.matmul %22, %23, %cst_13 {dimension_numbers = #tpu.dot_dimension_numbers<[1], [1], [0], [0], [0, 0, 1, 0], [], []>} : vector<16x32xbf16>, vector<16x32xbf16>, vector<16x16xf32> -> vector<16x16xf32>
    %cst_14 = arith.constant 0.176776692 : f32
    %25 = vector.broadcast %cst_14 : f32 to vector<16x16xf32>
    %26 = arith.mulf %24, %25 : vector<16x16xf32>
    %cst_15 = arith.constant dense<0xFF800000> : vector<16xf32>
    %27 = vector.multi_reduction <maximumf>, %26, %cst_15 [1] : vector<16x16xf32> to vector<16xf32>
    %28 = vector.shape_cast %27 : vector<16xf32> to vector<16x1xf32>
    %29 = vector.broadcast %28 : vector<16x1xf32> to vector<16x16xf32>
    %30 = arith.subf %26, %29 : vector<16x16xf32>
    %31 = math.exp %30 : vector<16x16xf32>
    %cst_16 = arith.constant dense<0.000000e+00> : vector<16xf32>
    %32 = vector.multi_reduction <add>, %31, %cst_16 [1] : vector<16x16xf32> to vector<16xf32>
    %33 = vector.shape_cast %32 : vector<16xf32> to vector<16x1xf32>
    %34 = tpu.reciprocal %33 {approx = true} : vector<16x1xf32> -> vector<16x1xf32>
    %35 = vector.broadcast %34 : vector<16x1xf32> to vector<16x16xf32>
    %36 = arith.mulf %31, %35 : vector<16x16xf32>
    %37 = arith.truncf %36 : vector<16x16xf32> to vector<16x16xbf16>
    %38 = arith.truncf %21 : vector<16x32xf32> to vector<16x32xbf16>
    %cst_17 = arith.constant dense<0.000000e+00> : vector<16x32xf32>
    %39 = tpu.matmul %37, %38, %cst_17 {dimension_numbers = #tpu.dot_dimension_numbers<[1], [0], [0], [1], [0, 0, 1, 1], [], []>} : vector<16x16xbf16>, vector<16x32xbf16>, vector<16x32xf32> -> vector<16x32xf32>
    %c0_18 = arith.constant 0 : index
    %c640 = arith.constant 640 : index
    %40 = vector.load %arg3[%c0_18, %c640] : memref<32x9344xbf16, #tpu.memory_space<vmem>>, vector<32x32xbf16>
    %41 = arith.truncf %39 : vector<16x32xf32> to vector<16x32xbf16>
    %cst_19 = arith.constant dense<0.000000e+00> : vector<16x32xf32>
    %42 = tpu.matmul %41, %40, %cst_19 {dimension_numbers = #tpu.dot_dimension_numbers<[1], [0], [0], [1], [0, 0, 1, 1], [], []>} : vector<16x32xbf16>, vector<32x32xbf16>, vector<16x32xf32> -> vector<16x32xf32>
    %43 = arith.addf %12, %42 : vector<16x32xf32>
    %c76 = arith.constant 76 : index
    %c0_20 = arith.constant 0 : index
    %44 = vector.load %arg4[%c76, %c0_20] : memref<96x128xf32, #tpu.memory_space<vmem>>, vector<1x32xf32>
    %45 = vector.broadcast %44 : vector<1x32xf32> to vector<16x32xf32>
    %46 = arith.addf %43, %45 : vector<16x32xf32>
    %cst_21 = arith.constant dense<0.000000e+00> : vector<16xf32>
    %47 = vector.multi_reduction <add>, %46, %cst_21 [1] : vector<16x32xf32> to vector<16xf32>
    %48 = vector.shape_cast %47 : vector<16xf32> to vector<16x1xf32>
    %cst_22 = arith.constant 3.200000e+01 : f32
    %49 = vector.broadcast %cst_22 : f32 to vector<16x1xf32>
    %50 = arith.divf %48, %49 : vector<16x1xf32>
    %51 = vector.broadcast %50 : vector<16x1xf32> to vector<16x32xf32>
    %52 = arith.subf %46, %51 : vector<16x32xf32>
    %53 = arith.mulf %52, %52 : vector<16x32xf32>
    %cst_23 = arith.constant dense<0.000000e+00> : vector<16xf32>
    %54 = vector.multi_reduction <add>, %53, %cst_23 [1] : vector<16x32xf32> to vector<16xf32>
    %55 = vector.shape_cast %54 : vector<16xf32> to vector<16x1xf32>
    %cst_24 = arith.constant 3.200000e+01 : f32
    %56 = vector.broadcast %cst_24 : f32 to vector<16x1xf32>
    %57 = arith.divf %55, %56 : vector<16x1xf32>
    %58 = vector.broadcast %50 : vector<16x1xf32> to vector<16x32xf32>
    %59 = arith.subf %46, %58 : vector<16x32xf32>
    %cst_25 = arith.constant 9.99999974E-6 : f32
    %60 = vector.broadcast %cst_25 : f32 to vector<16x1xf32>
    %61 = arith.addf %57, %60 : vector<16x1xf32>
    %62 = math.rsqrt %61 : vector<16x1xf32>
    %63 = vector.broadcast %62 : vector<16x1xf32> to vector<16x32xf32>
    %64 = arith.mulf %59, %63 : vector<16x32xf32>
    %c79 = arith.constant 79 : index
    %c0_26 = arith.constant 0 : index
    %65 = vector.load %arg4[%c79, %c0_26] : memref<96x128xf32, #tpu.memory_space<vmem>>, vector<1x32xf32>
    %66 = vector.broadcast %65 : vector<1x32xf32> to vector<16x32xf32>
    %67 = arith.mulf %64, %66 : vector<16x32xf32>
    %c80 = arith.constant 80 : index
    %c0_27 = arith.constant 0 : index
    %68 = vector.load %arg4[%c80, %c0_27] : memref<96x128xf32, #tpu.memory_space<vmem>>, vector<1x32xf32>
    %69 = vector.broadcast %68 : vector<1x32xf32> to vector<16x32xf32>
    %70 = arith.addf %67, %69 : vector<16x32xf32>
    %71 = arith.truncf %70 : vector<16x32xf32> to vector<16x32xbf16>
    %cst_28 = arith.constant 0.000000e+00 : f32
    %72 = vector.broadcast %cst_28 : f32 to vector<16x32xf32>
    %c0_29 = arith.constant 0 : index
    %c1152 = arith.constant 1152 : index
    %73 = vector.load %arg3[%c0_29, %c1152] : memref<32x9344xbf16, #tpu.memory_space<vmem>>, vector<32x512xbf16>
    %cst_30 = arith.constant dense<0.000000e+00> : vector<16x512xf32>
    %74 = tpu.matmul %71, %73, %cst_30 {dimension_numbers = #tpu.dot_dimension_numbers<[1], [0], [0], [1], [0, 0, 1, 1], [], []>} : vector<16x32xbf16>, vector<32x512xbf16>, vector<16x512xf32> -> vector<16x512xf32>
    %75 = arith.truncf %74 : vector<16x512xf32> to vector<16x512xbf16>
    %c0_31 = arith.constant 0 : index
    %c0_32 = arith.constant 0 : index
    %76 = vector.load %arg5[%c0_31, %c0_32] : memref<2x2048xf32, #tpu.memory_space<vmem>>, vector<1x512xf32>
    %77 = arith.truncf %76 : vector<1x512xf32> to vector<1x512xbf16>
    %78 = vector.broadcast %77 : vector<1x512xbf16> to vector<16x512xbf16>
    %79 = arith.addf %75, %78 : vector<16x512xbf16>
    %cst_33 = arith.constant 0.000000e+00 : bf16
    %80 = vector.broadcast %cst_33 : bf16 to vector<16x512xbf16>
    %81 = arith.maximumf %79, %80 : vector<16x512xbf16>
    %c0_34 = arith.constant 0 : index
    %c3200 = arith.constant 3200 : index
    %82 = vector.load %arg3[%c0_34, %c3200] : memref<32x9344xbf16, #tpu.memory_space<vmem>>, vector<32x512xbf16>
    %cst_35 = arith.constant dense<0.000000e+00> : vector<16x32xf32>
    %83 = tpu.matmul %81, %82, %cst_35 {dimension_numbers = #tpu.dot_dimension_numbers<[1], [1], [0], [0], [0, 0, 1, 0], [], []>} : vector<16x512xbf16>, vector<32x512xbf16>, vector<16x32xf32> -> vector<16x32xf32>
    %84 = arith.addf %72, %83 : vector<16x32xf32>
    %c0_36 = arith.constant 0 : index
    %c1664 = arith.constant 1664 : index
    %85 = vector.load %arg3[%c0_36, %c1664] : memref<32x9344xbf16, #tpu.memory_space<vmem>>, vector<32x512xbf16>
    %cst_37 = arith.constant dense<0.000000e+00> : vector<16x512xf32>
    %86 = tpu.matmul %71, %85, %cst_37 {dimension_numbers = #tpu.dot_dimension_numbers<[1], [0], [0], [1], [0, 0, 1, 1], [], []>} : vector<16x32xbf16>, vector<32x512xbf16>, vector<16x512xf32> -> vector<16x512xf32>
    %87 = arith.truncf %86 : vector<16x512xf32> to vector<16x512xbf16>
    %c0_38 = arith.constant 0 : index
    %c512 = arith.constant 512 : index
    %88 = vector.load %arg5[%c0_38, %c512] : memref<2x2048xf32, #tpu.memory_space<vmem>>, vector<1x512xf32>
    %89 = arith.truncf %88 : vector<1x512xf32> to vector<1x512xbf16>
    %90 = vector.broadcast %89 : vector<1x512xbf16> to vector<16x512xbf16>
    %91 = arith.addf %87, %90 : vector<16x512xbf16>
    %cst_39 = arith.constant 0.000000e+00 : bf16
    %92 = vector.broadcast %cst_39 : bf16 to vector<16x512xbf16>
    %93 = arith.maximumf %91, %92 : vector<16x512xbf16>
    %c0_40 = arith.constant 0 : index
    %c3712 = arith.constant 3712 : index
    %94 = vector.load %arg3[%c0_40, %c3712] : memref<32x9344xbf16, #tpu.memory_space<vmem>>, vector<32x512xbf16>
    %cst_41 = arith.constant dense<0.000000e+00> : vector<16x32xf32>
    %95 = tpu.matmul %93, %94, %cst_41 {dimension_numbers = #tpu.dot_dimension_numbers<[1], [1], [0], [0], [0, 0, 1, 0], [], []>} : vector<16x512xbf16>, vector<32x512xbf16>, vector<16x32xf32> -> vector<16x32xf32>
    %96 = arith.addf %84, %95 : vector<16x32xf32>
    %c0_42 = arith.constant 0 : index
    %c2176 = arith.constant 2176 : index
    %97 = vector.load %arg3[%c0_42, %c2176] : memref<32x9344xbf16, #tpu.memory_space<vmem>>, vector<32x512xbf16>
    %cst_43 = arith.constant dense<0.000000e+00> : vector<16x512xf32>
    %98 = tpu.matmul %71, %97, %cst_43 {dimension_numbers = #tpu.dot_dimension_numbers<[1], [0], [0], [1], [0, 0, 1, 1], [], []>} : vector<16x32xbf16>, vector<32x512xbf16>, vector<16x512xf32> -> vector<16x512xf32>
    %99 = arith.truncf %98 : vector<16x512xf32> to vector<16x512xbf16>
    %c0_44 = arith.constant 0 : index
    %c1024 = arith.constant 1024 : index
    %100 = vector.load %arg5[%c0_44, %c1024] : memref<2x2048xf32, #tpu.memory_space<vmem>>, vector<1x512xf32>
    %101 = arith.truncf %100 : vector<1x512xf32> to vector<1x512xbf16>
    %102 = vector.broadcast %101 : vector<1x512xbf16> to vector<16x512xbf16>
    %103 = arith.addf %99, %102 : vector<16x512xbf16>
    %cst_45 = arith.constant 0.000000e+00 : bf16
    %104 = vector.broadcast %cst_45 : bf16 to vector<16x512xbf16>
    %105 = arith.maximumf %103, %104 : vector<16x512xbf16>
    %c0_46 = arith.constant 0 : index
    %c4224 = arith.constant 4224 : index
    %106 = vector.load %arg3[%c0_46, %c4224] : memref<32x9344xbf16, #tpu.memory_space<vmem>>, vector<32x512xbf16>
    %cst_47 = arith.constant dense<0.000000e+00> : vector<16x32xf32>
    %107 = tpu.matmul %105, %106, %cst_47 {dimension_numbers = #tpu.dot_dimension_numbers<[1], [1], [0], [0], [0, 0, 1, 0], [], []>} : vector<16x512xbf16>, vector<32x512xbf16>, vector<16x32xf32> -> vector<16x32xf32>
    %108 = arith.addf %96, %107 : vector<16x32xf32>
    %c0_48 = arith.constant 0 : index
    %c2688 = arith.constant 2688 : index
    %109 = vector.load %arg3[%c0_48, %c2688] : memref<32x9344xbf16, #tpu.memory_space<vmem>>, vector<32x512xbf16>
    %cst_49 = arith.constant dense<0.000000e+00> : vector<16x512xf32>
    %110 = tpu.matmul %71, %109, %cst_49 {dimension_numbers = #tpu.dot_dimension_numbers<[1], [0], [0], [1], [0, 0, 1, 1], [], []>} : vector<16x32xbf16>, vector<32x512xbf16>, vector<16x512xf32> -> vector<16x512xf32>
    %111 = arith.truncf %110 : vector<16x512xf32> to vector<16x512xbf16>
    %c0_50 = arith.constant 0 : index
    %c1536 = arith.constant 1536 : index
    %112 = vector.load %arg5[%c0_50, %c1536] : memref<2x2048xf32, #tpu.memory_space<vmem>>, vector<1x512xf32>
    %113 = arith.truncf %112 : vector<1x512xf32> to vector<1x512xbf16>
    %114 = vector.broadcast %113 : vector<1x512xbf16> to vector<16x512xbf16>
    %115 = arith.addf %111, %114 : vector<16x512xbf16>
    %cst_51 = arith.constant 0.000000e+00 : bf16
    %116 = vector.broadcast %cst_51 : bf16 to vector<16x512xbf16>
    %117 = arith.maximumf %115, %116 : vector<16x512xbf16>
    %c0_52 = arith.constant 0 : index
    %c4736 = arith.constant 4736 : index
    %118 = vector.load %arg3[%c0_52, %c4736] : memref<32x9344xbf16, #tpu.memory_space<vmem>>, vector<32x512xbf16>
    %cst_53 = arith.constant dense<0.000000e+00> : vector<16x32xf32>
    %119 = tpu.matmul %117, %118, %cst_53 {dimension_numbers = #tpu.dot_dimension_numbers<[1], [1], [0], [0], [0, 0, 1, 0], [], []>} : vector<16x512xbf16>, vector<32x512xbf16>, vector<16x32xf32> -> vector<16x32xf32>
    %120 = arith.addf %108, %119 : vector<16x32xf32>
    %c89 = arith.constant 89 : index
    %c0_54 = arith.constant 0 : index
    %121 = vector.load %arg4[%c89, %c0_54] : memref<96x128xf32, #tpu.memory_space<vmem>>, vector<1x32xf32>
    %122 = vector.broadcast %121 : vector<1x32xf32> to vector<16x32xf32>
    %123 = arith.addf %120, %122 : vector<16x32xf32>
    %124 = arith.addf %70, %123 : vector<16x32xf32>
    %cst_55 = arith.constant dense<0.000000e+00> : vector<16xf32>
    %125 = vector.multi_reduction <add>, %124, %cst_55 [1] : vector<16x32xf32> to vector<16xf32>
    %126 = vector.shape_cast %125 : vector<16xf32> to vector<16x1xf32>
    %cst_56 = arith.constant 3.200000e+01 : f32
    %127 = vector.broadcast %cst_56 : f32 to vector<16x1xf32>
    %128 = arith.divf %126, %127 : vector<16x1xf32>
    %129 = vector.broadcast %128 : vector<16x1xf32> to vector<16x32xf32>
    %130 = arith.subf %124, %129 : vector<16x32xf32>
    %131 = arith.mulf %130, %130 : vector<16x32xf32>
    %cst_57 = arith.constant dense<0.000000e+00> : vector<16xf32>
    %132 = vector.multi_reduction <add>, %131, %cst_57 [1] : vector<16x32xf32> to vector<16xf32>
    %133 = vector.shape_cast %132 : vector<16xf32> to vector<16x1xf32>
    %cst_58 = arith.constant 3.200000e+01 : f32
    %134 = vector.broadcast %cst_58 : f32 to vector<16x1xf32>
    %135 = arith.divf %133, %134 : vector<16x1xf32>
    %136 = vector.broadcast %128 : vector<16x1xf32> to vector<16x32xf32>
    %137 = arith.subf %124, %136 : vector<16x32xf32>
    %cst_59 = arith.constant 9.99999974E-6 : f32
    %138 = vector.broadcast %cst_59 : f32 to vector<16x1xf32>
    %139 = arith.addf %135, %138 : vector<16x1xf32>
    %140 = math.rsqrt %139 : vector<16x1xf32>
    %141 = vector.broadcast %140 : vector<16x1xf32> to vector<16x32xf32>
    %142 = arith.mulf %137, %141 : vector<16x32xf32>
    %c81 = arith.constant 81 : index
    %c0_60 = arith.constant 0 : index
    %143 = vector.load %arg4[%c81, %c0_60] : memref<96x128xf32, #tpu.memory_space<vmem>>, vector<1x32xf32>
    %144 = vector.broadcast %143 : vector<1x32xf32> to vector<16x32xf32>
    %145 = arith.mulf %142, %144 : vector<16x32xf32>
    %c82 = arith.constant 82 : index
    %c0_61 = arith.constant 0 : index
    %146 = vector.load %arg4[%c82, %c0_61] : memref<96x128xf32, #tpu.memory_space<vmem>>, vector<1x32xf32>
    %147 = vector.broadcast %146 : vector<1x32xf32> to vector<16x32xf32>
    %148 = arith.addf %145, %147 : vector<16x32xf32>
    %c1_i32 = arith.constant 1 : i32
    %149 = arith.muli %arg0, %c1_i32 : i32
    %c0_i32 = arith.constant 0 : i32
    %150 = arith.addi %149, %c0_i32 : i32
    %151 = arith.index_cast %150 : i32 to index
    %c0_62 = arith.constant 0 : index
    %152 = memref.load %arg1[%151, %c0_62] : memref<2x8xi32, #tpu.memory_space<smem>>
    %c64_i32 = arith.constant 64 : i32
    %153 = arith.addi %c64_i32, %152 : i32
    %154 = arith.index_cast %153 : i32 to index
    %c0_63 = arith.constant 0 : index
    %155 = vector.load %arg4[%154, %c0_63] : memref<96x128xf32, #tpu.memory_space<vmem>>, vector<1x32xf32>
    %c0_64 = arith.constant 0 : index
    %c0_65 = arith.constant 0 : index
    %156 = vector.load %arg7[%c0_64, %c0_65] : memref<8x32xf32, #tpu.memory_space<vmem>>, vector<1x32xf32>
    tpu.vector_store %arg7[%c0_64, %c0_65], %155 {strides = array<i32>} : memref<8x32xf32, #tpu.memory_space<vmem>>, vector<1x32xf32>,
    %c0_i32_66 = arith.constant 0 : i32
    %157 = arith.addi %149, %c0_i32_66 : i32
    %158 = arith.index_cast %157 : i32 to index
    %c1 = arith.constant 1 : index
    %159 = memref.load %arg1[%158, %c1] : memref<2x8xi32, #tpu.memory_space<smem>>
    %c64_i32_67 = arith.constant 64 : i32
    %160 = arith.addi %c64_i32_67, %159 : i32
    %161 = arith.index_cast %160 : i32 to index
    %c0_68 = arith.constant 0 : index
    %162 = vector.load %arg4[%161, %c0_68] : memref<96x128xf32, #tpu.memory_space<vmem>>, vector<1x32xf32>
    %c1_69 = arith.constant 1 : index
    %c0_70 = arith.constant 0 : index
    %163 = vector.load %arg7[%c1_69, %c0_70] : memref<8x32xf32, #tpu.memory_space<vmem>>, vector<1x32xf32>
    tpu.vector_store %arg7[%c1_69, %c0_70], %162 {strides = array<i32>} : memref<8x32xf32, #tpu.memory_space<vmem>>, vector<1x32xf32>,
    %c0_i32_71 = arith.constant 0 : i32
    %164 = arith.addi %149, %c0_i32_71 : i32
    %165 = arith.index_cast %164 : i32 to index
    %c2 = arith.constant 2 : index
    %166 = memref.load %arg1[%165, %c2] : memref<2x8xi32, #tpu.memory_space<smem>>
    %c64_i32_72 = arith.constant 64 : i32
    %167 = arith.addi %c64_i32_72, %166 : i32
    %168 = arith.index_cast %167 : i32 to index
    %c0_73 = arith.constant 0 : index
    %169 = vector.load %arg4[%168, %c0_73] : memref<96x128xf32, #tpu.memory_space<vmem>>, vector<1x32xf32>
    %c2_74 = arith.constant 2 : index
    %c0_75 = arith.constant 0 : index
    %170 = vector.load %arg7[%c2_74, %c0_75] : memref<8x32xf32, #tpu.memory_space<vmem>>, vector<1x32xf32>
    tpu.vector_store %arg7[%c2_74, %c0_75], %169 {strides = array<i32>} : memref<8x32xf32, #tpu.memory_space<vmem>>, vector<1x32xf32>,
    %c0_i32_76 = arith.constant 0 : i32
    %171 = arith.addi %149, %c0_i32_76 : i32
    %172 = arith.index_cast %171 : i32 to index
    %c3 = arith.constant 3 : index
    %173 = memref.load %arg1[%172, %c3] : memref<2x8xi32, #tpu.memory_space<smem>>
    %c64_i32_77 = arith.constant 64 : i32
    %174 = arith.addi %c64_i32_77, %173 : i32
    %175 = arith.index_cast %174 : i32 to index
    %c0_78 = arith.constant 0 : index
    %176 = vector.load %arg4[%175, %c0_78] : memref<96x128xf32, #tpu.memory_space<vmem>>, vector<1x32xf32>
    %c3_79 = arith.constant 3 : index
    %c0_80 = arith.constant 0 : index
    %177 = vector.load %arg7[%c3_79, %c0_80] : memref<8x32xf32, #tpu.memory_space<vmem>>, vector<1x32xf32>
    tpu.vector_store %arg7[%c3_79, %c0_80], %176 {strides = array<i32>} : memref<8x32xf32, #tpu.memory_space<vmem>>, vector<1x32xf32>,
    %c0_i32_81 = arith.constant 0 : i32
    %178 = arith.addi %149, %c0_i32_81 : i32
    %179 = arith.index_cast %178 : i32 to index
    %c4 = arith.constant 4 : index
    %180 = memref.load %arg1[%179, %c4] : memref<2x8xi32, #tpu.memory_space<smem>>
    %c64_i32_82 = arith.constant 64 : i32
    %181 = arith.addi %c64_i32_82, %180 : i32
    %182 = arith.index_cast %181 : i32 to index
    %c0_83 = arith.constant 0 : index
    %183 = vector.load %arg4[%182, %c0_83] : memref<96x128xf32, #tpu.memory_space<vmem>>, vector<1x32xf32>
    %c4_84 = arith.constant 4 : index
    %c0_85 = arith.constant 0 : index
    %184 = vector.load %arg7[%c4_84, %c0_85] : memref<8x32xf32, #tpu.memory_space<vmem>>, vector<1x32xf32>
    tpu.vector_store %arg7[%c4_84, %c0_85], %183 {strides = array<i32>} : memref<8x32xf32, #tpu.memory_space<vmem>>, vector<1x32xf32>,
    %c0_i32_86 = arith.constant 0 : i32
    %185 = arith.addi %149, %c0_i32_86 : i32
    %186 = arith.index_cast %185 : i32 to index
    %c5 = arith.constant 5 : index
    %187 = memref.load %arg1[%186, %c5] : memref<2x8xi32, #tpu.memory_space<smem>>
    %c64_i32_87 = arith.constant 64 : i32
    %188 = arith.addi %c64_i32_87, %187 : i32
    %189 = arith.index_cast %188 : i32 to index
    %c0_88 = arith.constant 0 : index
    %190 = vector.load %arg4[%189, %c0_88] : memref<96x128xf32, #tpu.memory_space<vmem>>, vector<1x32xf32>
    %c5_89 = arith.constant 5 : index
    %c0_90 = arith.constant 0 : index
    %191 = vector.load %arg7[%c5_89, %c0_90] : memref<8x32xf32, #tpu.memory_space<vmem>>, vector<1x32xf32>
    tpu.vector_store %arg7[%c5_89, %c0_90], %190 {strides = array<i32>} : memref<8x32xf32, #tpu.memory_space<vmem>>, vector<1x32xf32>,
    %c0_i32_91 = arith.constant 0 : i32
    %192 = arith.addi %149, %c0_i32_91 : i32
    %193 = arith.index_cast %192 : i32 to index
    %c6 = arith.constant 6 : index
    %194 = memref.load %arg1[%193, %c6] : memref<2x8xi32, #tpu.memory_space<smem>>
    %c64_i32_92 = arith.constant 64 : i32
    %195 = arith.addi %c64_i32_92, %194 : i32
    %196 = arith.index_cast %195 : i32 to index
    %c0_93 = arith.constant 0 : index
    %197 = vector.load %arg4[%196, %c0_93] : memref<96x128xf32, #tpu.memory_space<vmem>>, vector<1x32xf32>
    %c6_94 = arith.constant 6 : index
    %c0_95 = arith.constant 0 : index
    %198 = vector.load %arg7[%c6_94, %c0_95] : memref<8x32xf32, #tpu.memory_space<vmem>>, vector<1x32xf32>
    tpu.vector_store %arg7[%c6_94, %c0_95], %197 {strides = array<i32>} : memref<8x32xf32, #tpu.memory_space<vmem>>, vector<1x32xf32>,
    %c0_i32_96 = arith.constant 0 : i32
    %199 = arith.addi %149, %c0_i32_96 : i32
    %200 = arith.index_cast %199 : i32 to index
    %c7 = arith.constant 7 : index
    %201 = memref.load %arg1[%200, %c7] : memref<2x8xi32, #tpu.memory_space<smem>>
    %c64_i32_97 = arith.constant 64 : i32
    %202 = arith.addi %c64_i32_97, %201 : i32
    %203 = arith.index_cast %202 : i32 to index
    %c0_98 = arith.constant 0 : index
    %204 = vector.load %arg4[%203, %c0_98] : memref<96x128xf32, #tpu.memory_space<vmem>>, vector<1x32xf32>
    %c7_99 = arith.constant 7 : index
    %c0_100 = arith.constant 0 : index
    %205 = vector.load %arg7[%c7_99, %c0_100] : memref<8x32xf32, #tpu.memory_space<vmem>>, vector<1x32xf32>
    tpu.vector_store %arg7[%c7_99, %c0_100], %204 {strides = array<i32>} : memref<8x32xf32, #tpu.memory_space<vmem>>, vector<1x32xf32>,
    %c0_101 = arith.constant 0 : index
    %c0_102 = arith.constant 0 : index
    %206 = vector.load %arg7[%c0_101, %c0_102] : memref<8x32xf32, #tpu.memory_space<vmem>>, vector<8x32xf32>
    %cst_103 = arith.constant 5.65685415 : f32
    %207 = vector.broadcast %cst_103 : f32 to vector<8x32xf32>
    %208 = arith.mulf %206, %207 : vector<8x32xf32>
    %209 = arith.addf %208, %1 : vector<8x32xf32>
    %210 = tpu.iota {dimensions = array<i32: 0>} : vector<8x8xi32>
    %211 = tpu.iota {dimensions = array<i32: 1>} : vector<8x8xi32>
    %212 = arith.cmpi sle, %211, %210 : vector<8x8xi32>
    %cst_104 = arith.constant 0.000000e+00 : f32
    %cst_105 = arith.constant -1.000000e+30 : f32
    %213 = vector.broadcast %cst_104 : f32 to vector<8x8xf32>
    %214 = vector.broadcast %cst_105 : f32 to vector<8x8xf32>
    %215 = arith.select %212, %213, %214 : vector<8x8xi1>, vector<8x8xf32>
    %c0_106 = arith.constant 0 : index
    %c256 = arith.constant 256 : index
    %216 = vector.load %arg3[%c0_106, %c256] : memref<32x9344xbf16, #tpu.memory_space<vmem>>, vector<32x96xbf16>
    %217 = arith.truncf %209 : vector<8x32xf32> to vector<8x32xbf16>
    %cst_107 = arith.constant dense<0.000000e+00> : vector<8x96xf32>
    %218 = tpu.matmul %217, %216, %cst_107 {dimension_numbers = #tpu.dot_dimension_numbers<[1], [0], [0], [1], [0, 0, 1, 1], [], []>} : vector<8x32xbf16>, vector<32x96xbf16>, vector<8x96xf32> -> vector<8x96xf32>
    %c73 = arith.constant 73 : index
    %c0_108 = arith.constant 0 : index
    %219 = vector.load %arg4[%c73, %c0_108] : memref<96x128xf32, #tpu.memory_space<vmem>>, vector<1x96xf32>
    %220 = vector.broadcast %219 : vector<1x96xf32> to vector<8x96xf32>
    %221 = arith.addf %218, %220 : vector<8x96xf32>
    %222 = vector.extract_strided_slice %221 {offsets = [0, 0], sizes = [8, 32], strides = [1, 1]} : vector<8x96xf32> to vector<8x32xf32>
    %223 = vector.extract_strided_slice %221 {offsets = [0, 32], sizes = [8, 32], strides = [1, 1]} : vector<8x96xf32> to vector<8x32xf32>
    %224 = vector.extract_strided_slice %221 {offsets = [0, 64], sizes = [8, 32], strides = [1, 1]} : vector<8x96xf32> to vector<8x32xf32>
    %225 = arith.truncf %222 : vector<8x32xf32> to vector<8x32xbf16>
    %226 = arith.truncf %223 : vector<8x32xf32> to vector<8x32xbf16>
    %cst_109 = arith.constant dense<0.000000e+00> : vector<8x8xf32>
    %227 = tpu.matmul %225, %226, %cst_109 {dimension_numbers = #tpu.dot_dimension_numbers<[1], [1], [0], [0], [0, 0, 1, 0], [], []>} : vector<8x32xbf16>, vector<8x32xbf16>, vector<8x8xf32> -> vector<8x8xf32>
    %cst_110 = arith.constant 0.176776692 : f32
    %228 = vector.broadcast %cst_110 : f32 to vector<8x8xf32>
    %229 = arith.mulf %227, %228 : vector<8x8xf32>
    %230 = arith.addf %229, %215 : vector<8x8xf32>
    %cst_111 = arith.constant dense<0xFF800000> : vector<8xf32>
    %231 = vector.multi_reduction <maximumf>, %230, %cst_111 [1] : vector<8x8xf32> to vector<8xf32>
    %232 = vector.shape_cast %231 : vector<8xf32> to vector<8x1xf32>
    %233 = vector.broadcast %232 : vector<8x1xf32> to vector<8x8xf32>
    %234 = arith.subf %230, %233 : vector<8x8xf32>
    %235 = math.exp %234 : vector<8x8xf32>
    %cst_112 = arith.constant dense<0.000000e+00> : vector<8xf32>
    %236 = vector.multi_reduction <add>, %235, %cst_112 [1] : vector<8x8xf32> to vector<8xf32>
    %237 = vector.shape_cast %236 : vector<8xf32> to vector<8x1xf32>
    %238 = tpu.reciprocal %237 {approx = true} : vector<8x1xf32> -> vector<8x1xf32>
    %239 = vector.broadcast %238 : vector<8x1xf32> to vector<8x8xf32>
    %240 = arith.mulf %235, %239 : vector<8x8xf32>
    %241 = arith.truncf %240 : vector<8x8xf32> to vector<8x8xbf16>
    %242 = arith.truncf %224 : vector<8x32xf32> to vector<8x32xbf16>
    %cst_113 = arith.constant dense<0.000000e+00> : vector<8x32xf32>
    %243 = tpu.matmul %241, %242, %cst_113 {dimension_numbers = #tpu.dot_dimension_numbers<[1], [0], [0], [1], [0, 0, 1, 1], [], []>} : vector<8x8xbf16>, vector<8x32xbf16>, vector<8x32xf32> -> vector<8x32xf32>
    %c0_114 = arith.constant 0 : index
    %c768 = arith.constant 768 : index
    %244 = vector.load %arg3[%c0_114, %c768] : memref<32x9344xbf16, #tpu.memory_space<vmem>>, vector<32x32xbf16>
    %245 = arith.truncf %243 : vector<8x32xf32> to vector<8x32xbf16>
    %cst_115 = arith.constant dense<0.000000e+00> : vector<8x32xf32>
    %246 = tpu.matmul %245, %244, %cst_115 {dimension_numbers = #tpu.dot_dimension_numbers<[1], [0], [0], [1], [0, 0, 1, 1], [], []>} : vector<8x32xbf16>, vector<32x32xbf16>, vector<8x32xf32> -> vector<8x32xf32>
    %247 = arith.addf %209, %246 : vector<8x32xf32>
    %c77 = arith.constant 77 : index
    %c0_116 = arith.constant 0 : index
    %248 = vector.load %arg4[%c77, %c0_116] : memref<96x128xf32, #tpu.memory_space<vmem>>, vector<1x32xf32>
    %249 = vector.broadcast %248 : vector<1x32xf32> to vector<8x32xf32>
    %250 = arith.addf %247, %249 : vector<8x32xf32>
    %cst_117 = arith.constant dense<0.000000e+00> : vector<8xf32>
    %251 = vector.multi_reduction <add>, %250, %cst_117 [1] : vector<8x32xf32> to vector<8xf32>
    %252 = vector.shape_cast %251 : vector<8xf32> to vector<8x1xf32>
    %cst_118 = arith.constant 3.200000e+01 : f32
    %253 = vector.broadcast %cst_118 : f32 to vector<8x1xf32>
    %254 = arith.divf %252, %253 : vector<8x1xf32>
    %255 = vector.broadcast %254 : vector<8x1xf32> to vector<8x32xf32>
    %256 = arith.subf %250, %255 : vector<8x32xf32>
    %257 = arith.mulf %256, %256 : vector<8x32xf32>
    %cst_119 = arith.constant dense<0.000000e+00> : vector<8xf32>
    %258 = vector.multi_reduction <add>, %257, %cst_119 [1] : vector<8x32xf32> to vector<8xf32>
    %259 = vector.shape_cast %258 : vector<8xf32> to vector<8x1xf32>
    %cst_120 = arith.constant 3.200000e+01 : f32
    %260 = vector.broadcast %cst_120 : f32 to vector<8x1xf32>
    %261 = arith.divf %259, %260 : vector<8x1xf32>
    %262 = vector.broadcast %254 : vector<8x1xf32> to vector<8x32xf32>
    %263 = arith.subf %250, %262 : vector<8x32xf32>
    %cst_121 = arith.constant 9.99999974E-6 : f32
    %264 = vector.broadcast %cst_121 : f32 to vector<8x1xf32>
    %265 = arith.addf %261, %264 : vector<8x1xf32>
    %266 = math.rsqrt %265 : vector<8x1xf32>
    %267 = vector.broadcast %266 : vector<8x1xf32> to vector<8x32xf32>
    %268 = arith.mulf %263, %267 : vector<8x32xf32>
    %c83 = arith.constant 83 : index
    %c0_122 = arith.constant 0 : index
    %269 = vector.load %arg4[%c83, %c0_122] : memref<96x128xf32, #tpu.memory_space<vmem>>, vector<1x32xf32>
    %270 = vector.broadcast %269 : vector<1x32xf32> to vector<8x32xf32>
    %271 = arith.mulf %268, %270 : vector<8x32xf32>
    %c84 = arith.constant 84 : index
    %c0_123 = arith.constant 0 : index
    %272 = vector.load %arg4[%c84, %c0_123] : memref<96x128xf32, #tpu.memory_space<vmem>>, vector<1x32xf32>
    %273 = vector.broadcast %272 : vector<1x32xf32> to vector<8x32xf32>
    %274 = arith.addf %271, %273 : vector<8x32xf32>
    %c74 = arith.constant 74 : index
    %c0_124 = arith.constant 0 : index
    %275 = vector.load %arg4[%c74, %c0_124] : memref<96x128xf32, #tpu.memory_space<vmem>>, vector<1x96xf32>
    %c0_125 = arith.constant 0 : index
    %c384 = arith.constant 384 : index
    %276 = vector.load %arg3[%c0_125, %c384] : memref<32x9344xbf16, #tpu.memory_space<vmem>>, vector<32x32xbf16>
    %277 = arith.truncf %274 : vector<8x32xf32> to vector<8x32xbf16>
    %cst_126 = arith.constant dense<0.000000e+00> : vector<8x32xf32>
    %278 = tpu.matmul %277, %276, %cst_126 {dimension_numbers = #tpu.dot_dimension_numbers<[1], [0], [0], [1], [0, 0, 1, 1], [], []>} : vector<8x32xbf16>, vector<32x32xbf16>, vector<8x32xf32> -> vector<8x32xf32>
    %279 = vector.extract_strided_slice %275 {offsets = [0, 0], sizes = [1, 32], strides = [1, 1]} : vector<1x96xf32> to vector<1x32xf32>
    %280 = vector.broadcast %279 : vector<1x32xf32> to vector<8x32xf32>
    %281 = arith.addf %278, %280 : vector<8x32xf32>
    %c0_127 = arith.constant 0 : index
    %c512_128 = arith.constant 512 : index
    %282 = vector.load %arg3[%c0_127, %c512_128] : memref<32x9344xbf16, #tpu.memory_space<vmem>>, vector<32x64xbf16>
    %283 = arith.truncf %148 : vector<16x32xf32> to vector<16x32xbf16>
    %cst_129 = arith.constant dense<0.000000e+00> : vector<16x64xf32>
    %284 = tpu.matmul %283, %282, %cst_129 {dimension_numbers = #tpu.dot_dimension_numbers<[1], [0], [0], [1], [0, 0, 1, 1], [], []>} : vector<16x32xbf16>, vector<32x64xbf16>, vector<16x64xf32> -> vector<16x64xf32>
    %285 = vector.extract_strided_slice %275 {offsets = [0, 32], sizes = [1, 64], strides = [1, 1]} : vector<1x96xf32> to vector<1x64xf32>
    %286 = vector.broadcast %285 : vector<1x64xf32> to vector<16x64xf32>
    %287 = arith.addf %284, %286 : vector<16x64xf32>
    %288 = vector.extract_strided_slice %287 {offsets = [0, 0], sizes = [16, 32], strides = [1, 1]} : vector<16x64xf32> to vector<16x32xf32>
    %289 = vector.extract_strided_slice %287 {offsets = [0, 32], sizes = [16, 32], strides = [1, 1]} : vector<16x64xf32> to vector<16x32xf32>
    %290 = arith.truncf %281 : vector<8x32xf32> to vector<8x32xbf16>
    %291 = arith.truncf %288 : vector<16x32xf32> to vector<16x32xbf16>
    %cst_130 = arith.constant dense<0.000000e+00> : vector<8x16xf32>
    %292 = tpu.matmul %290, %291, %cst_130 {dimension_numbers = #tpu.dot_dimension_numbers<[1], [1], [0], [0], [0, 0, 1, 0], [], []>} : vector<8x32xbf16>, vector<16x32xbf16>, vector<8x16xf32> -> vector<8x16xf32>
    %cst_131 = arith.constant 0.176776692 : f32
    %293 = vector.broadcast %cst_131 : f32 to vector<8x16xf32>
    %294 = arith.mulf %292, %293 : vector<8x16xf32>
    %cst_132 = arith.constant dense<0xFF800000> : vector<8xf32>
    %295 = vector.multi_reduction <maximumf>, %294, %cst_132 [1] : vector<8x16xf32> to vector<8xf32>
    %296 = vector.shape_cast %295 : vector<8xf32> to vector<8x1xf32>
    %297 = vector.broadcast %296 : vector<8x1xf32> to vector<8x16xf32>
    %298 = arith.subf %294, %297 : vector<8x16xf32>
    %299 = math.exp %298 : vector<8x16xf32>
    %cst_133 = arith.constant dense<0.000000e+00> : vector<8xf32>
    %300 = vector.multi_reduction <add>, %299, %cst_133 [1] : vector<8x16xf32> to vector<8xf32>
    %301 = vector.shape_cast %300 : vector<8xf32> to vector<8x1xf32>
    %302 = tpu.reciprocal %301 {approx = true} : vector<8x1xf32> -> vector<8x1xf32>
    %303 = vector.broadcast %302 : vector<8x1xf32> to vector<8x16xf32>
    %304 = arith.mulf %299, %303 : vector<8x16xf32>
    %305 = arith.truncf %304 : vector<8x16xf32> to vector<8x16xbf16>
    %306 = arith.truncf %289 : vector<16x32xf32> to vector<16x32xbf16>
    %cst_134 = arith.constant dense<0.000000e+00> : vector<8x32xf32>
    %307 = tpu.matmul %305, %306, %cst_134 {dimension_numbers = #tpu.dot_dimension_numbers<[1], [0], [0], [1], [0, 0, 1, 1], [], []>} : vector<8x16xbf16>, vector<16x32xbf16>, vector<8x32xf32> -> vector<8x32xf32>
    %c0_135 = arith.constant 0 : index
    %c896 = arith.constant 896 : index
    %308 = vector.load %arg3[%c0_135, %c896] : memref<32x9344xbf16, #tpu.memory_space<vmem>>, vector<32x32xbf16>
    %309 = arith.truncf %307 : vector<8x32xf32> to vector<8x32xbf16>
    %cst_136 = arith.constant dense<0.000000e+00> : vector<8x32xf32>
    %310 = tpu.matmul %309, %308, %cst_136 {dimension_numbers = #tpu.dot_dimension_numbers<[1], [0], [0], [1], [0, 0, 1, 1], [], []>} : vector<8x32xbf16>, vector<32x32xbf16>, vector<8x32xf32> -> vector<8x32xf32>
    %311 = arith.addf %274, %310 : vector<8x32xf32>
    %c78 = arith.constant 78 : index
    %c0_137 = arith.constant 0 : index
    %312 = vector.load %arg4[%c78, %c0_137] : memref<96x128xf32, #tpu.memory_space<vmem>>, vector<1x32xf32>
    %313 = vector.broadcast %312 : vector<1x32xf32> to vector<8x32xf32>
    %314 = arith.addf %311, %313 : vector<8x32xf32>
    %cst_138 = arith.constant dense<0.000000e+00> : vector<8xf32>
    %315 = vector.multi_reduction <add>, %314, %cst_138 [1] : vector<8x32xf32> to vector<8xf32>
    %316 = vector.shape_cast %315 : vector<8xf32> to vector<8x1xf32>
    %cst_139 = arith.constant 3.200000e+01 : f32
    %317 = vector.broadcast %cst_139 : f32 to vector<8x1xf32>
    %318 = arith.divf %316, %317 : vector<8x1xf32>
    %319 = vector.broadcast %318 : vector<8x1xf32> to vector<8x32xf32>
    %320 = arith.subf %314, %319 : vector<8x32xf32>
    %321 = arith.mulf %320, %320 : vector<8x32xf32>
    %cst_140 = arith.constant dense<0.000000e+00> : vector<8xf32>
    %322 = vector.multi_reduction <add>, %321, %cst_140 [1] : vector<8x32xf32> to vector<8xf32>
    %323 = vector.shape_cast %322 : vector<8xf32> to vector<8x1xf32>
    %cst_141 = arith.constant 3.200000e+01 : f32
    %324 = vector.broadcast %cst_141 : f32 to vector<8x1xf32>
    %325 = arith.divf %323, %324 : vector<8x1xf32>
    %326 = vector.broadcast %318 : vector<8x1xf32> to vector<8x32xf32>
    %327 = arith.subf %314, %326 : vector<8x32xf32>
    %cst_142 = arith.constant 9.99999974E-6 : f32
    %328 = vector.broadcast %cst_142 : f32 to vector<8x1xf32>
    %329 = arith.addf %325, %328 : vector<8x1xf32>
    %330 = math.rsqrt %329 : vector<8x1xf32>
    %331 = vector.broadcast %330 : vector<8x1xf32> to vector<8x32xf32>
    %332 = arith.mulf %327, %331 : vector<8x32xf32>
    %c85 = arith.constant 85 : index
    %c0_143 = arith.constant 0 : index
    %333 = vector.load %arg4[%c85, %c0_143] : memref<96x128xf32, #tpu.memory_space<vmem>>, vector<1x32xf32>
    %334 = vector.broadcast %333 : vector<1x32xf32> to vector<8x32xf32>
    %335 = arith.mulf %332, %334 : vector<8x32xf32>
    %c86 = arith.constant 86 : index
    %c0_144 = arith.constant 0 : index
    %336 = vector.load %arg4[%c86, %c0_144] : memref<96x128xf32, #tpu.memory_space<vmem>>, vector<1x32xf32>
    %337 = vector.broadcast %336 : vector<1x32xf32> to vector<8x32xf32>
    %338 = arith.addf %335, %337 : vector<8x32xf32>
    %339 = arith.truncf %338 : vector<8x32xf32> to vector<8x32xbf16>
    %cst_145 = arith.constant 0.000000e+00 : f32
    %340 = vector.broadcast %cst_145 : f32 to vector<8x32xf32>
    %c0_146 = arith.constant 0 : index
    %c5248 = arith.constant 5248 : index
    %341 = vector.load %arg3[%c0_146, %c5248] : memref<32x9344xbf16, #tpu.memory_space<vmem>>, vector<32x512xbf16>
    %cst_147 = arith.constant dense<0.000000e+00> : vector<8x512xf32>
    %342 = tpu.matmul %339, %341, %cst_147 {dimension_numbers = #tpu.dot_dimension_numbers<[1], [0], [0], [1], [0, 0, 1, 1], [], []>} : vector<8x32xbf16>, vector<32x512xbf16>, vector<8x512xf32> -> vector<8x512xf32>
    %343 = arith.truncf %342 : vector<8x512xf32> to vector<8x512xbf16>
    %c1_148 = arith.constant 1 : index
    %c0_149 = arith.constant 0 : index
    %344 = vector.load %arg5[%c1_148, %c0_149] : memref<2x2048xf32, #tpu.memory_space<vmem>>, vector<1x512xf32>
    %345 = arith.truncf %344 : vector<1x512xf32> to vector<1x512xbf16>
    %346 = vector.broadcast %345 : vector<1x512xbf16> to vector<8x512xbf16>
    %347 = arith.addf %343, %346 : vector<8x512xbf16>
    %cst_150 = arith.constant 0.000000e+00 : bf16
    %348 = vector.broadcast %cst_150 : bf16 to vector<8x512xbf16>
    %349 = arith.maximumf %347, %348 : vector<8x512xbf16>
    %c0_151 = arith.constant 0 : index
    %c7296 = arith.constant 7296 : index
    %350 = vector.load %arg3[%c0_151, %c7296] : memref<32x9344xbf16, #tpu.memory_space<vmem>>, vector<32x512xbf16>
    %cst_152 = arith.constant dense<0.000000e+00> : vector<8x32xf32>
    %351 = tpu.matmul %349, %350, %cst_152 {dimension_numbers = #tpu.dot_dimension_numbers<[1], [1], [0], [0], [0, 0, 1, 0], [], []>} : vector<8x512xbf16>, vector<32x512xbf16>, vector<8x32xf32> -> vector<8x32xf32>
    %352 = arith.addf %340, %351 : vector<8x32xf32>
    %c0_153 = arith.constant 0 : index
    %c5760 = arith.constant 5760 : index
    %353 = vector.load %arg3[%c0_153, %c5760] : memref<32x9344xbf16, #tpu.memory_space<vmem>>, vector<32x512xbf16>
    %cst_154 = arith.constant dense<0.000000e+00> : vector<8x512xf32>
    %354 = tpu.matmul %339, %353, %cst_154 {dimension_numbers = #tpu.dot_dimension_numbers<[1], [0], [0], [1], [0, 0, 1, 1], [], []>} : vector<8x32xbf16>, vector<32x512xbf16>, vector<8x512xf32> -> vector<8x512xf32>
    %355 = arith.truncf %354 : vector<8x512xf32> to vector<8x512xbf16>
    %c1_155 = arith.constant 1 : index
    %c512_156 = arith.constant 512 : index
    %356 = vector.load %arg5[%c1_155, %c512_156] : memref<2x2048xf32, #tpu.memory_space<vmem>>, vector<1x512xf32>
    %357 = arith.truncf %356 : vector<1x512xf32> to vector<1x512xbf16>
    %358 = vector.broadcast %357 : vector<1x512xbf16> to vector<8x512xbf16>
    %359 = arith.addf %355, %358 : vector<8x512xbf16>
    %cst_157 = arith.constant 0.000000e+00 : bf16
    %360 = vector.broadcast %cst_157 : bf16 to vector<8x512xbf16>
    %361 = arith.maximumf %359, %360 : vector<8x512xbf16>
    %c0_158 = arith.constant 0 : index
    %c7808 = arith.constant 7808 : index
    %362 = vector.load %arg3[%c0_158, %c7808] : memref<32x9344xbf16, #tpu.memory_space<vmem>>, vector<32x512xbf16>
    %cst_159 = arith.constant dense<0.000000e+00> : vector<8x32xf32>
    %363 = tpu.matmul %361, %362, %cst_159 {dimension_numbers = #tpu.dot_dimension_numbers<[1], [1], [0], [0], [0, 0, 1, 0], [], []>} : vector<8x512xbf16>, vector<32x512xbf16>, vector<8x32xf32> -> vector<8x32xf32>
    %364 = arith.addf %352, %363 : vector<8x32xf32>
    %c0_160 = arith.constant 0 : index
    %c6272 = arith.constant 6272 : index
    %365 = vector.load %arg3[%c0_160, %c6272] : memref<32x9344xbf16, #tpu.memory_space<vmem>>, vector<32x512xbf16>
    %cst_161 = arith.constant dense<0.000000e+00> : vector<8x512xf32>
    %366 = tpu.matmul %339, %365, %cst_161 {dimension_numbers = #tpu.dot_dimension_numbers<[1], [0], [0], [1], [0, 0, 1, 1], [], []>} : vector<8x32xbf16>, vector<32x512xbf16>, vector<8x512xf32> -> vector<8x512xf32>
    %367 = arith.truncf %366 : vector<8x512xf32> to vector<8x512xbf16>
    %c1_162 = arith.constant 1 : index
    %c1024_163 = arith.constant 1024 : index
    %368 = vector.load %arg5[%c1_162, %c1024_163] : memref<2x2048xf32, #tpu.memory_space<vmem>>, vector<1x512xf32>
    %369 = arith.truncf %368 : vector<1x512xf32> to vector<1x512xbf16>
    %370 = vector.broadcast %369 : vector<1x512xbf16> to vector<8x512xbf16>
    %371 = arith.addf %367, %370 : vector<8x512xbf16>
    %cst_164 = arith.constant 0.000000e+00 : bf16
    %372 = vector.broadcast %cst_164 : bf16 to vector<8x512xbf16>
    %373 = arith.maximumf %371, %372 : vector<8x512xbf16>
    %c0_165 = arith.constant 0 : index
    %c8320 = arith.constant 8320 : index
    %374 = vector.load %arg3[%c0_165, %c8320] : memref<32x9344xbf16, #tpu.memory_space<vmem>>, vector<32x512xbf16>
    %cst_166 = arith.constant dense<0.000000e+00> : vector<8x32xf32>
    %375 = tpu.matmul %373, %374, %cst_166 {dimension_numbers = #tpu.dot_dimension_numbers<[1], [1], [0], [0], [0, 0, 1, 0], [], []>} : vector<8x512xbf16>, vector<32x512xbf16>, vector<8x32xf32> -> vector<8x32xf32>
    %376 = arith.addf %364, %375 : vector<8x32xf32>
    %c0_167 = arith.constant 0 : index
    %c6784 = arith.constant 6784 : index
    %377 = vector.load %arg3[%c0_167, %c6784] : memref<32x9344xbf16, #tpu.memory_space<vmem>>, vector<32x512xbf16>
    %cst_168 = arith.constant dense<0.000000e+00> : vector<8x512xf32>
    %378 = tpu.matmul %339, %377, %cst_168 {dimension_numbers = #tpu.dot_dimension_numbers<[1], [0], [0], [1], [0, 0, 1, 1], [], []>} : vector<8x32xbf16>, vector<32x512xbf16>, vector<8x512xf32> -> vector<8x512xf32>
    %379 = arith.truncf %378 : vector<8x512xf32> to vector<8x512xbf16>
    %c1_169 = arith.constant 1 : index
    %c1536_170 = arith.constant 1536 : index
    %380 = vector.load %arg5[%c1_169, %c1536_170] : memref<2x2048xf32, #tpu.memory_space<vmem>>, vector<1x512xf32>
    %381 = arith.truncf %380 : vector<1x512xf32> to vector<1x512xbf16>
    %382 = vector.broadcast %381 : vector<1x512xbf16> to vector<8x512xbf16>
    %383 = arith.addf %379, %382 : vector<8x512xbf16>
    %cst_171 = arith.constant 0.000000e+00 : bf16
    %384 = vector.broadcast %cst_171 : bf16 to vector<8x512xbf16>
    %385 = arith.maximumf %383, %384 : vector<8x512xbf16>
    %c0_172 = arith.constant 0 : index
    %c8832 = arith.constant 8832 : index
    %386 = vector.load %arg3[%c0_172, %c8832] : memref<32x9344xbf16, #tpu.memory_space<vmem>>, vector<32x512xbf16>
    %cst_173 = arith.constant dense<0.000000e+00> : vector<8x32xf32>
    %387 = tpu.matmul %385, %386, %cst_173 {dimension_numbers = #tpu.dot_dimension_numbers<[1], [1], [0], [0], [0, 0, 1, 0], [], []>} : vector<8x512xbf16>, vector<32x512xbf16>, vector<8x32xf32> -> vector<8x32xf32>
    %388 = arith.addf %376, %387 : vector<8x32xf32>
    %c90 = arith.constant 90 : index
    %c0_174 = arith.constant 0 : index
    %389 = vector.load %arg4[%c90, %c0_174] : memref<96x128xf32, #tpu.memory_space<vmem>>, vector<1x32xf32>
    %390 = vector.broadcast %389 : vector<1x32xf32> to vector<8x32xf32>
    %391 = arith.addf %388, %390 : vector<8x32xf32>
    %392 = arith.addf %338, %391 : vector<8x32xf32>
    %cst_175 = arith.constant dense<0.000000e+00> : vector<8xf32>
    %393 = vector.multi_reduction <add>, %392, %cst_175 [1] : vector<8x32xf32> to vector<8xf32>
    %394 = vector.shape_cast %393 : vector<8xf32> to vector<8x1xf32>
    %cst_176 = arith.constant 3.200000e+01 : f32
    %395 = vector.broadcast %cst_176 : f32 to vector<8x1xf32>
    %396 = arith.divf %394, %395 : vector<8x1xf32>
    %397 = vector.broadcast %396 : vector<8x1xf32> to vector<8x32xf32>
    %398 = arith.subf %392, %397 : vector<8x32xf32>
    %399 = arith.mulf %398, %398 : vector<8x32xf32>
    %cst_177 = arith.constant dense<0.000000e+00> : vector<8xf32>
    %400 = vector.multi_reduction <add>, %399, %cst_177 [1] : vector<8x32xf32> to vector<8xf32>
    %401 = vector.shape_cast %400 : vector<8xf32> to vector<8x1xf32>
    %cst_178 = arith.constant 3.200000e+01 : f32
    %402 = vector.broadcast %cst_178 : f32 to vector<8x1xf32>
    %403 = arith.divf %401, %402 : vector<8x1xf32>
    %404 = vector.broadcast %396 : vector<8x1xf32> to vector<8x32xf32>
    %405 = arith.subf %392, %404 : vector<8x32xf32>
    %cst_179 = arith.constant 9.99999974E-6 : f32
    %406 = vector.broadcast %cst_179 : f32 to vector<8x1xf32>
    %407 = arith.addf %403, %406 : vector<8x1xf32>
    %408 = math.rsqrt %407 : vector<8x1xf32>
    %409 = vector.broadcast %408 : vector<8x1xf32> to vector<8x32xf32>
    %410 = arith.mulf %405, %409 : vector<8x32xf32>
    %c87 = arith.constant 87 : index
    %c0_180 = arith.constant 0 : index
    %411 = vector.load %arg4[%c87, %c0_180] : memref<96x128xf32, #tpu.memory_space<vmem>>, vector<1x32xf32>
    %412 = vector.broadcast %411 : vector<1x32xf32> to vector<8x32xf32>
    %413 = arith.mulf %410, %412 : vector<8x32xf32>
    %c88 = arith.constant 88 : index
    %c0_181 = arith.constant 0 : index
    %414 = vector.load %arg4[%c88, %c0_181] : memref<96x128xf32, #tpu.memory_space<vmem>>, vector<1x32xf32>
    %415 = vector.broadcast %414 : vector<1x32xf32> to vector<8x32xf32>
    %416 = arith.addf %413, %415 : vector<8x32xf32>
    %c0_182 = arith.constant 0 : index
    %c1024_183 = arith.constant 1024 : index
    %417 = vector.load %arg3[%c0_182, %c1024_183] : memref<32x9344xbf16, #tpu.memory_space<vmem>>, vector<32x128xbf16>
    %418 = arith.truncf %416 : vector<8x32xf32> to vector<8x32xbf16>
    %cst_184 = arith.constant dense<0.000000e+00> : vector<8x128xf32>
    %419 = tpu.matmul %418, %417, %cst_184 {dimension_numbers = #tpu.dot_dimension_numbers<[1], [0], [0], [1], [0, 0, 1, 1], [], []>} : vector<8x32xbf16>, vector<32x128xbf16>, vector<8x128xf32> -> vector<8x128xf32>
    %c91 = arith.constant 91 : index
    %c0_185 = arith.constant 0 : index
    %420 = vector.load %arg4[%c91, %c0_185] : memref<96x128xf32, #tpu.memory_space<vmem>>, vector<1x128xf32>
    %421 = vector.broadcast %420 : vector<1x128xf32> to vector<8x128xf32>
    %422 = arith.addf %419, %421 : vector<8x128xf32>
    %423 = vector.shape_cast %422 : vector<8x128xf32> to vector<1x8x128xf32>
    %c0_186 = arith.constant 0 : index
    %c0_187 = arith.constant 0 : index
    %c0_188 = arith.constant 0 : index
    %424 = vector.load %arg6[%c0_186, %c0_187, %c0_188] : memref<1x8x128xf32, #tpu.memory_space<vmem>>, vector<1x8x128xf32>
    tpu.vector_store %arg6[%c0_186, %c0_187, %c0_188], %423 {strides = array<i32>} : memref<1x8x128xf32, #tpu.memory_space<vmem>>, vector<1x8x128xf32>,
    return
  }
  func.func @transform_0(%arg0: i32, %arg1: memref<2x8xi32, #tpu.memory_space<smem>>) -> (i32, i32, i32) {
    %c0_i32 = arith.constant 0 : i32
    %c0_i32_0 = arith.constant 0 : i32
    %c0_i32_1 = arith.constant 0 : i32
    return %arg0, %c0_i32, %c0_i32_0 : i32, i32, i32
  }
  func.func @transform_1(%arg0: i32, %arg1: memref<2x8xi32, #tpu.memory_space<smem>>) -> (i32, i32) {
    %c0_i32 = arith.constant 0 : i32
    %c0_i32_0 = arith.constant 0 : i32
    %c0_i32_1 = arith.constant 0 : i32
    return %c0_i32, %c0_i32_0 : i32, i32
  }
  func.func @transform_2(%arg0: i32, %arg1: memref<2x8xi32, #tpu.memory_space<smem>>) -> (i32, i32) {
    %c0_i32 = arith.constant 0 : i32
    %c0_i32_0 = arith.constant 0 : i32
    %c0_i32_1 = arith.constant 0 : i32
    return %c0_i32, %c0_i32_0 : i32, i32
  }
  func.func @transform_3(%arg0: i32, %arg1: memref<2x8xi32, #tpu.memory_space<smem>>) -> (i32, i32) {
    %c0_i32 = arith.constant 0 : i32
    %c0_i32_0 = arith.constant 0 : i32
    %c0_i32_1 = arith.constant 0 : i32
    return %c0_i32, %c0_i32_0 : i32, i32
  }
  func.func @transform_4(%arg0: i32, %arg1: memref<2x8xi32, #tpu.memory_space<smem>>) -> (i32, i32, i32) {
    %c0_i32 = arith.constant 0 : i32
    %c0_i32_0 = arith.constant 0 : i32
    %c0_i32_1 = arith.constant 0 : i32
    return %arg0, %c0_i32, %c0_i32_0 : i32, i32, i32
  }
}

</mosaic_0001>

<llo_original>
// kernel: tpu_custom_call.1
$region0: #{tpu_custom_call.1}
  #allocation0 [shape = 'u32[]', space=smem, size = 0x4, offset = 0x4, fixed_abs, tag = 'smem constant byte address 0x4 - core index']
  #allocation1 [shape = 'u32[72,128]{1,0:T(1,128)}', space=vmem, size = 0x9000, scoped, tag = 'internal scratch']
  #allocation2 [shape = 'f32[8,32]{1,0:T(8,128)}', space=vmem, size = 0x1000, scoped, tag = 'scratch operand']
  #allocation3 [shape = 's32[1]{0}', space=sflag, size = 0x4, scoped, tag = 'scoped memory for tpu_custom_call.1']
  #allocation4 [shape = 'u8[1024]{0}', space=smem, size = 0x400, scoped, tag = 'prefetched SMEM operand 0']
  %s0 = inlined_call_operand.vmem [shape: s32[2,8], index: 0, kind: input, shape index: {}]
  %s1 = inlined_call_operand.vmem [shape: f32[2,16,8], index: 1, kind: input, shape index: {}]
  %s2 = inlined_call_operand.hbm [shape: bf16[32,9344], index: 2, kind: input, shape index: {}]
  %s3 = inlined_call_operand.hbm [shape: f32[96,128], index: 3, kind: input, shape index: {}]
  %s4 = inlined_call_operand.vmem [shape: f32[2,2048], index: 4, kind: input, shape index: {}]
  %s5 = inlined_call_operand.hbm [shape: f32[2,8,128], index: 5, kind: output, shape index: {}]
  %s6 = sld [smem:[#allocation0]]
  $region57: #{tpu_custom_call.1} parent=0
    _
  %s8 = ssub.s32 1, %s6
  %s9 = scalar_select 0, %s8, %s6
  %s11 = sshll.u32 %s0, 4
  %s12 = int_to_ptr.vmem [resolvable:$true] %s11
  %14 = dma.vmem_to_smem %s12, 32, [#allocation4], [#allocation3]
  %16 = dma.done [#allocation3], 32
  %17 = sfence
  $region1: #{tpu_custom_call.1} parent=0
    #allocation5 [shape = 'u8[598016]{0}', space=vmem, size = 0x92000, scoped, tag = 'input window, operand 2, single buffered']
    #allocation6 [shape = 's32[2]{0}', space=sflag, size = 0x8, scoped, tag = 'scoped memory for tpu_custom_call.1']
    #allocation7 [shape = 's32[2]{0}', space=sflag, size = 0x8, scoped, tag = 'scoped memory for tpu_custom_call.1']
    #allocation8 [shape = 'u8[49152]{0}', space=vmem, size = 0xc000, scoped, tag = 'input window, operand 3, single buffered']
    #allocation9 [shape = 's32[1]{0}', space=sflag, size = 0x4, scoped, tag = 'scoped memory for tpu_custom_call.1']
    #allocation10 [shape = 'u8[8192]{0}', space=vmem, size = 0x2000, scoped, tag = 'output window, operand 0']
    %18 = vsyncpa [#allocation6], 0
    %19 = vsyncpa [#allocation9], 0
    %20 = vsyncpa [#allocation7], 0
    %s21 = scalar_lea.sflag [#allocation7], 1
    %22 = vsyncpa %s21, 0
    loop: start=0, step=1, limit=4
    $region2: #{tpu_custom_call.1} parent=1 // loop_pre_header
      _
    $region3: #{tpu_custom_call.1} parent=1 // loop_header
      %s24 = sphi 0, %s28
      %p25 = scmp.ge.s32.totalorder %s24, 4
      %s34 = sphi 0, %s36
      %s37 = sphi 0, %s34
      %s38 = sphi 0, %s37
      %s54 = sphi 0, %s38
      %s58 = sphi 0, %s58
      %s60 = sphi 0, %s58
      %s61 = sphi 0, %s60
      %s75 = sphi 0, %s61
      %s79 = sphi 0, %s79
      %s81 = sphi 0, %s79
      %s82 = sphi 0, %s81
      %s96 = sphi 0, %s82
      %s100 = sphi 0, %s100
      %s102 = sphi 0, %s100
      %s103 = sphi 0, %s102
      %s117 = sphi 0, %s103
      %s123 = sphi 0, %s125
      %s126 = sphi 0, %s123
      %s127 = sphi 0, %s126
      %s143 = sphi 0, %s127
    $region4: #{tpu_custom_call.1} parent=1 // loop_header_branch
      %27 = sbr.rel (%p25) target = $region8
    $region5: #{tpu_custom_call.1} parent=1 // loop_body
      %s29 = ssub.s32 %s24, 1
      %s30 = ssub.s32 %s24, 2
      %s31 = sadd.s32 %s24, 1
      %s32 = ssub.s32 %s24, %s31
      %p33 = scmp.eq.s32.totalorder %s32, 0
      %s35 = sadd.s32 %s34, 1
      %s36 = scalar_select %p33, %s34, %s35
      %p39 = pneg %p33
      %p40 = scmp.eq.s32.totalorder %s24, 1
      %p41 = por %p39, %p40
      %p42 = scmp.ne.s32.totalorder %s34, %s37
      %p43 = scmp.eq.s32.totalorder %s24, 0
      %p44 = por %p42, %p43
      %p45 = scmp.ne.s32.totalorder %s34, %s37
      %p46 = scmp.eq.s32.totalorder %s29, 1
      %p47 = por %p45, %p46
      %p48 = scmp.ne.s32.totalorder %s37, %s38
      %p49 = scmp.eq.s32.totalorder %s29, 0
      %p50 = por %p48, %p49
      %p51 = scmp.ne.s32.totalorder %s37, %s38
      %p52 = scmp.eq.s32.totalorder %s30, 1
      %p53 = por %p51, %p52
      %p55 = scmp.ne.s32.totalorder %s38, %s54
      %p56 = scmp.eq.s32.totalorder %s30, 0
      %p57 = por %p55, %p56
      %s59 = sadd.s32 %s58, 1
      %p62 = scmp.eq.s32.totalorder %s24, 1
      %p63 = scmp.ne.s32.totalorder %s58, %s60
      %p64 = scmp.eq.s32.totalorder %s24, 0
      %p65 = por %p63, %p64
      %p66 = scmp.ne.s32.totalorder %s58, %s60
      %p67 = scmp.eq.s32.totalorder %s29, 1
      %p68 = por %p66, %p67
      %p69 = scmp.ne.s32.totalorder %s60, %s61
      %p70 = scmp.eq.s32.totalorder %s29, 0
      %p71 = por %p69, %p70
      %p72 = scmp.ne.s32.totalorder %s60, %s61
      %p73 = scmp.eq.s32.totalorder %s30, 1
      %p74 = por %p72, %p73
      %p76 = scmp.ne.s32.totalorder %s61, %s75
      %p77 = scmp.eq.s32.totalorder %s30, 0
      %p78 = por %p76, %p77
      %s80 = sadd.s32 %s79, 1
      %p83 = scmp.eq.s32.totalorder %s24, 1
      %p84 = scmp.ne.s32.totalorder %s79, %s81
      %p85 = scmp.eq.s32.totalorder %s24, 0
      %p86 = por %p84, %p85
      %p87 = scmp.ne.s32.totalorder %s79, %s81
      %p88 = scmp.eq.s32.totalorder %s29, 1
      %p89 = por %p87, %p88
      %p90 = scmp.ne.s32.totalorder %s81, %s82
      %p91 = scmp.eq.s32.totalorder %s29, 0
      %p92 = por %p90, %p91
      %p93 = scmp.ne.s32.totalorder %s81, %s82
      %p94 = scmp.eq.s32.totalorder %s30, 1
      %p95 = por %p93, %p94
      %p97 = scmp.ne.s32.totalorder %s82, %s96
      %p98 = scmp.eq.s32.totalorder %s30, 0
      %p99 = por %p97, %p98
      %s101 = sadd.s32 %s100, 1
      %p104 = scmp.eq.s32.totalorder %s24, 1
      %p105 = scmp.ne.s32.totalorder %s100, %s102
      %p106 = scmp.eq.s32.totalorder %s24, 0
      %p107 = por %p105, %p106
      %p108 = scmp.ne.s32.totalorder %s100, %s102
      %p109 = scmp.eq.s32.totalorder %s29, 1
      %p110 = por %p108, %p109
      %p111 = scmp.ne.s32.totalorder %s102, %s103
      %p112 = scmp.eq.s32.totalorder %s29, 0
      %p113 = por %p111, %p112
      %p114 = scmp.ne.s32.totalorder %s102, %s103
      %p115 = scmp.eq.s32.totalorder %s30, 1
      %p116 = por %p114, %p115
      %p118 = scmp.ne.s32.totalorder %s103, %s117
      %p119 = scmp.eq.s32.totalorder %s30, 0
      %p120 = por %p118, %p119
      %s121 = ssub.s32 %s24, %s31
      %p122 = scmp.eq.s32.totalorder %s121, 0
      %s124 = sadd.s32 %s123, 1
      %s125 = scalar_select %p122, %s123, %s124
      %p128 = pneg %p122
      %p129 = scmp.eq.s32.totalorder %s24, 1
      %p130 = por %p128, %p129
      %p131 = scmp.ne.s32.totalorder %s123, %s126
      %p132 = scmp.eq.s32.totalorder %s24, 0
      %p133 = por %p131, %p132
      %p134 = scmp.ne.s32.totalorder %s123, %s126
      %p135 = scmp.eq.s32.totalorder %s29, 1
      %p136 = por %p134, %p135
      %p137 = scmp.ne.s32.totalorder %s126, %s127
      %p138 = scmp.eq.s32.totalorder %s29, 0
      %p139 = por %p137, %p138
      %p140 = scmp.ne.s32.totalorder %s126, %s127
      %p141 = scmp.eq.s32.totalorder %s30, 1
      %p142 = por %p140, %p141
      %p144 = scmp.ne.s32.totalorder %s127, %s143
      %p145 = scmp.eq.s32.totalorder %s30, 0
      %p146 = por %p144, %p145
      %p147 = scmp.le.s32.totalorder 1, %s24
      %p148 = scmp.lt.s32.totalorder %s24, 3
      %p149 = pnand %p147, %p148
      %p150 = pneg %p149
      // Predicated region
      $region9: #{tpu_custom_call.1} parent=5 // pred_check
        _
      $region10: #{tpu_custom_call.1} parent=5 // pred_check_branch
        %152 = sbr.rel (%p149) target = $region12
      $region11: #{tpu_custom_call.1} parent=5 // pred_region
        %s153 = ssub.s32 %s24, 1
        // Predicated region
        $region13: #{tpu_custom_call.1} parent=11 // pred_check
          %p154 = pneg %p71
        $region14: #{tpu_custom_call.1} parent=11 // pred_check_branch
          %156 = sbr.rel (%p154) target = $region16
        $region15: #{tpu_custom_call.1} parent=11 // pred_region
          %158 = vsyncadd [#allocation6], 0
          %s159 = sshll.u32 %s2, 4
          %s160 = int_to_ptr.hbm [resolvable:$true] %s159
          %s161 = sshll.u32 [#allocation5], 4
          %s162 = int_to_ptr.vmem [resolvable:$true] %s161
          %167 = dma.hbm_to_vmem [thread:$0]  %s160, 18688, %s162, [#allocation6], 4672, 4672, 292
        $region16: #{tpu_custom_call.1} parent=11 // pred_fallthru
          _
        // Predicated region
        $region17: #{tpu_custom_call.1} parent=11 // pred_check
          %p168 = pneg %p92
        $region18: #{tpu_custom_call.1} parent=11 // pred_check_branch
          %170 = sbr.rel (%p168) target = $region20
        $region19: #{tpu_custom_call.1} parent=11 // pred_region
          %172 = vsyncadd [#allocation9], 0
          %s173 = sshll.u32 %s3, 4
          %s174 = int_to_ptr.hbm [resolvable:$true] %s173
          %s175 = sshll.u32 [#allocation8], 4
          %s176 = int_to_ptr.vmem [resolvable:$true] %s175
          %181 = dma.hbm_to_vmem [thread:$0]  %s174, 1536, %s176, [#allocation9], 128, 128, 8
        $region20: #{tpu_custom_call.1} parent=11 // pred_fallthru
          _
        // Predicated region
        $region21: #{tpu_custom_call.1} parent=11 // pred_check
          %p182 = pneg %p113
        $region22: #{tpu_custom_call.1} parent=11 // pred_check_branch
          %184 = sbr.rel (%p182) target = $region24
        $region23: #{tpu_custom_call.1} parent=11 // pred_region
          _
        $region24: #{tpu_custom_call.1} parent=11 // pred_fallthru
          _
      $region12: #{tpu_custom_call.1} parent=5 // pred_fallthru
        _
      %p185 = scmp.lt.s32.totalorder %s24, 2
      // Predicated region
      $region25: #{tpu_custom_call.1} parent=5 // pred_check
        %p186 = pneg %p185
      $region26: #{tpu_custom_call.1} parent=5 // pred_check_branch
        %188 = sbr.rel (%p186) target = $region28
      $region27: #{tpu_custom_call.1} parent=5 // pred_region
        // Predicated region
        $region29: #{tpu_custom_call.1} parent=27 // pred_check
          %p189 = pneg %p44
        $region30: #{tpu_custom_call.1} parent=27 // pred_check_branch
          %191 = sbr.rel (%p189) target = $region32
        $region31: #{tpu_custom_call.1} parent=27 // pred_region
          %p192 = scmp.lt.s32.totalorder %s24, 1
          %s193 = scalar_select %p192, %s24, 1
          %s194 = smul.addr %s193, 2
          %s195 = smul.addr %s194, 8
          %s196 = scalar_lea.vmem %s1, %s195
        $region32: #{tpu_custom_call.1} parent=27 // pred_fallthru
          _
      $region28: #{tpu_custom_call.1} parent=5 // pred_fallthru
        _
      %p197 = scmp.le.s32.totalorder 1, %s24
      %p198 = scmp.lt.s32.totalorder %s24, 3
      %p199 = pnand %p197, %p198
      %p200 = pneg %p199
      // Predicated region
      $region33: #{tpu_custom_call.1} parent=5 // pred_check
        _
      $region34: #{tpu_custom_call.1} parent=5 // pred_check_branch
        %202 = sbr.rel (%p199) target = $region36
      $region35: #{tpu_custom_call.1} parent=5 // pred_region
        %s203 = ssub.s32 %s24, 1
        // Predicated region
        $region37: #{tpu_custom_call.1} parent=35 // pred_check
          %p204 = pneg %p71
        $region38: #{tpu_custom_call.1} parent=35 // pred_check_branch
          %206 = sbr.rel (%p204) target = $region40
        $region39: #{tpu_custom_call.1} parent=35 // pred_region
          %208 = dma.done [#allocation6], 18688
        $region40: #{tpu_custom_call.1} parent=35 // pred_fallthru
          _
        // Predicated region
        $region41: #{tpu_custom_call.1} parent=35 // pred_check
          %p209 = pneg %p92
        $region42: #{tpu_custom_call.1} parent=35 // pred_check_branch
          %211 = sbr.rel (%p209) target = $region44
        $region43: #{tpu_custom_call.1} parent=35 // pred_region
          %213 = dma.done [#allocation9], 1536
        $region44: #{tpu_custom_call.1} parent=35 // pred_fallthru
          _
        %p214 = scmp.lt.s32.totalorder %s29, 1
        %s215 = scalar_select %p214, %s29, 1
        %s216 = smul.addr %s215, 2
        %s217 = smul.addr %s216, 8
        %s218 = scalar_lea.vmem %s1, %s217
        %p219 = pneg %p50
        %p220 = pneg %p47
        %p221 = pneg %p71
        %p222 = pneg %p68
        %p223 = pneg %p92
        %p224 = pneg %p89
        %p225 = pneg %p113
        %p226 = pneg %p110
        %p227 = pneg %p139
        %p228 = pneg %p136
        %s229 = sand.u32 %s126, 1
        %s230 = scalar_lea.sflag [#allocation7], %s229
        %s231 = sand.u32 %s126, 1
        %s232 = smul.addr %s231, 8
        %s233 = scalar_lea.vmem [#allocation10], %s232
        %p234 = scmp.lt.s32.totalorder %s29, 1
        %s235 = scalar_select %p234, %s29, 1
        %s236 = smul.addr %s235, 2
        %s237 = smul.addr %s236, 8
        %s238 = scalar_lea.vmem %s1, %s237
        %v240 = vld [vmem:[#allocation8] sm:$0xff]
        %v241 = vld [vmem:[#allocation8 + $0x8] sm:$0xff]
        %v242 = vld [vmem:[%s238] sm:$0xff]
        %v243 = vld [vmem:[%s238 + $0x8] sm:$0xff]
        %v244 = vld [vmem:[#allocation5] sm:$0xf]
        %v245 = vld [vmem:[#allocation5 + $0x124] sm:$0xf]
        %v246 = vld [vmem:[#allocation5 + $0x248] sm:$0xf]
        %v247 = vld [vmem:[#allocation5 + $0x36c] sm:$0xf]
        %v248 = vpack.c.bf16 %v243, %v242
        %v249 = vld [vmem:[#allocation8 + $0x4b] sm:$0x1]
        %v250 = vperm.slane %v249, 0
        %v255 = vunpack.c.l.b16 %v244
        %v256 = vunpack.c.l.b16 %v245
        %v257 = vunpack.c.l.b16 %v246
        %v258 = vunpack.c.l.b16 %v247
        %v259 = vpack.c.b16 %v256, %v255
        %v260 = vpack.c.b16 %v258, %v257
        %vm261 = vcmask 64512
        %v263 = vsel %vm261, %v248, 0
        %v266 = vsel %vm261, %v259, 0
        %v269 = vsel %vm261, %v260, 0
        %271 = vmatpush.bf16.xpose.msra.mxu0 0
        %272 = vmatpush.bf16.xpose.msra.mxu0 0
        %273 = vmatpush.bf16.xpose.msra.mxu0 0
        %274 = vmatpush.bf16.xpose.msra.mxu0 0
        %275 = vmatpush.bf16.xpose.msra.mxu0 0
        %276 = vmatpush.bf16.xpose.msra.mxu0 0
        %277 = vmatpush.bf16.xpose.msra.mxu0 %v269
        %278 = vmatpush.bf16.xpose.msra.mxu0 %v266
        %279 = vmatmul.bf16.gmra.mxu0 %v263
        %v280 = vpop.f32.mrf.mxu0
        %v281 = vadd.f32 %v250, %v280
        %v282 = vpop.f32.mrf.mxu0
        %v283 = vadd.f32 %v250, %v282
        %284 = vdwg.mxu0
        %v285 = vmul.f32 %v281, 5.656854
        %v286 = vmul.f32 %v283, 5.656854
        %v287 = vadd.f32 %v285, %v240
        %v288 = vadd.f32 %v286, %v241
        %v289 = vld [vmem:[#allocation5 + $0x4] sm:$0xf]
        %v290 = vld [vmem:[#allocation5 + $0x128] sm:$0xf]
        %v291 = vld [vmem:[#allocation5 + $0x24c] sm:$0xf]
        %v292 = vld [vmem:[#allocation5 + $0x370] sm:$0xf]
        %v293 = vpack.c.bf16 %v288, %v287
        %v294 = vld [vmem:[#allocation8 + $0x48] sm:$0x1]
        %v295 = vperm.slane %v294, 0
        %v300 = vunpack.c.l.b16 %v289
        %v301 = vunpack.c.l.b16 %v290
        %v302 = vunpack.c.l.b16 %v291
        %v303 = vunpack.c.l.b16 %v292
        %v304 = vpack.c.b16 %v301, %v300
        %v305 = vpack.c.b16 %v303, %v302
        %vm308 = vcmask 261120
        %v310 = vsel %vm308, %v293, 0
        %312 = vmatpush.bf16.msra.mxu0 0
        %313 = vmatpush.bf16.msra.mxu0 0
        %314 = vmatpush.bf16.msra.mxu0 0
        %315 = vmatpush.bf16.msra.mxu0 0
        %316 = vmatpush.bf16.msra.mxu0 0
        %317 = vmatpush.bf16.msra.mxu0 0
        %318 = vmatpush.bf16.msra.mxu0 %v305
        %319 = vmatpush.bf16.msra.mxu0 %v304
        %320 = vmatmul.bf16.gmra.mxu0 %v310
        %v321 = vpop.f32.mrf.mxu0
        %v322 = vadd.f32 %v295, %v321
        %v323 = vpop.f32.mrf.mxu0
        %v324 = vadd.f32 %v295, %v323
        %325 = vdwg.mxu0
        %v326 = vpack.c.bf16 %v324, %v322
        %328 = vrot.lane.b32.xlu0 %v326, 96
        %v329 = vpop.permute.xlu0 %328
        %v331 = vsel %vm308, %v326, 0
        %v334 = vsel %vm308, %v329, 0
        %336 = vmatpush.bf16.xpose.msra.mxu0 0
        %337 = vmatpush.bf16.xpose.msra.mxu0 0
        %338 = vmatpush.bf16.xpose.msra.mxu0 0
        %339 = vmatpush.bf16.xpose.msra.mxu0 0
        %340 = vmatpush.bf16.xpose.msra.mxu0 0
        %341 = vmatpush.bf16.xpose.msra.mxu0 0
        %342 = vmatpush.bf16.xpose.msra.mxu0 0
        %343 = vmatpush.bf16.xpose.msra.mxu0 %v334
        %344 = vmatmul.bf16.gmra.mxu0 %v331
        %v345 = vpop.f32.mrf.mxu0
        %v346 = vadd.f32 0.0, %v345
        %v347 = vpop.f32.mrf.mxu0
        %v348 = vadd.f32 0.0, %v347
        %349 = vdwg.mxu0
        %v350 = vmul.f32 %v346, 0.17677669
        %v351 = vmul.f32 %v348, 0.17677669
        %vm352 = vcmask 130048
        %v353 = vsel %vm352, %v350, -inf
        %354 = vmax.xlane.f32.xlu0 %v353
        %v355 = vpop.xlane.xlu0 %354
        %v356 = vsel %vm352, %v351, -inf
        %357 = vmax.xlane.f32.xlu0 %v356
        %v358 = vpop.xlane.xlu0 %357
        %v359 = vsub.f32 %v350, %v355
        %v360 = vsub.f32 %v351, %v358
        %v361 = vmul.f32 %v359, 1.442695
        %v362 = vpow.pop %v361
        %v363 = vmul.f32 %v360, 1.442695
        %v364 = vpow.pop %v363
        %v365 = vsel %vm352, %v362, 0.0
        %366 = vadd.xlane.f32.xlu0 %v365
        %v367 = vpop.xlane.xlu0 %366
        %v368 = vsel %vm352, %v364, 0.0
        %369 = vadd.xlane.f32.xlu0 %v368
        %v370 = vpop.xlane.xlu0 %369
        %v371 = vrcp.pop %v367
        %v372 = vrcp.pop %v370
        %v373 = vmul.f32 %v362, %v371
        %v374 = vmul.f32 %v364, %v372
        %v375 = vpack.c.bf16 %v374, %v373
        %376 = vrot.lane.b32.xlu0 %v326, 64
        %v377 = vpop.permute.xlu0 %376
        %v380 = vsel %vm352, %v375, 0
        %382 = vmatpush.bf16.msra.mxu0 0
        %383 = vmatpush.bf16.msra.mxu0 0
        %384 = vmatpush.bf16.msra.mxu0 0
        %385 = vmatpush.bf16.msra.mxu0 0
        %386 = vmatpush.bf16.msra.mxu0 0
        %387 = vmatpush.bf16.msra.mxu0 0
        %388 = vmatpush.bf16.msra.mxu0 0
        %389 = vmatpush.bf16.msra.mxu0 %v377
        %390 = vmatmul.bf16.gmra.mxu0 %v380
        %v391 = vpop.f32.mrf.mxu0
        %v392 = vadd.f32 0.0, %v391
        %v393 = vpop.f32.mrf.mxu0
        %v394 = vadd.f32 0.0, %v393
        %395 = vdwg.mxu0
        %v396 = vld [vmem:[#allocation5 + $0x14] sm:$0xf]
        %v397 = vld [vmem:[#allocation5 + $0x138] sm:$0xf]
        %v398 = vld [vmem:[#allocation5 + $0x25c] sm:$0xf]
        %v399 = vld [vmem:[#allocation5 + $0x380] sm:$0xf]
        %v400 = vpack.c.bf16 %v394, %v392
        %v405 = vunpack.c.l.b16 %v396
        %v406 = vunpack.c.l.b16 %v397
        %v407 = vunpack.c.l.b16 %v398
        %v408 = vunpack.c.l.b16 %v399
        %v409 = vpack.c.b16 %v406, %v405
        %v410 = vpack.c.b16 %v408, %v407
        %v414 = vsel %vm308, %v400, 0
        %416 = vmatpush.bf16.msra.mxu0 0
        %417 = vmatpush.bf16.msra.mxu0 0
        %418 = vmatpush.bf16.msra.mxu0 0
        %419 = vmatpush.bf16.msra.mxu0 0
        %420 = vmatpush.bf16.msra.mxu0 0
        %421 = vmatpush.bf16.msra.mxu0 0
        %422 = vmatpush.bf16.msra.mxu0 %v410
        %423 = vmatpush.bf16.msra.mxu0 %v409
        %424 = vmatmul.bf16.gmra.mxu0 %v414
        %v425 = vpop.f32.mrf.mxu0
        %v426 = vadd.f32 0.0, %v425
        %v427 = vpop.f32.mrf.mxu0
        %v428 = vadd.f32 0.0, %v427
        %429 = vdwg.mxu0
        %v430 = vadd.f32 %v287, %v426
        %v431 = vadd.f32 %v288, %v428
        %v432 = vld [vmem:[#allocation8 + $0x4c] sm:$0x1]
        %v433 = vperm.slane %v432, 0
        %v434 = vadd.f32 %v430, %v433
        %v435 = vadd.f32 %v431, %v433
        %v436 = vsel %vm308, %v434, 0.0
        %437 = vadd.xlane.f32.xlu0 %v436
        %v438 = vpop.xlane.xlu0 %437
        %v439 = vsel %vm308, %v435, 0.0
        %440 = vadd.xlane.f32.xlu0 %v439
        %v441 = vpop.xlane.xlu0 %440
        %v442 = vrcp.pop 32.0
        %v443 = vmul.f32 32.0, %v442
        %v444 = vsub.f32 1.0, %v443
        %v445 = vmul.f32 %v442, %v444
        %v446 = vadd.f32 %v442, %v445
        %vm447 = vweird.f32 %v442
        %v448 = vsel %vm447, %v442, %v446
        %v449 = vmul.f32 %v438, %v448
        %v450 = vmul.f32 %v441, %v448
        %v451 = vsub.f32 %v434, %v449
        %v452 = vsub.f32 %v435, %v450
        %v453 = vmul.f32 %v451, %v451
        %v454 = vmul.f32 %v452, %v452
        %v455 = vsel %vm308, %v453, 0.0
        %456 = vadd.xlane.f32.xlu0 %v455
        %v457 = vpop.xlane.xlu0 %456
        %v458 = vsel %vm308, %v454, 0.0
        %459 = vadd.xlane.f32.xlu0 %v458
        %v460 = vpop.xlane.xlu0 %459
        %v461 = vmul.f32 %v457, %v448
        %v462 = vmul.f32 %v460, %v448
        %v463 = vadd.f32 %v461, 1e-05
        %v464 = vadd.f32 %v462, 1e-05
        %v465 = vrsqrt.pop %v463
        %v466 = vmul.f32 %v465, %v463
        %v467 = vmul.f32 %v466, %v465
        %v468 = vmul.f32 0.5, %v467
        %v469 = vsub.f32 1.5, %v468
        %v470 = vmul.f32 %v465, %v469
        %vm471 = vweird.f32 %v463
        %vm472 = vweird.f32 %v465
        %vm473 = vmor %vm471, %vm472
        %v474 = vsel %vm473, %v465, %v470
        %v475 = vrsqrt.pop %v464
        %v476 = vmul.f32 %v475, %v464
        %v477 = vmul.f32 %v476, %v475
        %v478 = vmul.f32 0.5, %v477
        %v479 = vsub.f32 1.5, %v478
        %v480 = vmul.f32 %v475, %v479
        %vm481 = vweird.f32 %v464
        %vm482 = vweird.f32 %v475
        %vm483 = vmor %vm481, %vm482
        %v484 = vsel %vm483, %v475, %v480
        %v485 = vmul.f32 %v451, %v474
        %v486 = vmul.f32 %v452, %v484
        %v487 = vld [vmem:[#allocation8 + $0x4f] sm:$0x1]
        %v488 = vperm.slane %v487, 0
        %v489 = vmul.f32 %v485, %v488
        %v490 = vmul.f32 %v486, %v488
        %v491 = vld [vmem:[#allocation8 + $0x50] sm:$0x1]
        %v492 = vperm.slane %v491, 0
        %v493 = vadd.f32 %v489, %v492
        %v494 = vadd.f32 %v490, %v492
        %v495 = vpack.c.bf16 %v494, %v493
        %v496 = vld [vmem:[#allocation5 + $0x24] sm:$0xff]
        %v497 = vld [vmem:[#allocation5 + $0x2c] sm:$0xff]
        %v498 = vld [vmem:[#allocation5 + $0x148] sm:$0xff]
        %v499 = vld [vmem:[#allocation5 + $0x150] sm:$0xff]
        %v500 = vld [vmem:[#allocation5 + $0x26c] sm:$0xff]
        %v501 = vld [vmem:[#allocation5 + $0x274] sm:$0xff]
        %v502 = vld [vmem:[#allocation5 + $0x390] sm:$0xff]
        %v503 = vld [vmem:[#allocation5 + $0x398] sm:$0xff]
        %v512 = vunpack.c.l.b16 %v496
        %v513 = vunpack.c.h.b16 %v496
        %v514 = vunpack.c.l.b16 %v497
        %v515 = vunpack.c.h.b16 %v497
        %v516 = vunpack.c.l.b16 %v498
        %v517 = vunpack.c.h.b16 %v498
        %v518 = vunpack.c.l.b16 %v499
        %v519 = vunpack.c.h.b16 %v499
        %v520 = vunpack.c.l.b16 %v500
        %v521 = vunpack.c.h.b16 %v500
        %v522 = vunpack.c.l.b16 %v501
        %v523 = vunpack.c.h.b16 %v501
        %v524 = vunpack.c.l.b16 %v502
        %v525 = vunpack.c.h.b16 %v502
        %v526 = vunpack.c.l.b16 %v503
        %v527 = vunpack.c.h.b16 %v503
        %v528 = vpack.c.b16 %v516, %v512
        %v529 = vpack.c.b16 %v517, %v513
        %v530 = vpack.c.b16 %v518, %v514
        %v531 = vpack.c.b16 %v519, %v515
        %v532 = vpack.c.b16 %v524, %v520
        %v533 = vpack.c.b16 %v525, %v521
        %v534 = vpack.c.b16 %v526, %v522
        %v535 = vpack.c.b16 %v527, %v523
        %v545 = vsel %vm308, %v495, 0
        %547 = vmatpush.bf16.msra.mxu0 0
        %548 = vmatpush.bf16.msra.mxu0 0
        %549 = vmatpush.bf16.msra.mxu0 0
        %550 = vmatpush.bf16.msra.mxu0 0
        %551 = vmatpush.bf16.msra.mxu0 0
        %552 = vmatpush.bf16.msra.mxu0 0
        %553 = vmatpush.bf16.msra.mxu0 %v532
        %554 = vmatpush.bf16.msra.mxu0 %v528
        %555 = vmatmul.bf16.gmra.mxu0 %v545
        %v556 = vpop.f32.mrf.mxu0
        %v557 = vadd.f32 0.0, %v556
        %v558 = vpop.f32.mrf.mxu0
        %v559 = vadd.f32 0.0, %v558
        %560 = vdwg.mxu0
        %561 = vmatpush.bf16.msra.mxu0 0
        %562 = vmatpush.bf16.msra.mxu0 0
        %563 = vmatpush.bf16.msra.mxu0 0
        %564 = vmatpush.bf16.msra.mxu0 0
        %565 = vmatpush.bf16.msra.mxu0 0
        %566 = vmatpush.bf16.msra.mxu0 0
        %567 = vmatpush.bf16.msra.mxu0 %v533
        %568 = vmatpush.bf16.msra.mxu0 %v529
        %569 = vmatmul.bf16.gmra.mxu0 %v545
        %v570 = vpop.f32.mrf.mxu0
        %v571 = vadd.f32 0.0, %v570
        %v572 = vpop.f32.mrf.mxu0
        %v573 = vadd.f32 0.0, %v572
        %574 = vdwg.mxu0
        %575 = vmatpush.bf16.msra.mxu0 0
        %576 = vmatpush.bf16.msra.mxu0 0
        %577 = vmatpush.bf16.msra.mxu0 0
        %578 = vmatpush.bf16.msra.mxu0 0
        %579 = vmatpush.bf16.msra.mxu0 0
        %580 = vmatpush.bf16.msra.mxu0 0
        %581 = vmatpush.bf16.msra.mxu0 %v534
        %582 = vmatpush.bf16.msra.mxu0 %v530
        %583 = vmatmul.bf16.gmra.mxu0 %v545
        %v584 = vpop.f32.mrf.mxu0
        %v585 = vadd.f32 0.0, %v584
        %v586 = vpop.f32.mrf.mxu0
        %v587 = vadd.f32 0.0, %v586
        %588 = vdwg.mxu0
        %589 = vmatpush.bf16.msra.mxu0 0
        %590 = vmatpush.bf16.msra.mxu0 0
        %591 = vmatpush.bf16.msra.mxu0 0
        %592 = vmatpush.bf16.msra.mxu0 0
        %593 = vmatpush.bf16.msra.mxu0 0
        %594 = vmatpush.bf16.msra.mxu0 0
        %595 = vmatpush.bf16.msra.mxu0 %v535
        %596 = vmatpush.bf16.msra.mxu0 %v531
        %597 = vmatmul.bf16.gmra.mxu0 %v545
        %v598 = vpop.f32.mrf.mxu0
        %v599 = vadd.f32 0.0, %v598
        %v600 = vpop.f32.mrf.mxu0
        %v601 = vadd.f32 0.0, %v600
        %602 = vdwg.mxu0
        %v603 = vpack.c.bf16 %v571, %v557
        %v604 = vpack.c.bf16 %v599, %v585
        %v605 = vpack.c.bf16 %v573, %v559
        %v606 = vpack.c.bf16 %v601, %v587
        %v607 = vld [vmem:[%s4] ss:$2 sm:$0xf]
        %v609 = vperm.slane %v607, 0
        %v610 = vperm.slane %v607, 1
        %v611 = vperm.slane %v607, 2
        %v612 = vperm.slane %v607, 3
        %v617 = vpack.c.bf16 %v610, %v609
        %v618 = vpack.c.bf16 %v612, %v611
        %v621 = vunpack.c.l.b16 %v617
        %v622 = vunpack.c.h.b16 %v617
        %v623 = vunpack.c.l.b16 %v618
        %v624 = vunpack.c.h.b16 %v618
        %v625 = vpack.c.b16 %v621, %v621
        %v626 = vpack.c.b16 %v622, %v622
        %v627 = vpack.c.b16 %v623, %v623
        %v628 = vpack.c.b16 %v624, %v624
        %v630 = vpack.i.b16 %v625, %v625
        %v632 = vperm.slane %v630, 0
        %v634 = vpack.i.b16 %v626, %v626
        %v636 = vperm.slane %v634, 0
        %v638 = vpack.i.b16 %v627, %v627
        %v640 = vperm.slane %v638, 0
        %v642 = vpack.i.b16 %v628, %v628
        %v644 = vperm.slane %v642, 0
        %v645 = vunpack.c.l.bf16 %v603
        %v646 = vunpack.c.h.bf16 %v603
        %v647 = vunpack.c.l.bf16 %v604
        %v648 = vunpack.c.h.bf16 %v604
        %v649 = vunpack.c.l.bf16 %v605
        %v650 = vunpack.c.h.bf16 %v605
        %v651 = vunpack.c.l.bf16 %v606
        %v652 = vunpack.c.h.bf16 %v606
        %v653 = vunpack.c.l.bf16 %v632
        %v654 = vunpack.c.l.bf16 %v636
        %v655 = vunpack.c.l.bf16 %v640
        %v656 = vunpack.c.l.bf16 %v644
        %v657 = vadd.f32 %v645, %v653
        %v658 = vadd.f32 %v646, %v654
        %v659 = vadd.f32 %v647, %v655
        %v660 = vadd.f32 %v648, %v656
        %v661 = vadd.f32 %v649, %v653
        %v662 = vadd.f32 %v650, %v654
        %v663 = vadd.f32 %v651, %v655
        %v664 = vadd.f32 %v652, %v656
        %v665 = vpack.c.bf16 %v658, %v657
        %v666 = vpack.c.bf16 %v660, %v659
        %v667 = vpack.c.bf16 %v662, %v661
        %v668 = vpack.c.bf16 %v664, %v663
        %v669 = vunpack.c.l.bf16 %v665
        %v670 = vunpack.c.h.bf16 %v665
        %v671 = vunpack.c.l.bf16 %v666
        %v672 = vunpack.c.h.bf16 %v666
        %v673 = vunpack.c.l.bf16 %v667
        %v674 = vunpack.c.h.bf16 %v667
        %v675 = vunpack.c.l.bf16 %v668
        %v676 = vunpack.c.h.bf16 %v668
        %v677 = vmax.f32 %v669, 0.0
        %v678 = vmax.f32 %v670, 0.0
        %v679 = vmax.f32 %v671, 0.0
        %v680 = vmax.f32 %v672, 0.0
        %v681 = vmax.f32 %v673, 0.0
        %v682 = vmax.f32 %v674, 0.0
        %v683 = vmax.f32 %v675, 0.0
        %v684 = vmax.f32 %v676, 0.0
        %v685 = vpack.c.bf16 %v681, %v677
        %v686 = vpack.c.bf16 %v682, %v678
        %v687 = vpack.c.bf16 %v683, %v679
        %v688 = vpack.c.bf16 %v684, %v680
        %v689 = vld [vmem:[#allocation5 + $0x64] sm:$0xff]
        %v690 = vld [vmem:[#allocation5 + $0x6c] sm:$0xff]
        %v691 = vld [vmem:[#allocation5 + $0x188] sm:$0xff]
        %v692 = vld [vmem:[#allocation5 + $0x190] sm:$0xff]
        %v693 = vld [vmem:[#allocation5 + $0x2ac] sm:$0xff]
        %v694 = vld [vmem:[#allocation5 + $0x2b4] sm:$0xff]
        %v695 = vld [vmem:[#allocation5 + $0x3d0] sm:$0xff]
        %v696 = vld [vmem:[#allocation5 + $0x3d8] sm:$0xff]
        %v697 = vld [vmem:[#allocation5 + $0x34] sm:$0xff]
        %v698 = vld [vmem:[#allocation5 + $0x3c] sm:$0xff]
        %v699 = vld [vmem:[#allocation5 + $0x158] sm:$0xff]
        %v700 = vld [vmem:[#allocation5 + $0x160] sm:$0xff]
        %v701 = vld [vmem:[#allocation5 + $0x27c] sm:$0xff]
        %v702 = vld [vmem:[#allocation5 + $0x284] sm:$0xff]
        %v703 = vld [vmem:[#allocation5 + $0x3a0] sm:$0xff]
        %v704 = vld [vmem:[#allocation5 + $0x3a8] sm:$0xff]
        %v713 = vunpack.c.l.b16 %v697
        %v714 = vunpack.c.h.b16 %v697
        %v715 = vunpack.c.l.b16 %v698
        %v716 = vunpack.c.h.b16 %v698
        %v717 = vunpack.c.l.b16 %v699
        %v718 = vunpack.c.h.b16 %v699
        %v719 = vunpack.c.l.b16 %v700
        %v720 = vunpack.c.h.b16 %v700
        %v721 = vunpack.c.l.b16 %v701
        %v722 = vunpack.c.h.b16 %v701
        %v723 = vunpack.c.l.b16 %v702
        %v724 = vunpack.c.h.b16 %v702
        %v725 = vunpack.c.l.b16 %v703
        %v726 = vunpack.c.h.b16 %v703
        %v727 = vunpack.c.l.b16 %v704
        %v728 = vunpack.c.h.b16 %v704
        %v729 = vpack.c.b16 %v717, %v713
        %v730 = vpack.c.b16 %v718, %v714
        %v731 = vpack.c.b16 %v719, %v715
        %v732 = vpack.c.b16 %v720, %v716
        %v733 = vpack.c.b16 %v725, %v721
        %v734 = vpack.c.b16 %v726, %v722
        %v735 = vpack.c.b16 %v727, %v723
        %v736 = vpack.c.b16 %v728, %v724
        %745 = vmatpush.bf16.msra.mxu0 0
        %746 = vmatpush.bf16.msra.mxu0 0
        %747 = vmatpush.bf16.msra.mxu0 0
        %748 = vmatpush.bf16.msra.mxu0 0
        %749 = vmatpush.bf16.msra.mxu0 0
        %750 = vmatpush.bf16.msra.mxu0 0
        %751 = vmatpush.bf16.msra.mxu0 %v733
        %752 = vmatpush.bf16.msra.mxu0 %v729
        %753 = vmatmul.bf16.gmra.mxu0 %v545
        %v754 = vpop.f32.mrf.mxu0
        %v755 = vadd.f32 0.0, %v754
        %v756 = vpop.f32.mrf.mxu0
        %v757 = vadd.f32 0.0, %v756
        %758 = vdwg.mxu0
        %759 = vmatpush.bf16.msra.mxu0 0
        %760 = vmatpush.bf16.msra.mxu0 0
        %761 = vmatpush.bf16.msra.mxu0 0
        %762 = vmatpush.bf16.msra.mxu0 0
        %763 = vmatpush.bf16.msra.mxu0 0
        %764 = vmatpush.bf16.msra.mxu0 0
        %765 = vmatpush.bf16.msra.mxu0 %v734
        %766 = vmatpush.bf16.msra.mxu0 %v730
        %767 = vmatmul.bf16.gmra.mxu0 %v545
        %v768 = vpop.f32.mrf.mxu0
        %v769 = vadd.f32 0.0, %v768
        %v770 = vpop.f32.mrf.mxu0
        %v771 = vadd.f32 0.0, %v770
        %772 = vdwg.mxu0
        %773 = vmatpush.bf16.msra.mxu0 0
        %774 = vmatpush.bf16.msra.mxu0 0
        %775 = vmatpush.bf16.msra.mxu0 0
        %776 = vmatpush.bf16.msra.mxu0 0
        %777 = vmatpush.bf16.msra.mxu0 0
        %778 = vmatpush.bf16.msra.mxu0 0
        %779 = vmatpush.bf16.msra.mxu0 %v735
        %780 = vmatpush.bf16.msra.mxu0 %v731
        %781 = vmatmul.bf16.gmra.mxu0 %v545
        %v782 = vpop.f32.mrf.mxu0
        %v783 = vadd.f32 0.0, %v782
        %v784 = vpop.f32.mrf.mxu0
        %v785 = vadd.f32 0.0, %v784
        %786 = vdwg.mxu0
        %787 = vmatpush.bf16.msra.mxu0 0
        %788 = vmatpush.bf16.msra.mxu0 0
        %789 = vmatpush.bf16.msra.mxu0 0
        %790 = vmatpush.bf16.msra.mxu0 0
        %791 = vmatpush.bf16.msra.mxu0 0
        %792 = vmatpush.bf16.msra.mxu0 0
        %793 = vmatpush.bf16.msra.mxu0 %v736
        %794 = vmatpush.bf16.msra.mxu0 %v732
        %795 = vmatmul.bf16.gmra.mxu0 %v545
        %v796 = vpop.f32.mrf.mxu0
        %v797 = vadd.f32 0.0, %v796
        %v798 = vpop.f32.mrf.mxu0
        %v799 = vadd.f32 0.0, %v798
        %800 = vdwg.mxu0
        %v801 = vpack.c.bf16 %v769, %v755
        %v802 = vpack.c.bf16 %v797, %v783
        %v803 = vpack.c.bf16 %v771, %v757
        %v804 = vpack.c.bf16 %v799, %v785
        %s805 = scalar_lea.vmem %s4, 8
        %v806 = vld [vmem:[%s805] ss:$2 sm:$0xf]
        %v808 = vperm.slane %v806, 0
        %v809 = vperm.slane %v806, 1
        %v810 = vperm.slane %v806, 2
        %v811 = vperm.slane %v806, 3
        %v816 = vpack.c.bf16 %v809, %v808
        %v817 = vpack.c.bf16 %v811, %v810
        %v820 = vunpack.c.l.b16 %v816
        %v821 = vunpack.c.h.b16 %v816
        %v822 = vunpack.c.l.b16 %v817
        %v823 = vunpack.c.h.b16 %v817
        %v824 = vpack.c.b16 %v820, %v820
        %v825 = vpack.c.b16 %v821, %v821
        %v826 = vpack.c.b16 %v822, %v822
        %v827 = vpack.c.b16 %v823, %v823
        %v829 = vpack.i.b16 %v824, %v824
        %v831 = vperm.slane %v829, 0
        %v833 = vpack.i.b16 %v825, %v825
        %v835 = vperm.slane %v833, 0
        %v837 = vpack.i.b16 %v826, %v826
        %v839 = vperm.slane %v837, 0
        %v841 = vpack.i.b16 %v827, %v827
        %v843 = vperm.slane %v841, 0
        %v844 = vunpack.c.l.bf16 %v801
        %v845 = vunpack.c.h.bf16 %v801
        %v846 = vunpack.c.l.bf16 %v802
        %v847 = vunpack.c.h.bf16 %v802
        %v848 = vunpack.c.l.bf16 %v803
        %v849 = vunpack.c.h.bf16 %v803
        %v850 = vunpack.c.l.bf16 %v804
        %v851 = vunpack.c.h.bf16 %v804
        %v852 = vunpack.c.l.bf16 %v831
        %v853 = vunpack.c.l.bf16 %v835
        %v854 = vunpack.c.l.bf16 %v839
        %v855 = vunpack.c.l.bf16 %v843
        %v856 = vadd.f32 %v844, %v852
        %v857 = vadd.f32 %v845, %v853
        %v858 = vadd.f32 %v846, %v854
        %v859 = vadd.f32 %v847, %v855
        %v860 = vadd.f32 %v848, %v852
        %v861 = vadd.f32 %v849, %v853
        %v862 = vadd.f32 %v850, %v854
        %v863 = vadd.f32 %v851, %v855
        %v864 = vpack.c.bf16 %v857, %v856
        %v865 = vpack.c.bf16 %v859, %v858
        %v866 = vpack.c.bf16 %v861, %v860
        %v867 = vpack.c.bf16 %v863, %v862
        %v868 = vunpack.c.l.bf16 %v864
        %v869 = vunpack.c.h.bf16 %v864
        %v870 = vunpack.c.l.bf16 %v865
        %v871 = vunpack.c.h.bf16 %v865
        %v872 = vunpack.c.l.bf16 %v866
        %v873 = vunpack.c.h.bf16 %v866
        %v874 = vunpack.c.l.bf16 %v867
        %v875 = vunpack.c.h.bf16 %v867
        %v876 = vmax.f32 %v868, 0.0
        %v877 = vmax.f32 %v869, 0.0
        %v878 = vmax.f32 %v870, 0.0
        %v879 = vmax.f32 %v871, 0.0
        %v880 = vmax.f32 %v872, 0.0
        %v881 = vmax.f32 %v873, 0.0
        %v882 = vmax.f32 %v874, 0.0
        %v883 = vmax.f32 %v875, 0.0
        %v884 = vpack.c.bf16 %v880, %v876
        %v885 = vpack.c.bf16 %v881, %v877
        %v886 = vpack.c.bf16 %v882, %v878
        %v887 = vpack.c.bf16 %v883, %v879
        %v888 = vld [vmem:[#allocation5 + $0x74] sm:$0xff]
        %v889 = vld [vmem:[#allocation5 + $0x7c] sm:$0xff]
        %v890 = vld [vmem:[#allocation5 + $0x198] sm:$0xff]
        %v891 = vld [vmem:[#allocation5 + $0x1a0] sm:$0xff]
        %v892 = vld [vmem:[#allocation5 + $0x2bc] sm:$0xff]
        %v893 = vld [vmem:[#allocation5 + $0x2c4] sm:$0xff]
        %v894 = vld [vmem:[#allocation5 + $0x3e0] sm:$0xff]
        %v895 = vld [vmem:[#allocation5 + $0x3e8] sm:$0xff]
        %v904 = vunpack.c.l.b16 %v888
        %v905 = vunpack.c.h.b16 %v888
        %v906 = vunpack.c.l.b16 %v889
        %v907 = vunpack.c.h.b16 %v889
        %v908 = vunpack.c.l.b16 %v890
        %v909 = vunpack.c.h.b16 %v890
        %v910 = vunpack.c.l.b16 %v891
        %v911 = vunpack.c.h.b16 %v891
        %v912 = vunpack.c.l.b16 %v892
        %v913 = vunpack.c.h.b16 %v892
        %v914 = vunpack.c.l.b16 %v893
        %v915 = vunpack.c.h.b16 %v893
        %v916 = vunpack.c.l.b16 %v894
        %v917 = vunpack.c.h.b16 %v894
        %v918 = vunpack.c.l.b16 %v895
        %v919 = vunpack.c.h.b16 %v895
        %v920 = vpack.c.b16 %v908, %v904
        %v921 = vpack.c.b16 %v909, %v905
        %v922 = vpack.c.b16 %v910, %v906
        %v923 = vpack.c.b16 %v911, %v907
        %v924 = vpack.c.b16 %v916, %v912
        %v925 = vpack.c.b16 %v917, %v913
        %v926 = vpack.c.b16 %v918, %v914
        %v927 = vpack.c.b16 %v919, %v915
        %936 = vmatpush.bf16.xpose.msra.mxu0 0
        %937 = vmatpush.bf16.xpose.msra.mxu0 0
        %938 = vmatpush.bf16.xpose.msra.mxu0 0
        %939 = vmatpush.bf16.xpose.msra.mxu0 0
        %940 = vmatpush.bf16.xpose.msra.mxu0 0
        %941 = vmatpush.bf16.xpose.msra.mxu0 0
        %942 = vmatpush.bf16.xpose.msra.mxu0 %v924
        %943 = vmatpush.bf16.xpose.msra.mxu0 %v920
        %944 = vmatmul.bf16.gmra.mxu0 %v884
        %v945 = vpop.f32.mrf.mxu0
        %v946 = vadd.f32 0.0, %v945
        %v947 = vpop.f32.mrf.mxu0
        %v948 = vadd.f32 0.0, %v947
        %949 = vdwg.mxu0
        %950 = vmatpush.bf16.xpose.msra.mxu0 0
        %951 = vmatpush.bf16.xpose.msra.mxu0 0
        %952 = vmatpush.bf16.xpose.msra.mxu0 0
        %953 = vmatpush.bf16.xpose.msra.mxu0 0
        %954 = vmatpush.bf16.xpose.msra.mxu0 0
        %955 = vmatpush.bf16.xpose.msra.mxu0 0
        %956 = vmatpush.bf16.xpose.msra.mxu0 %v925
        %957 = vmatpush.bf16.xpose.msra.mxu0 %v921
        %958 = vmatmul.bf16.gmra.mxu0 %v885
        %v959 = vpop.f32.mrf.mxu0
        %v960 = vadd.f32 %v946, %v959
        %v961 = vpop.f32.mrf.mxu0
        %v962 = vadd.f32 %v948, %v961
        %963 = vdwg.mxu0
        %964 = vmatpush.bf16.xpose.msra.mxu0 0
        %965 = vmatpush.bf16.xpose.msra.mxu0 0
        %966 = vmatpush.bf16.xpose.msra.mxu0 0
        %967 = vmatpush.bf16.xpose.msra.mxu0 0
        %968 = vmatpush.bf16.xpose.msra.mxu0 0
        %969 = vmatpush.bf16.xpose.msra.mxu0 0
        %970 = vmatpush.bf16.xpose.msra.mxu0 %v926
        %971 = vmatpush.bf16.xpose.msra.mxu0 %v922
        %972 = vmatmul.bf16.gmra.mxu0 %v886
        %v973 = vpop.f32.mrf.mxu0
        %v974 = vadd.f32 %v960, %v973
        %v975 = vpop.f32.mrf.mxu0
        %v976 = vadd.f32 %v962, %v975
        %977 = vdwg.mxu0
        %978 = vmatpush.bf16.xpose.msra.mxu0 0
        %979 = vmatpush.bf16.xpose.msra.mxu0 0
        %980 = vmatpush.bf16.xpose.msra.mxu0 0
        %981 = vmatpush.bf16.xpose.msra.mxu0 0
        %982 = vmatpush.bf16.xpose.msra.mxu0 0
        %983 = vmatpush.bf16.xpose.msra.mxu0 0
        %984 = vmatpush.bf16.xpose.msra.mxu0 %v927
        %985 = vmatpush.bf16.xpose.msra.mxu0 %v923
        %986 = vmatmul.bf16.gmra.mxu0 %v887
        %v987 = vpop.f32.mrf.mxu0
        %v988 = vadd.f32 %v974, %v987
        %v989 = vpop.f32.mrf.mxu0
        %v990 = vadd.f32 %v976, %v989
        %991 = vdwg.mxu0
        %v1000 = vunpack.c.l.b16 %v689
        %v1001 = vunpack.c.h.b16 %v689
        %v1002 = vunpack.c.l.b16 %v690
        %v1003 = vunpack.c.h.b16 %v690
        %v1004 = vunpack.c.l.b16 %v691
        %v1005 = vunpack.c.h.b16 %v691
        %v1006 = vunpack.c.l.b16 %v692
        %v1007 = vunpack.c.h.b16 %v692
        %v1008 = vunpack.c.l.b16 %v693
        %v1009 = vunpack.c.h.b16 %v693
        %v1010 = vunpack.c.l.b16 %v694
        %v1011 = vunpack.c.h.b16 %v694
        %v1012 = vunpack.c.l.b16 %v695
        %v1013 = vunpack.c.h.b16 %v695
        %v1014 = vunpack.c.l.b16 %v696
        %v1015 = vunpack.c.h.b16 %v696
        %v1016 = vpack.c.b16 %v1004, %v1000
        %v1017 = vpack.c.b16 %v1005, %v1001
        %v1018 = vpack.c.b16 %v1006, %v1002
        %v1019 = vpack.c.b16 %v1007, %v1003
        %v1020 = vpack.c.b16 %v1012, %v1008
        %v1021 = vpack.c.b16 %v1013, %v1009
        %v1022 = vpack.c.b16 %v1014, %v1010
        %v1023 = vpack.c.b16 %v1015, %v1011
        %1032 = vmatpush.bf16.xpose.msra.mxu0 0
        %1033 = vmatpush.bf16.xpose.msra.mxu0 0
        %1034 = vmatpush.bf16.xpose.msra.mxu0 0
        %1035 = vmatpush.bf16.xpose.msra.mxu0 0
        %1036 = vmatpush.bf16.xpose.msra.mxu0 0
        %1037 = vmatpush.bf16.xpose.msra.mxu0 0
        %1038 = vmatpush.bf16.xpose.msra.mxu0 %v1020
        %1039 = vmatpush.bf16.xpose.msra.mxu0 %v1016
        %1040 = vmatmul.bf16.gmra.mxu0 %v685
        %v1041 = vpop.f32.mrf.mxu0
        %v1042 = vadd.f32 %v988, %v1041
        %v1043 = vpop.f32.mrf.mxu0
        %v1044 = vadd.f32 %v990, %v1043
        %1045 = vdwg.mxu0
        %1046 = vmatpush.bf16.xpose.msra.mxu0 0
        %1047 = vmatpush.bf16.xpose.msra.mxu0 0
        %1048 = vmatpush.bf16.xpose.msra.mxu0 0
        %1049 = vmatpush.bf16.xpose.msra.mxu0 0
        %1050 = vmatpush.bf16.xpose.msra.mxu0 0
        %1051 = vmatpush.bf16.xpose.msra.mxu0 0
        %1052 = vmatpush.bf16.xpose.msra.mxu0 %v1021
        %1053 = vmatpush.bf16.xpose.msra.mxu0 %v1017
        %1054 = vmatmul.bf16.gmra.mxu0 %v686
        %v1055 = vpop.f32.mrf.mxu0
        %v1056 = vadd.f32 %v1042, %v1055
        %v1057 = vpop.f32.mrf.mxu0
        %v1058 = vadd.f32 %v1044, %v1057
        %1059 = vdwg.mxu0
        %1060 = vmatpush.bf16.xpose.msra.mxu0 0
        %1061 = vmatpush.bf16.xpose.msra.mxu0 0
        %1062 = vmatpush.bf16.xpose.msra.mxu0 0
        %1063 = vmatpush.bf16.xpose.msra.mxu0 0
        %1064 = vmatpush.bf16.xpose.msra.mxu0 0
        %1065 = vmatpush.bf16.xpose.msra.mxu0 0
        %1066 = vmatpush.bf16.xpose.msra.mxu0 %v1022
        %1067 = vmatpush.bf16.xpose.msra.mxu0 %v1018
        %1068 = vmatmul.bf16.gmra.mxu0 %v687
        %v1069 = vpop.f32.mrf.mxu0
        %v1070 = vadd.f32 %v1056, %v1069
        %v1071 = vpop.f32.mrf.mxu0
        %v1072 = vadd.f32 %v1058, %v1071
        %1073 = vdwg.mxu0
        %1074 = vmatpush.bf16.xpose.msra.mxu0 0
        %1075 = vmatpush.bf16.xpose.msra.mxu0 0
        %1076 = vmatpush.bf16.xpose.msra.mxu0 0
        %1077 = vmatpush.bf16.xpose.msra.mxu0 0
        %1078 = vmatpush.bf16.xpose.msra.mxu0 0
        %1079 = vmatpush.bf16.xpose.msra.mxu0 0
        %1080 = vmatpush.bf16.xpose.msra.mxu0 %v1023
        %1081 = vmatpush.bf16.xpose.msra.mxu0 %v1019
        %1082 = vmatmul.bf16.gmra.mxu0 %v688
        %v1083 = vpop.f32.mrf.mxu0
        %v1084 = vadd.f32 %v1070, %v1083
        %v1085 = vpop.f32.mrf.mxu0
        %v1086 = vadd.f32 %v1072, %v1085
        %1087 = vdwg.mxu0
        %v1088 = vld [vmem:[#allocation5 + $0x44] sm:$0xff]
        %v1089 = vld [vmem:[#allocation5 + $0x4c] sm:$0xff]
        %v1090 = vld [vmem:[#allocation5 + $0x168] sm:$0xff]
        %v1091 = vld [vmem:[#allocation5 + $0x170] sm:$0xff]
        %v1092 = vld [vmem:[#allocation5 + $0x28c] sm:$0xff]
        %v1093 = vld [vmem:[#allocation5 + $0x294] sm:$0xff]
        %v1094 = vld [vmem:[#allocation5 + $0x3b0] sm:$0xff]
        %v1095 = vld [vmem:[#allocation5 + $0x3b8] sm:$0xff]
        %v1104 = vunpack.c.l.b16 %v1088
        %v1105 = vunpack.c.h.b16 %v1088
        %v1106 = vunpack.c.l.b16 %v1089
        %v1107 = vunpack.c.h.b16 %v1089
        %v1108 = vunpack.c.l.b16 %v1090
        %v1109 = vunpack.c.h.b16 %v1090
        %v1110 = vunpack.c.l.b16 %v1091
        %v1111 = vunpack.c.h.b16 %v1091
        %v1112 = vunpack.c.l.b16 %v1092
        %v1113 = vunpack.c.h.b16 %v1092
        %v1114 = vunpack.c.l.b16 %v1093
        %v1115 = vunpack.c.h.b16 %v1093
        %v1116 = vunpack.c.l.b16 %v1094
        %v1117 = vunpack.c.h.b16 %v1094
        %v1118 = vunpack.c.l.b16 %v1095
        %v1119 = vunpack.c.h.b16 %v1095
        %v1120 = vpack.c.b16 %v1108, %v1104
        %v1121 = vpack.c.b16 %v1109, %v1105
        %v1122 = vpack.c.b16 %v1110, %v1106
        %v1123 = vpack.c.b16 %v1111, %v1107
        %v1124 = vpack.c.b16 %v1116, %v1112
        %v1125 = vpack.c.b16 %v1117, %v1113
        %v1126 = vpack.c.b16 %v1118, %v1114
        %v1127 = vpack.c.b16 %v1119, %v1115
        %1136 = vmatpush.bf16.msra.mxu0 0
        %1137 = vmatpush.bf16.msra.mxu0 0
        %1138 = vmatpush.bf16.msra.mxu0 0
        %1139 = vmatpush.bf16.msra.mxu0 0
        %1140 = vmatpush.bf16.msra.mxu0 0
        %1141 = vmatpush.bf16.msra.mxu0 0
        %1142 = vmatpush.bf16.msra.mxu0 %v1124
        %1143 = vmatpush.bf16.msra.mxu0 %v1120
        %1144 = vmatmul.bf16.gmra.mxu0 %v545
        %v1145 = vpop.f32.mrf.mxu0
        %v1146 = vadd.f32 0.0, %v1145
        %v1147 = vpop.f32.mrf.mxu0
        %v1148 = vadd.f32 0.0, %v1147
        %1149 = vdwg.mxu0
        %1150 = vmatpush.bf16.msra.mxu0 0
        %1151 = vmatpush.bf16.msra.mxu0 0
        %1152 = vmatpush.bf16.msra.mxu0 0
        %1153 = vmatpush.bf16.msra.mxu0 0
        %1154 = vmatpush.bf16.msra.mxu0 0
        %1155 = vmatpush.bf16.msra.mxu0 0
        %1156 = vmatpush.bf16.msra.mxu0 %v1125
        %1157 = vmatpush.bf16.msra.mxu0 %v1121
        %1158 = vmatmul.bf16.gmra.mxu0 %v545
        %v1159 = vpop.f32.mrf.mxu0
        %v1160 = vadd.f32 0.0, %v1159
        %v1161 = vpop.f32.mrf.mxu0
        %v1162 = vadd.f32 0.0, %v1161
        %1163 = vdwg.mxu0
        %1164 = vmatpush.bf16.msra.mxu0 0
        %1165 = vmatpush.bf16.msra.mxu0 0
        %1166 = vmatpush.bf16.msra.mxu0 0
        %1167 = vmatpush.bf16.msra.mxu0 0
        %1168 = vmatpush.bf16.msra.mxu0 0
        %1169 = vmatpush.bf16.msra.mxu0 0
        %1170 = vmatpush.bf16.msra.mxu0 %v1126
        %1171 = vmatpush.bf16.msra.mxu0 %v1122
        %1172 = vmatmul.bf16.gmra.mxu0 %v545
        %v1173 = vpop.f32.mrf.mxu0
        %v1174 = vadd.f32 0.0, %v1173
        %v1175 = vpop.f32.mrf.mxu0
        %v1176 = vadd.f32 0.0, %v1175
        %1177 = vdwg.mxu0
        %1178 = vmatpush.bf16.msra.mxu0 0
        %1179 = vmatpush.bf16.msra.mxu0 0
        %1180 = vmatpush.bf16.msra.mxu0 0
        %1181 = vmatpush.bf16.msra.mxu0 0
        %1182 = vmatpush.bf16.msra.mxu0 0
        %1183 = vmatpush.bf16.msra.mxu0 0
        %1184 = vmatpush.bf16.msra.mxu0 %v1127
        %1185 = vmatpush.bf16.msra.mxu0 %v1123
        %1186 = vmatmul.bf16.gmra.mxu0 %v545
        %v1187 = vpop.f32.mrf.mxu0
        %v1188 = vadd.f32 0.0, %v1187
        %v1189 = vpop.f32.mrf.mxu0
        %v1190 = vadd.f32 0.0, %v1189
        %1191 = vdwg.mxu0
        %v1192 = vpack.c.bf16 %v1160, %v1146
        %v1193 = vpack.c.bf16 %v1188, %v1174
        %v1194 = vpack.c.bf16 %v1162, %v1148
        %v1195 = vpack.c.bf16 %v1190, %v1176
        %s1196 = scalar_lea.vmem %s4, 16
        %v1197 = vld [vmem:[%s1196] ss:$2 sm:$0xf]
        %v1199 = vperm.slane %v1197, 0
        %v1200 = vperm.slane %v1197, 1
        %v1201 = vperm.slane %v1197, 2
        %v1202 = vperm.slane %v1197, 3
        %v1207 = vpack.c.bf16 %v1200, %v1199
        %v1208 = vpack.c.bf16 %v1202, %v1201
        %v1211 = vunpack.c.l.b16 %v1207
        %v1212 = vunpack.c.h.b16 %v1207
        %v1213 = vunpack.c.l.b16 %v1208
        %v1214 = vunpack.c.h.b16 %v1208
        %v1215 = vpack.c.b16 %v1211, %v1211
        %v1216 = vpack.c.b16 %v1212, %v1212
        %v1217 = vpack.c.b16 %v1213, %v1213
        %v1218 = vpack.c.b16 %v1214, %v1214
        %v1220 = vpack.i.b16 %v1215, %v1215
        %v1222 = vperm.slane %v1220, 0
        %v1224 = vpack.i.b16 %v1216, %v1216
        %v1226 = vperm.slane %v1224, 0
        %v1228 = vpack.i.b16 %v1217, %v1217
        %v1230 = vperm.slane %v1228, 0
        %v1232 = vpack.i.b16 %v1218, %v1218
        %v1234 = vperm.slane %v1232, 0
        %v1235 = vunpack.c.l.bf16 %v1192
        %v1236 = vunpack.c.h.bf16 %v1192
        %v1237 = vunpack.c.l.bf16 %v1193
        %v1238 = vunpack.c.h.bf16 %v1193
        %v1239 = vunpack.c.l.bf16 %v1194
        %v1240 = vunpack.c.h.bf16 %v1194
        %v1241 = vunpack.c.l.bf16 %v1195
        %v1242 = vunpack.c.h.bf16 %v1195
        %v1243 = vunpack.c.l.bf16 %v1222
        %v1244 = vunpack.c.l.bf16 %v1226
        %v1245 = vunpack.c.l.bf16 %v1230
        %v1246 = vunpack.c.l.bf16 %v1234
        %v1247 = vadd.f32 %v1235, %v1243
        %v1248 = vadd.f32 %v1236, %v1244
        %v1249 = vadd.f32 %v1237, %v1245
        %v1250 = vadd.f32 %v1238, %v1246
        %v1251 = vadd.f32 %v1239, %v1243
        %v1252 = vadd.f32 %v1240, %v1244
        %v1253 = vadd.f32 %v1241, %v1245
        %v1254 = vadd.f32 %v1242, %v1246
        %v1255 = vpack.c.bf16 %v1248, %v1247
        %v1256 = vpack.c.bf16 %v1250, %v1249
        %v1257 = vpack.c.bf16 %v1252, %v1251
        %v1258 = vpack.c.bf16 %v1254, %v1253
        %v1259 = vunpack.c.l.bf16 %v1255
        %v1260 = vunpack.c.h.bf16 %v1255
        %v1261 = vunpack.c.l.bf16 %v1256
        %v1262 = vunpack.c.h.bf16 %v1256
        %v1263 = vunpack.c.l.bf16 %v1257
        %v1264 = vunpack.c.h.bf16 %v1257
        %v1265 = vunpack.c.l.bf16 %v1258
        %v1266 = vunpack.c.h.bf16 %v1258
        %v1267 = vmax.f32 %v1259, 0.0
        %v1268 = vmax.f32 %v1260, 0.0
        %v1269 = vmax.f32 %v1261, 0.0
        %v1270 = vmax.f32 %v1262, 0.0
        %v1271 = vmax.f32 %v1263, 0.0
        %v1272 = vmax.f32 %v1264, 0.0
        %v1273 = vmax.f32 %v1265, 0.0
        %v1274 = vmax.f32 %v1266, 0.0
        %v1275 = vpack.c.bf16 %v1271, %v1267
        %v1276 = vpack.c.bf16 %v1272, %v1268
        %v1277 = vpack.c.bf16 %v1273, %v1269
        %v1278 = vpack.c.bf16 %v1274, %v1270
        %v1279 = vld [vmem:[#allocation5 + $0x84] sm:$0xff]
        %v1280 = vld [vmem:[#allocation5 + $0x8c] sm:$0xff]
        %v1281 = vld [vmem:[#allocation5 + $0x1a8] sm:$0xff]
        %v1282 = vld [vmem:[#allocation5 + $0x1b0] sm:$0xff]
        %v1283 = vld [vmem:[#allocation5 + $0x2cc] sm:$0xff]
        %v1284 = vld [vmem:[#allocation5 + $0x2d4] sm:$0xff]
        %v1285 = vld [vmem:[#allocation5 + $0x3f0] sm:$0xff]
        %v1286 = vld [vmem:[#allocation5 + $0x3f8] sm:$0xff]
        %v1295 = vunpack.c.l.b16 %v1279
        %v1296 = vunpack.c.h.b16 %v1279
        %v1297 = vunpack.c.l.b16 %v1280
        %v1298 = vunpack.c.h.b16 %v1280
        %v1299 = vunpack.c.l.b16 %v1281
        %v1300 = vunpack.c.h.b16 %v1281
        %v1301 = vunpack.c.l.b16 %v1282
        %v1302 = vunpack.c.h.b16 %v1282
        %v1303 = vunpack.c.l.b16 %v1283
        %v1304 = vunpack.c.h.b16 %v1283
        %v1305 = vunpack.c.l.b16 %v1284
        %v1306 = vunpack.c.h.b16 %v1284
        %v1307 = vunpack.c.l.b16 %v1285
        %v1308 = vunpack.c.h.b16 %v1285
        %v1309 = vunpack.c.l.b16 %v1286
        %v1310 = vunpack.c.h.b16 %v1286
        %v1311 = vpack.c.b16 %v1299, %v1295
        %v1312 = vpack.c.b16 %v1300, %v1296
        %v1313 = vpack.c.b16 %v1301, %v1297
        %v1314 = vpack.c.b16 %v1302, %v1298
        %v1315 = vpack.c.b16 %v1307, %v1303
        %v1316 = vpack.c.b16 %v1308, %v1304
        %v1317 = vpack.c.b16 %v1309, %v1305
        %v1318 = vpack.c.b16 %v1310, %v1306
        %1327 = vmatpush.bf16.xpose.msra.mxu0 0
        %1328 = vmatpush.bf16.xpose.msra.mxu0 0
        %1329 = vmatpush.bf16.xpose.msra.mxu0 0
        %1330 = vmatpush.bf16.xpose.msra.mxu0 0
        %1331 = vmatpush.bf16.xpose.msra.mxu0 0
        %1332 = vmatpush.bf16.xpose.msra.mxu0 0
        %1333 = vmatpush.bf16.xpose.msra.mxu0 %v1315
        %1334 = vmatpush.bf16.xpose.msra.mxu0 %v1311
        %1335 = vmatmul.bf16.gmra.mxu0 %v1275
        %v1336 = vpop.f32.mrf.mxu0
        %v1337 = vadd.f32 0.0, %v1336
        %v1338 = vpop.f32.mrf.mxu0
        %v1339 = vadd.f32 0.0, %v1338
        %1340 = vdwg.mxu0
        %1341 = vmatpush.bf16.xpose.msra.mxu0 0
        %1342 = vmatpush.bf16.xpose.msra.mxu0 0
        %1343 = vmatpush.bf16.xpose.msra.mxu0 0
        %1344 = vmatpush.bf16.xpose.msra.mxu0 0
        %1345 = vmatpush.bf16.xpose.msra.mxu0 0
        %1346 = vmatpush.bf16.xpose.msra.mxu0 0
        %1347 = vmatpush.bf16.xpose.msra.mxu0 %v1316
        %1348 = vmatpush.bf16.xpose.msra.mxu0 %v1312
        %1349 = vmatmul.bf16.gmra.mxu0 %v1276
        %v1350 = vpop.f32.mrf.mxu0
        %v1351 = vadd.f32 %v1337, %v1350
        %v1352 = vpop.f32.mrf.mxu0
        %v1353 = vadd.f32 %v1339, %v1352
        %1354 = vdwg.mxu0
        %1355 = vmatpush.bf16.xpose.msra.mxu0 0
        %1356 = vmatpush.bf16.xpose.msra.mxu0 0
        %1357 = vmatpush.bf16.xpose.msra.mxu0 0
        %1358 = vmatpush.bf16.xpose.msra.mxu0 0
        %1359 = vmatpush.bf16.xpose.msra.mxu0 0
        %1360 = vmatpush.bf16.xpose.msra.mxu0 0
        %1361 = vmatpush.bf16.xpose.msra.mxu0 %v1317
        %1362 = vmatpush.bf16.xpose.msra.mxu0 %v1313
        %1363 = vmatmul.bf16.gmra.mxu0 %v1277
        %v1364 = vpop.f32.mrf.mxu0
        %v1365 = vadd.f32 %v1351, %v1364
        %v1366 = vpop.f32.mrf.mxu0
        %v1367 = vadd.f32 %v1353, %v1366
        %1368 = vdwg.mxu0
        %1369 = vmatpush.bf16.xpose.msra.mxu0 0
        %1370 = vmatpush.bf16.xpose.msra.mxu0 0
        %1371 = vmatpush.bf16.xpose.msra.mxu0 0
        %1372 = vmatpush.bf16.xpose.msra.mxu0 0
        %1373 = vmatpush.bf16.xpose.msra.mxu0 0
        %1374 = vmatpush.bf16.xpose.msra.mxu0 0
        %1375 = vmatpush.bf16.xpose.msra.mxu0 %v1318
        %1376 = vmatpush.bf16.xpose.msra.mxu0 %v1314
        %1377 = vmatmul.bf16.gmra.mxu0 %v1278
        %v1378 = vpop.f32.mrf.mxu0
        %v1379 = vadd.f32 %v1365, %v1378
        %v1380 = vpop.f32.mrf.mxu0
        %v1381 = vadd.f32 %v1367, %v1380
        %1382 = vdwg.mxu0
        %v1383 = vadd.f32 %v1084, %v1379
        %v1384 = vadd.f32 %v1086, %v1381
        %v1385 = vld [vmem:[#allocation5 + $0x54] sm:$0xff]
        %v1386 = vld [vmem:[#allocation5 + $0x5c] sm:$0xff]
        %v1387 = vld [vmem:[#allocation5 + $0x178] sm:$0xff]
        %v1388 = vld [vmem:[#allocation5 + $0x180] sm:$0xff]
        %v1389 = vld [vmem:[#allocation5 + $0x29c] sm:$0xff]
        %v1390 = vld [vmem:[#allocation5 + $0x2a4] sm:$0xff]
        %v1391 = vld [vmem:[#allocation5 + $0x3c0] sm:$0xff]
        %v1392 = vld [vmem:[#allocation5 + $0x3c8] sm:$0xff]
        %v1401 = vunpack.c.l.b16 %v1385
        %v1402 = vunpack.c.h.b16 %v1385
        %v1403 = vunpack.c.l.b16 %v1386
        %v1404 = vunpack.c.h.b16 %v1386
        %v1405 = vunpack.c.l.b16 %v1387
        %v1406 = vunpack.c.h.b16 %v1387
        %v1407 = vunpack.c.l.b16 %v1388
        %v1408 = vunpack.c.h.b16 %v1388
        %v1409 = vunpack.c.l.b16 %v1389
        %v1410 = vunpack.c.h.b16 %v1389
        %v1411 = vunpack.c.l.b16 %v1390
        %v1412 = vunpack.c.h.b16 %v1390
        %v1413 = vunpack.c.l.b16 %v1391
        %v1414 = vunpack.c.h.b16 %v1391
        %v1415 = vunpack.c.l.b16 %v1392
        %v1416 = vunpack.c.h.b16 %v1392
        %v1417 = vpack.c.b16 %v1405, %v1401
        %v1418 = vpack.c.b16 %v1406, %v1402
        %v1419 = vpack.c.b16 %v1407, %v1403
        %v1420 = vpack.c.b16 %v1408, %v1404
        %v1421 = vpack.c.b16 %v1413, %v1409
        %v1422 = vpack.c.b16 %v1414, %v1410
        %v1423 = vpack.c.b16 %v1415, %v1411
        %v1424 = vpack.c.b16 %v1416, %v1412
        %1433 = vmatpush.bf16.msra.mxu0 0
        %1434 = vmatpush.bf16.msra.mxu0 0
        %1435 = vmatpush.bf16.msra.mxu0 0
        %1436 = vmatpush.bf16.msra.mxu0 0
        %1437 = vmatpush.bf16.msra.mxu0 0
        %1438 = vmatpush.bf16.msra.mxu0 0
        %1439 = vmatpush.bf16.msra.mxu0 %v1421
        %1440 = vmatpush.bf16.msra.mxu0 %v1417
        %1441 = vmatmul.bf16.gmra.mxu0 %v545
        %v1442 = vpop.f32.mrf.mxu0
        %v1443 = vadd.f32 0.0, %v1442
        %v1444 = vpop.f32.mrf.mxu0
        %v1445 = vadd.f32 0.0, %v1444
        %1446 = vdwg.mxu0
        %1447 = vmatpush.bf16.msra.mxu0 0
        %1448 = vmatpush.bf16.msra.mxu0 0
        %1449 = vmatpush.bf16.msra.mxu0 0
        %1450 = vmatpush.bf16.msra.mxu0 0
        %1451 = vmatpush.bf16.msra.mxu0 0
        %1452 = vmatpush.bf16.msra.mxu0 0
        %1453 = vmatpush.bf16.msra.mxu0 %v1422
        %1454 = vmatpush.bf16.msra.mxu0 %v1418
        %1455 = vmatmul.bf16.gmra.mxu0 %v545
        %v1456 = vpop.f32.mrf.mxu0
        %v1457 = vadd.f32 0.0, %v1456
        %v1458 = vpop.f32.mrf.mxu0
        %v1459 = vadd.f32 0.0, %v1458
        %1460 = vdwg.mxu0
        %1461 = vmatpush.bf16.msra.mxu0 0
        %1462 = vmatpush.bf16.msra.mxu0 0
        %1463 = vmatpush.bf16.msra.mxu0 0
        %1464 = vmatpush.bf16.msra.mxu0 0
        %1465 = vmatpush.bf16.msra.mxu0 0
        %1466 = vmatpush.bf16.msra.mxu0 0
        %1467 = vmatpush.bf16.msra.mxu0 %v1423
        %1468 = vmatpush.bf16.msra.mxu0 %v1419
        %1469 = vmatmul.bf16.gmra.mxu0 %v545
        %v1470 = vpop.f32.mrf.mxu0
        %v1471 = vadd.f32 0.0, %v1470
        %v1472 = vpop.f32.mrf.mxu0
        %v1473 = vadd.f32 0.0, %v1472
        %1474 = vdwg.mxu0
        %1475 = vmatpush.bf16.msra.mxu0 0
        %1476 = vmatpush.bf16.msra.mxu0 0
        %1477 = vmatpush.bf16.msra.mxu0 0
        %1478 = vmatpush.bf16.msra.mxu0 0
        %1479 = vmatpush.bf16.msra.mxu0 0
        %1480 = vmatpush.bf16.msra.mxu0 0
        %1481 = vmatpush.bf16.msra.mxu0 %v1424
        %1482 = vmatpush.bf16.msra.mxu0 %v1420
        %1483 = vmatmul.bf16.gmra.mxu0 %v545
        %v1484 = vpop.f32.mrf.mxu0
        %v1485 = vadd.f32 0.0, %v1484
        %v1486 = vpop.f32.mrf.mxu0
        %v1487 = vadd.f32 0.0, %v1486
        %1488 = vdwg.mxu0
        %v1489 = vpack.c.bf16 %v1457, %v1443
        %v1490 = vpack.c.bf16 %v1485, %v1471
        %v1491 = vpack.c.bf16 %v1459, %v1445
        %v1492 = vpack.c.bf16 %v1487, %v1473
        %s1493 = scalar_lea.vmem %s4, 24
        %v1494 = vld [vmem:[%s1493] ss:$2 sm:$0xf]
        %v1496 = vperm.slane %v1494, 0
        %v1497 = vperm.slane %v1494, 1
        %v1498 = vperm.slane %v1494, 2
        %v1499 = vperm.slane %v1494, 3
        %v1504 = vpack.c.bf16 %v1497, %v1496
        %v1505 = vpack.c.bf16 %v1499, %v1498
        %v1508 = vunpack.c.l.b16 %v1504
        %v1509 = vunpack.c.h.b16 %v1504
        %v1510 = vunpack.c.l.b16 %v1505
        %v1511 = vunpack.c.h.b16 %v1505
        %v1512 = vpack.c.b16 %v1508, %v1508
        %v1513 = vpack.c.b16 %v1509, %v1509
        %v1514 = vpack.c.b16 %v1510, %v1510
        %v1515 = vpack.c.b16 %v1511, %v1511
        %v1517 = vpack.i.b16 %v1512, %v1512
        %v1519 = vperm.slane %v1517, 0
        %v1521 = vpack.i.b16 %v1513, %v1513
        %v1523 = vperm.slane %v1521, 0
        %v1525 = vpack.i.b16 %v1514, %v1514
        %v1527 = vperm.slane %v1525, 0
        %v1529 = vpack.i.b16 %v1515, %v1515
        %v1531 = vperm.slane %v1529, 0
        %v1532 = vunpack.c.l.bf16 %v1489
        %v1533 = vunpack.c.h.bf16 %v1489
        %v1534 = vunpack.c.l.bf16 %v1490
        %v1535 = vunpack.c.h.bf16 %v1490
        %v1536 = vunpack.c.l.bf16 %v1491
        %v1537 = vunpack.c.h.bf16 %v1491
        %v1538 = vunpack.c.l.bf16 %v1492
        %v1539 = vunpack.c.h.bf16 %v1492
        %v1540 = vunpack.c.l.bf16 %v1519
        %v1541 = vunpack.c.l.bf16 %v1523
        %v1542 = vunpack.c.l.bf16 %v1527
        %v1543 = vunpack.c.l.bf16 %v1531
        %v1544 = vadd.f32 %v1532, %v1540
        %v1545 = vadd.f32 %v1533, %v1541
        %v1546 = vadd.f32 %v1534, %v1542
        %v1547 = vadd.f32 %v1535, %v1543
        %v1548 = vadd.f32 %v1536, %v1540
        %v1549 = vadd.f32 %v1537, %v1541
        %v1550 = vadd.f32 %v1538, %v1542
        %v1551 = vadd.f32 %v1539, %v1543
        %v1552 = vpack.c.bf16 %v1545, %v1544
        %v1553 = vpack.c.bf16 %v1547, %v1546
        %v1554 = vpack.c.bf16 %v1549, %v1548
        %v1555 = vpack.c.bf16 %v1551, %v1550
        %v1556 = vunpack.c.l.bf16 %v1552
        %v1557 = vunpack.c.h.bf16 %v1552
        %v1558 = vunpack.c.l.bf16 %v1553
        %v1559 = vunpack.c.h.bf16 %v1553
        %v1560 = vunpack.c.l.bf16 %v1554
        %v1561 = vunpack.c.h.bf16 %v1554
        %v1562 = vunpack.c.l.bf16 %v1555
        %v1563 = vunpack.c.h.bf16 %v1555
        %v1564 = vmax.f32 %v1556, 0.0
        %v1565 = vmax.f32 %v1557, 0.0
        %v1566 = vmax.f32 %v1558, 0.0
        %v1567 = vmax.f32 %v1559, 0.0
        %v1568 = vmax.f32 %v1560, 0.0
        %v1569 = vmax.f32 %v1561, 0.0
        %v1570 = vmax.f32 %v1562, 0.0
        %v1571 = vmax.f32 %v1563, 0.0
        %v1572 = vpack.c.bf16 %v1568, %v1564
        %v1573 = vpack.c.bf16 %v1569, %v1565
        %v1574 = vpack.c.bf16 %v1570, %v1566
        %v1575 = vpack.c.bf16 %v1571, %v1567
        %v1576 = vld [vmem:[#allocation5 + $0x94] sm:$0xff]
        %v1577 = vld [vmem:[#allocation5 + $0x9c] sm:$0xff]
        %v1578 = vld [vmem:[#allocation5 + $0x1b8] sm:$0xff]
        %v1579 = vld [vmem:[#allocation5 + $0x1c0] sm:$0xff]
        %v1580 = vld [vmem:[#allocation5 + $0x2dc] sm:$0xff]
        %v1581 = vld [vmem:[#allocation5 + $0x2e4] sm:$0xff]
        %v1582 = vld [vmem:[#allocation5 + $0x400] sm:$0xff]
        %v1583 = vld [vmem:[#allocation5 + $0x408] sm:$0xff]
        %v1592 = vunpack.c.l.b16 %v1576
        %v1593 = vunpack.c.h.b16 %v1576
        %v1594 = vunpack.c.l.b16 %v1577
        %v1595 = vunpack.c.h.b16 %v1577
        %v1596 = vunpack.c.l.b16 %v1578
        %v1597 = vunpack.c.h.b16 %v1578
        %v1598 = vunpack.c.l.b16 %v1579
        %v1599 = vunpack.c.h.b16 %v1579
        %v1600 = vunpack.c.l.b16 %v1580
        %v1601 = vunpack.c.h.b16 %v1580
        %v1602 = vunpack.c.l.b16 %v1581
        %v1603 = vunpack.c.h.b16 %v1581
        %v1604 = vunpack.c.l.b16 %v1582
        %v1605 = vunpack.c.h.b16 %v1582
        %v1606 = vunpack.c.l.b16 %v1583
        %v1607 = vunpack.c.h.b16 %v1583
        %v1608 = vpack.c.b16 %v1596, %v1592
        %v1609 = vpack.c.b16 %v1597, %v1593
        %v1610 = vpack.c.b16 %v1598, %v1594
        %v1611 = vpack.c.b16 %v1599, %v1595
        %v1612 = vpack.c.b16 %v1604, %v1600
        %v1613 = vpack.c.b16 %v1605, %v1601
        %v1614 = vpack.c.b16 %v1606, %v1602
        %v1615 = vpack.c.b16 %v1607, %v1603
        %1624 = vmatpush.bf16.xpose.msra.mxu0 0
        %1625 = vmatpush.bf16.xpose.msra.mxu0 0
        %1626 = vmatpush.bf16.xpose.msra.mxu0 0
        %1627 = vmatpush.bf16.xpose.msra.mxu0 0
        %1628 = vmatpush.bf16.xpose.msra.mxu0 0
        %1629 = vmatpush.bf16.xpose.msra.mxu0 0
        %1630 = vmatpush.bf16.xpose.msra.mxu0 %v1612
        %1631 = vmatpush.bf16.xpose.msra.mxu0 %v1608
        %1632 = vmatmul.bf16.gmra.mxu0 %v1572
        %v1633 = vpop.f32.mrf.mxu0
        %v1634 = vadd.f32 0.0, %v1633
        %v1635 = vpop.f32.mrf.mxu0
        %v1636 = vadd.f32 0.0, %v1635
        %1637 = vdwg.mxu0
        %1638 = vmatpush.bf16.xpose.msra.mxu0 0
        %1639 = vmatpush.bf16.xpose.msra.mxu0 0
        %1640 = vmatpush.bf16.xpose.msra.mxu0 0
        %1641 = vmatpush.bf16.xpose.msra.mxu0 0
        %1642 = vmatpush.bf16.xpose.msra.mxu0 0
        %1643 = vmatpush.bf16.xpose.msra.mxu0 0
        %1644 = vmatpush.bf16.xpose.msra.mxu0 %v1613
        %1645 = vmatpush.bf16.xpose.msra.mxu0 %v1609
        %1646 = vmatmul.bf16.gmra.mxu0 %v1573
        %v1647 = vpop.f32.mrf.mxu0
        %v1648 = vadd.f32 %v1634, %v1647
        %v1649 = vpop.f32.mrf.mxu0
        %v1650 = vadd.f32 %v1636, %v1649
        %1651 = vdwg.mxu0
        %1652 = vmatpush.bf16.xpose.msra.mxu0 0
        %1653 = vmatpush.bf16.xpose.msra.mxu0 0
        %1654 = vmatpush.bf16.xpose.msra.mxu0 0
        %1655 = vmatpush.bf16.xpose.msra.mxu0 0
        %1656 = vmatpush.bf16.xpose.msra.mxu0 0
        %1657 = vmatpush.bf16.xpose.msra.mxu0 0
        %1658 = vmatpush.bf16.xpose.msra.mxu0 %v1614
        %1659 = vmatpush.bf16.xpose.msra.mxu0 %v1610
        %1660 = vmatmul.bf16.gmra.mxu0 %v1574
        %v1661 = vpop.f32.mrf.mxu0
        %v1662 = vadd.f32 %v1648, %v1661
        %v1663 = vpop.f32.mrf.mxu0
        %v1664 = vadd.f32 %v1650, %v1663
        %1665 = vdwg.mxu0
        %1666 = vmatpush.bf16.xpose.msra.mxu0 0
        %1667 = vmatpush.bf16.xpose.msra.mxu0 0
        %1668 = vmatpush.bf16.xpose.msra.mxu0 0
        %1669 = vmatpush.bf16.xpose.msra.mxu0 0
        %1670 = vmatpush.bf16.xpose.msra.mxu0 0
        %1671 = vmatpush.bf16.xpose.msra.mxu0 0
        %1672 = vmatpush.bf16.xpose.msra.mxu0 %v1615
        %1673 = vmatpush.bf16.xpose.msra.mxu0 %v1611
        %1674 = vmatmul.bf16.gmra.mxu0 %v1575
        %v1675 = vpop.f32.mrf.mxu0
        %v1676 = vadd.f32 %v1662, %v1675
        %v1677 = vpop.f32.mrf.mxu0
        %v1678 = vadd.f32 %v1664, %v1677
        %1679 = vdwg.mxu0
        %v1680 = vadd.f32 %v1383, %v1676
        %v1681 = vadd.f32 %v1384, %v1678
        %v1682 = vld [vmem:[#allocation8 + $0x59] sm:$0x1]
        %v1683 = vperm.slane %v1682, 0
        %v1684 = vadd.f32 %v1680, %v1683
        %v1685 = vadd.f32 %v1681, %v1683
        %v1686 = vadd.f32 %v493, %v1684
        %v1687 = vadd.f32 %v494, %v1685
        %v1688 = vsel %vm308, %v1686, 0.0
        %1689 = vadd.xlane.f32.xlu0 %v1688
        %v1690 = vpop.xlane.xlu0 %1689
        %v1691 = vsel %vm308, %v1687, 0.0
        %1692 = vadd.xlane.f32.xlu0 %v1691
        %v1693 = vpop.xlane.xlu0 %1692
        %v1694 = vmul.f32 %v1690, %v448
        %v1695 = vmul.f32 %v1693, %v448
        %v1696 = vsub.f32 %v1686, %v1694
        %v1697 = vsub.f32 %v1687, %v1695
        %v1698 = vmul.f32 %v1696, %v1696
        %v1699 = vmul.f32 %v1697, %v1697
        %v1700 = vsel %vm308, %v1698, 0.0
        %1701 = vadd.xlane.f32.xlu0 %v1700
        %v1702 = vpop.xlane.xlu0 %1701
        %v1703 = vsel %vm308, %v1699, 0.0
        %1704 = vadd.xlane.f32.xlu0 %v1703
        %v1705 = vpop.xlane.xlu0 %1704
        %v1706 = vmul.f32 %v1702, %v448
        %v1707 = vmul.f32 %v1705, %v448
        %v1708 = vadd.f32 %v1706, 1e-05
        %v1709 = vadd.f32 %v1707, 1e-05
        %v1710 = vrsqrt.pop %v1708
        %v1711 = vmul.f32 %v1710, %v1708
        %v1712 = vmul.f32 %v1711, %v1710
        %v1713 = vmul.f32 0.5, %v1712
        %v1714 = vsub.f32 1.5, %v1713
        %v1715 = vmul.f32 %v1710, %v1714
        %vm1716 = vweird.f32 %v1708
        %vm1717 = vweird.f32 %v1710
        %vm1718 = vmor %vm1716, %vm1717
        %v1719 = vsel %vm1718, %v1710, %v1715
        %v1720 = vrsqrt.pop %v1709
        %v1721 = vmul.f32 %v1720, %v1709
        %v1722 = vmul.f32 %v1721, %v1720
        %v1723 = vmul.f32 0.5, %v1722
        %v1724 = vsub.f32 1.5, %v1723
        %v1725 = vmul.f32 %v1720, %v1724
        %vm1726 = vweird.f32 %v1709
        %vm1727 = vweird.f32 %v1720
        %vm1728 = vmor %vm1726, %vm1727
        %v1729 = vsel %vm1728, %v1720, %v1725
        %v1730 = vmul.f32 %v1696, %v1719
        %v1731 = vmul.f32 %v1697, %v1729
        %v1732 = vld [vmem:[#allocation8 + $0x51] sm:$0x1]
        %v1733 = vperm.slane %v1732, 0
        %v1734 = vmul.f32 %v1730, %v1733
        %v1735 = vmul.f32 %v1731, %v1733
        %v1736 = vld [vmem:[#allocation8 + $0x52] sm:$0x1]
        %v1737 = vperm.slane %v1736, 0
        %v1738 = vadd.f32 %v1734, %v1737
        %v1739 = vadd.f32 %v1735, %v1737
        %s1740 = smul.u32 %s29, 128
        %s1741 = sld [smem:[#allocation4 + %s1740]]
        %s1742 = sadd.s32 %s1741, 64
        %s1743 = scalar_lea.vmem [#allocation8], %s1742
        %v1744 = vld [vmem:[%s1743] sm:$0x1]
        %vm1745 = vcmask 253952
        %1746 = vst.msk [vmem:[#allocation2] sm:$0x1] %vm1745, %v1744
        %s1747 = sadd.s32 %s1740, 1
        %s1748 = sld [smem:[#allocation4 + %s1747]]
        %s1749 = sadd.s32 %s1748, 64
        %s1750 = scalar_lea.vmem [#allocation8], %s1749
        %v1751 = vld [vmem:[%s1750] sm:$0x1]
        %1752 = vst.msk [vmem:[#allocation2 + $0x1] sm:$0x1] %vm1745, %v1751
        %s1753 = sadd.s32 %s1740, 2
        %s1754 = sld [smem:[#allocation4 + %s1753]]
        %s1755 = sadd.s32 %s1754, 64
        %s1756 = scalar_lea.vmem [#allocation8], %s1755
        %v1757 = vld [vmem:[%s1756] sm:$0x1]
        %1758 = vst.msk [vmem:[#allocation2 + $0x2] sm:$0x1] %vm1745, %v1757
        %s1759 = sadd.s32 %s1740, 3
        %s1760 = sld [smem:[#allocation4 + %s1759]]
        %s1761 = sadd.s32 %s1760, 64
        %s1762 = scalar_lea.vmem [#allocation8], %s1761
        %v1763 = vld [vmem:[%s1762] sm:$0x1]
        %1764 = vst.msk [vmem:[#allocation2 + $0x3] sm:$0x1] %vm1745, %v1763
        %s1765 = sadd.s32 %s1740, 4
        %s1766 = sld [smem:[#allocation4 + %s1765]]
        %s1767 = sadd.s32 %s1766, 64
        %s1768 = scalar_lea.vmem [#allocation8], %s1767
        %v1769 = vld [vmem:[%s1768] sm:$0x1]
        %1770 = vst.msk [vmem:[#allocation2 + $0x4] sm:$0x1] %vm1745, %v1769
        %s1771 = sadd.s32 %s1740, 5
        %s1772 = sld [smem:[#allocation4 + %s1771]]
        %s1773 = sadd.s32 %s1772, 64
        %s1774 = scalar_lea.vmem [#allocation8], %s1773
        %v1775 = vld [vmem:[%s1774] sm:$0x1]
        %1776 = vst.msk [vmem:[#allocation2 + $0x5] sm:$0x1] %vm1745, %v1775
        %s1777 = sadd.s32 %s1740, 6
        %s1778 = sld [smem:[#allocation4 + %s1777]]
        %s1779 = sadd.s32 %s1778, 64
        %s1780 = scalar_lea.vmem [#allocation8], %s1779
        %v1781 = vld [vmem:[%s1780] sm:$0x1]
        %1782 = vst.msk [vmem:[#allocation2 + $0x6] sm:$0x1] %vm1745, %v1781
        %s1783 = sadd.s32 %s1740, 7
        %s1784 = sld [smem:[#allocation4 + %s1783]]
        %s1785 = sadd.s32 %s1784, 64
        %s1786 = scalar_lea.vmem [#allocation8], %s1785
        %v1787 = vld [vmem:[%s1786] sm:$0x1]
        %1788 = vst.msk [vmem:[#allocation2 + $0x7] sm:$0x1] %vm1745, %v1787
        %v1789 = vld [vmem:[#allocation2] sm:$0xff]
        %v1790 = vmul.f32 %v1789, 5.656854
        %v1791 = vadd.f32 %v1790, %v240
        %v1792 = vlaneseq
        %v1793 = vshrl.u32 %v1792, 7
        %v1794 = vlaneseq
        %v1795 = vand.u32 %v1794, 127
        %vm1796 = vcmp.le.s32.totalorder %v1795, %v1793
        %v1797 = vsel %vm1796, 0.0, -1e+30
        %v1798 = vld [vmem:[#allocation5 + $0x8] sm:$0xf]
        %v1799 = vld [vmem:[#allocation5 + $0x12c] sm:$0xf]
        %v1800 = vld [vmem:[#allocation5 + $0x250] sm:$0xf]
        %v1801 = vld [vmem:[#allocation5 + $0x374] sm:$0xf]
        %v1802 = vpack.c.bf16 %v1791, %v1791
        %v1803 = vld [vmem:[#allocation8 + $0x49] sm:$0x1]
        %v1804 = vperm.slane %v1803, 0
        %v1809 = vunpack.c.l.b16 %v1798
        %v1810 = vunpack.c.l.b16 %v1799
        %v1811 = vunpack.c.l.b16 %v1800
        %v1812 = vunpack.c.l.b16 %v1801
        %v1813 = vpack.c.b16 %v1810, %v1809
        %v1814 = vpack.c.b16 %v1812, %v1811
        %v1818 = vsel %vm308, %v1802, 0
        %1820 = vmatpush.bf16.msra.mxu0 0
        %1821 = vmatpush.bf16.msra.mxu0 0
        %1822 = vmatpush.bf16.msra.mxu0 0
        %1823 = vmatpush.bf16.msra.mxu0 0
        %1824 = vmatpush.bf16.msra.mxu0 0
        %1825 = vmatpush.bf16.msra.mxu0 0
        %1826 = vmatpush.bf16.msra.mxu0 %v1814
        %1827 = vmatpush.bf16.msra.mxu0 %v1813
        %1828 = vmatmul.bf16.gmra.mxu0 %v1818
        %v1829 = vpop.f32.mrf.mxu0
        %v1830 = vadd.f32 %v1804, %v1829
        %v1831 = vpop.f32.mrf.mxu0
        %1832 = vdwg.mxu0
        %v1833 = vpack.c.bf16 %v1830, %v1830
        %1835 = vrot.lane.b32.xlu0 %v1833, 96
        %v1836 = vpop.permute.xlu0 %1835
        %v1838 = vsel %vm308, %v1833, 0
        %v1841 = vsel %vm308, %v1836, 0
        %1843 = vmatpush.bf16.xpose.msra.mxu0 0
        %1844 = vmatpush.bf16.xpose.msra.mxu0 0
        %1845 = vmatpush.bf16.xpose.msra.mxu0 0
        %1846 = vmatpush.bf16.xpose.msra.mxu0 0
        %1847 = vmatpush.bf16.xpose.msra.mxu0 0
        %1848 = vmatpush.bf16.xpose.msra.mxu0 0
        %1849 = vmatpush.bf16.xpose.msra.mxu0 0
        %1850 = vmatpush.bf16.xpose.msra.mxu0 %v1841
        %1851 = vmatmul.bf16.gmra.mxu0 %v1838
        %v1852 = vpop.f32.mrf.mxu0
        %v1853 = vadd.f32 0.0, %v1852
        %v1854 = vpop.f32.mrf.mxu0
        %1855 = vdwg.mxu0
        %v1856 = vmul.f32 %v1853, 0.17677669
        %v1857 = vadd.f32 %v1856, %v1797
        %v1858 = vsel %vm261, %v1857, -inf
        %1859 = vmax.xlane.f32.xlu0 %v1858
        %v1860 = vpop.xlane.xlu0 %1859
        %v1861 = vsub.f32 %v1857, %v1860
        %v1862 = vmul.f32 %v1861, 1.442695
        %v1863 = vpow.pop %v1862
        %v1864 = vsel %vm261, %v1863, 0.0
        %1865 = vadd.xlane.f32.xlu0 %v1864
        %v1866 = vpop.xlane.xlu0 %1865
        %v1867 = vrcp.pop %v1866
        %v1868 = vmul.f32 %v1863, %v1867
        %v1869 = vpack.c.bf16 %v1868, %v1868
        %1870 = vrot.lane.b32.xlu0 %v1833, 64
        %v1871 = vpop.permute.xlu0 %1870
        %v1873 = vsel %vm261, %v1869, 0
        %vm1875 = vcmask 1043456
        %v1877 = vsel %vm1875, %v1871, 0
        %1879 = vmatpush.bf16.msra.mxu0 0
        %1880 = vmatpush.bf16.msra.mxu0 0
        %1881 = vmatpush.bf16.msra.mxu0 0
        %1882 = vmatpush.bf16.msra.mxu0 0
        %1883 = vmatpush.bf16.msra.mxu0 0
        %1884 = vmatpush.bf16.msra.mxu0 0
        %1885 = vmatpush.bf16.msra.mxu0 0
        %1886 = vmatpush.bf16.msra.mxu0 %v1877
        %1887 = vmatmul.bf16.gmra.mxu0 %v1873
        %v1888 = vpop.f32.mrf.mxu0
        %v1889 = vadd.f32 0.0, %v1888
        %v1890 = vpop.f32.mrf.mxu0
        %1891 = vdwg.mxu0
        %v1892 = vld [vmem:[#allocation5 + $0x18] sm:$0xf]
        %v1893 = vld [vmem:[#allocation5 + $0x13c] sm:$0xf]
        %v1894 = vld [vmem:[#allocation5 + $0x260] sm:$0xf]
        %v1895 = vld [vmem:[#allocation5 + $0x384] sm:$0xf]
        %v1896 = vpack.c.bf16 %v1889, %v1889
        %v1901 = vunpack.c.l.b16 %v1892
        %v1902 = vunpack.c.l.b16 %v1893
        %v1903 = vunpack.c.l.b16 %v1894
        %v1904 = vunpack.c.l.b16 %v1895
        %v1905 = vpack.c.b16 %v1902, %v1901
        %v1906 = vpack.c.b16 %v1904, %v1903
        %v1910 = vsel %vm308, %v1896, 0
        %1912 = vmatpush.bf16.msra.mxu0 0
        %1913 = vmatpush.bf16.msra.mxu0 0
        %1914 = vmatpush.bf16.msra.mxu0 0
        %1915 = vmatpush.bf16.msra.mxu0 0
        %1916 = vmatpush.bf16.msra.mxu0 0
        %1917 = vmatpush.bf16.msra.mxu0 0
        %1918 = vmatpush.bf16.msra.mxu0 %v1906
        %1919 = vmatpush.bf16.msra.mxu0 %v1905
        %1920 = vmatmul.bf16.gmra.mxu0 %v1910
        %v1921 = vpop.f32.mrf.mxu0
        %v1922 = vadd.f32 0.0, %v1921
        %v1923 = vpop.f32.mrf.mxu0
        %1924 = vdwg.mxu0
        %v1925 = vadd.f32 %v1791, %v1922
        %v1926 = vld [vmem:[#allocation8 + $0x4d] sm:$0x1]
        %v1927 = vperm.slane %v1926, 0
        %v1928 = vadd.f32 %v1925, %v1927
        %v1929 = vsel %vm308, %v1928, 0.0
        %1930 = vadd.xlane.f32.xlu0 %v1929
        %v1931 = vpop.xlane.xlu0 %1930
        %v1932 = vmul.f32 %v1931, %v448
        %v1933 = vsub.f32 %v1928, %v1932
        %v1934 = vmul.f32 %v1933, %v1933
        %v1935 = vsel %vm308, %v1934, 0.0
        %1936 = vadd.xlane.f32.xlu0 %v1935
        %v1937 = vpop.xlane.xlu0 %1936
        %v1938 = vmul.f32 %v1937, %v448
        %v1939 = vadd.f32 %v1938, 1e-05
        %v1940 = vrsqrt.pop %v1939
        %v1941 = vmul.f32 %v1940, %v1939
        %v1942 = vmul.f32 %v1941, %v1940
        %v1943 = vmul.f32 0.5, %v1942
        %v1944 = vsub.f32 1.5, %v1943
        %v1945 = vmul.f32 %v1940, %v1944
        %vm1946 = vweird.f32 %v1939
        %vm1947 = vweird.f32 %v1940
        %vm1948 = vmor %vm1946, %vm1947
        %v1949 = vsel %vm1948, %v1940, %v1945
        %v1950 = vmul.f32 %v1933, %v1949
        %v1951 = vld [vmem:[#allocation8 + $0x53] sm:$0x1]
        %v1952 = vperm.slane %v1951, 0
        %v1953 = vmul.f32 %v1950, %v1952
        %v1954 = vld [vmem:[#allocation8 + $0x54] sm:$0x1]
        %v1955 = vperm.slane %v1954, 0
        %v1956 = vadd.f32 %v1953, %v1955
        %v1957 = vld [vmem:[#allocation8 + $0x4a] sm:$0x1]
        %v1958 = vld [vmem:[#allocation5 + $0xc] sm:$0xf]
        %v1959 = vld [vmem:[#allocation5 + $0x130] sm:$0xf]
        %v1960 = vld [vmem:[#allocation5 + $0x254] sm:$0xf]
        %v1961 = vld [vmem:[#allocation5 + $0x378] sm:$0xf]
        %v1962 = vpack.c.bf16 %v1956, %v1956
        %v1963 = vperm.slane %v1957, 0
        %v1968 = vunpack.c.l.b16 %v1958
        %v1969 = vunpack.c.l.b16 %v1959
        %v1970 = vunpack.c.l.b16 %v1960
        %v1971 = vunpack.c.l.b16 %v1961
        %v1972 = vpack.c.b16 %v1969, %v1968
        %v1973 = vpack.c.b16 %v1971, %v1970
        %v1977 = vsel %vm308, %v1962, 0
        %1979 = vmatpush.bf16.msra.mxu0 0
        %1980 = vmatpush.bf16.msra.mxu0 0
        %1981 = vmatpush.bf16.msra.mxu0 0
        %1982 = vmatpush.bf16.msra.mxu0 0
        %1983 = vmatpush.bf16.msra.mxu0 0
        %1984 = vmatpush.bf16.msra.mxu0 0
        %1985 = vmatpush.bf16.msra.mxu0 %v1973
        %1986 = vmatpush.bf16.msra.mxu0 %v1972
        %1987 = vmatmul.bf16.gmra.mxu0 %v1977
        %v1988 = vpop.f32.mrf.mxu0
        %v1989 = vadd.f32 %v1963, %v1988
        %v1990 = vpop.f32.mrf.mxu0
        %1991 = vdwg.mxu0
        %v1992 = vld [vmem:[#allocation5 + $0x10] sm:$0xf]
        %v1993 = vld [vmem:[#allocation5 + $0x134] sm:$0xf]
        %v1994 = vld [vmem:[#allocation5 + $0x258] sm:$0xf]
        %v1995 = vld [vmem:[#allocation5 + $0x37c] sm:$0xf]
        %v1996 = vpack.c.bf16 %v1739, %v1738
        %v2001 = vunpack.c.l.b16 %v1992
        %v2002 = vunpack.c.l.b16 %v1993
        %v2003 = vunpack.c.l.b16 %v1994
        %v2004 = vunpack.c.l.b16 %v1995
        %v2005 = vpack.c.b16 %v2002, %v2001
        %v2006 = vpack.c.b16 %v2004, %v2003
        %2010 = vrot.lane.b32.xlu0 %v1963, 96
        %v2011 = vpop.permute.xlu0 %2010
        %v2014 = vsel %vm308, %v1996, 0
        %2016 = vmatpush.bf16.msra.mxu0 0
        %2017 = vmatpush.bf16.msra.mxu0 0
        %2018 = vmatpush.bf16.msra.mxu0 0
        %2019 = vmatpush.bf16.msra.mxu0 0
        %2020 = vmatpush.bf16.msra.mxu0 0
        %2021 = vmatpush.bf16.msra.mxu0 0
        %2022 = vmatpush.bf16.msra.mxu0 %v2006
        %2023 = vmatpush.bf16.msra.mxu0 %v2005
        %2024 = vmatmul.bf16.gmra.mxu0 %v2014
        %v2025 = vpop.f32.mrf.mxu0
        %v2026 = vadd.f32 %v2011, %v2025
        %v2027 = vpop.f32.mrf.mxu0
        %v2028 = vadd.f32 %v2011, %v2027
        %2029 = vdwg.mxu0
        %v2030 = vpack.c.bf16 %v1989, %v1989
        %v2031 = vpack.c.bf16 %v2028, %v2026
        %v2033 = vsel %vm308, %v2030, 0
        %v2036 = vsel %vm308, %v2031, 0
        %2038 = vmatpush.bf16.xpose.msra.mxu0 0
        %2039 = vmatpush.bf16.xpose.msra.mxu0 0
        %2040 = vmatpush.bf16.xpose.msra.mxu0 0
        %2041 = vmatpush.bf16.xpose.msra.mxu0 0
        %2042 = vmatpush.bf16.xpose.msra.mxu0 0
        %2043 = vmatpush.bf16.xpose.msra.mxu0 0
        %2044 = vmatpush.bf16.xpose.msra.mxu0 0
        %2045 = vmatpush.bf16.xpose.msra.mxu0 %v2036
        %2046 = vmatmul.bf16.gmra.mxu0 %v2033
        %v2047 = vpop.f32.mrf.mxu0
        %v2048 = vadd.f32 0.0, %v2047
        %v2049 = vpop.f32.mrf.mxu0
        %2050 = vdwg.mxu0
        %v2051 = vmul.f32 %v2048, 0.17677669
        %v2052 = vsel %vm352, %v2051, -inf
        %2053 = vmax.xlane.f32.xlu0 %v2052
        %v2054 = vpop.xlane.xlu0 %2053
        %v2055 = vsub.f32 %v2051, %v2054
        %v2056 = vmul.f32 %v2055, 1.442695
        %v2057 = vpow.pop %v2056
        %v2058 = vsel %vm352, %v2057, 0.0
        %2059 = vadd.xlane.f32.xlu0 %v2058
        %v2060 = vpop.xlane.xlu0 %2059
        %v2061 = vrcp.pop %v2060
        %v2062 = vmul.f32 %v2057, %v2061
        %v2063 = vpack.c.bf16 %v2062, %v2062
        %2065 = vrot.lane.b32.xlu0 %v2031, 96
        %v2066 = vpop.permute.xlu0 %2065
        %v2069 = vsel %vm352, %v2063, 0
        %2071 = vmatpush.bf16.msra.mxu0 0
        %2072 = vmatpush.bf16.msra.mxu0 0
        %2073 = vmatpush.bf16.msra.mxu0 0
        %2074 = vmatpush.bf16.msra.mxu0 0
        %2075 = vmatpush.bf16.msra.mxu0 0
        %2076 = vmatpush.bf16.msra.mxu0 0
        %2077 = vmatpush.bf16.msra.mxu0 0
        %2078 = vmatpush.bf16.msra.mxu0 %v2066
        %2079 = vmatmul.bf16.gmra.mxu0 %v2069
        %v2080 = vpop.f32.mrf.mxu0
        %v2081 = vadd.f32 0.0, %v2080
        %v2082 = vpop.f32.mrf.mxu0
        %2083 = vdwg.mxu0
        %v2084 = vld [vmem:[#allocation5 + $0x1c] sm:$0xf]
        %v2085 = vld [vmem:[#allocation5 + $0x140] sm:$0xf]
        %v2086 = vld [vmem:[#allocation5 + $0x264] sm:$0xf]
        %v2087 = vld [vmem:[#allocation5 + $0x388] sm:$0xf]
        %v2088 = vpack.c.bf16 %v2081, %v2081
        %v2093 = vunpack.c.l.b16 %v2084
        %v2094 = vunpack.c.l.b16 %v2085
        %v2095 = vunpack.c.l.b16 %v2086
        %v2096 = vunpack.c.l.b16 %v2087
        %v2097 = vpack.c.b16 %v2094, %v2093
        %v2098 = vpack.c.b16 %v2096, %v2095
        %v2102 = vsel %vm308, %v2088, 0
        %2104 = vmatpush.bf16.msra.mxu0 0
        %2105 = vmatpush.bf16.msra.mxu0 0
        %2106 = vmatpush.bf16.msra.mxu0 0
        %2107 = vmatpush.bf16.msra.mxu0 0
        %2108 = vmatpush.bf16.msra.mxu0 0
        %2109 = vmatpush.bf16.msra.mxu0 0
        %2110 = vmatpush.bf16.msra.mxu0 %v2098
        %2111 = vmatpush.bf16.msra.mxu0 %v2097
        %2112 = vmatmul.bf16.gmra.mxu0 %v2102
        %v2113 = vpop.f32.mrf.mxu0
        %v2114 = vadd.f32 0.0, %v2113
        %v2115 = vpop.f32.mrf.mxu0
        %2116 = vdwg.mxu0
        %v2117 = vadd.f32 %v1956, %v2114
        %v2118 = vld [vmem:[#allocation8 + $0x4e] sm:$0x1]
        %v2119 = vperm.slane %v2118, 0
        %v2120 = vadd.f32 %v2117, %v2119
        %v2121 = vsel %vm308, %v2120, 0.0
        %2122 = vadd.xlane.f32.xlu0 %v2121
        %v2123 = vpop.xlane.xlu0 %2122
        %v2124 = vmul.f32 %v2123, %v448
        %v2125 = vsub.f32 %v2120, %v2124
        %v2126 = vmul.f32 %v2125, %v2125
        %v2127 = vsel %vm308, %v2126, 0.0
        %2128 = vadd.xlane.f32.xlu0 %v2127
        %v2129 = vpop.xlane.xlu0 %2128
        %v2130 = vmul.f32 %v2129, %v448
        %v2131 = vadd.f32 %v2130, 1e-05
        %v2132 = vrsqrt.pop %v2131
        %v2133 = vmul.f32 %v2132, %v2131
        %v2134 = vmul.f32 %v2133, %v2132
        %v2135 = vmul.f32 0.5, %v2134
        %v2136 = vsub.f32 1.5, %v2135
        %v2137 = vmul.f32 %v2132, %v2136
        %vm2138 = vweird.f32 %v2131
        %vm2139 = vweird.f32 %v2132
        %vm2140 = vmor %vm2138, %vm2139
        %v2141 = vsel %vm2140, %v2132, %v2137
        %v2142 = vmul.f32 %v2125, %v2141
        %v2143 = vld [vmem:[#allocation8 + $0x55] sm:$0x1]
        %v2144 = vperm.slane %v2143, 0
        %v2145 = vmul.f32 %v2142, %v2144
        %v2146 = vld [vmem:[#allocation8 + $0x56] sm:$0x1]
        %v2147 = vperm.slane %v2146, 0
        %v2148 = vadd.f32 %v2145, %v2147
        %v2149 = vpack.c.bf16 %v2148, %v2148
        %v2150 = vld [vmem:[#allocation5 + $0xa4] sm:$0xff]
        %v2151 = vld [vmem:[#allocation5 + $0xac] sm:$0xff]
        %v2152 = vld [vmem:[#allocation5 + $0x1c8] sm:$0xff]
        %v2153 = vld [vmem:[#allocation5 + $0x1d0] sm:$0xff]
        %v2154 = vld [vmem:[#allocation5 + $0x2ec] sm:$0xff]
        %v2155 = vld [vmem:[#allocation5 + $0x2f4] sm:$0xff]
        %v2156 = vld [vmem:[#allocation5 + $0x410] sm:$0xff]
        %v2157 = vld [vmem:[#allocation5 + $0x418] sm:$0xff]
        %v2166 = vunpack.c.l.b16 %v2150
        %v2167 = vunpack.c.h.b16 %v2150
        %v2168 = vunpack.c.l.b16 %v2151
        %v2169 = vunpack.c.h.b16 %v2151
        %v2170 = vunpack.c.l.b16 %v2152
        %v2171 = vunpack.c.h.b16 %v2152
        %v2172 = vunpack.c.l.b16 %v2153
        %v2173 = vunpack.c.h.b16 %v2153
        %v2174 = vunpack.c.l.b16 %v2154
        %v2175 = vunpack.c.h.b16 %v2154
        %v2176 = vunpack.c.l.b16 %v2155
        %v2177 = vunpack.c.h.b16 %v2155
        %v2178 = vunpack.c.l.b16 %v2156
        %v2179 = vunpack.c.h.b16 %v2156
        %v2180 = vunpack.c.l.b16 %v2157
        %v2181 = vunpack.c.h.b16 %v2157
        %v2182 = vpack.c.b16 %v2170, %v2166
        %v2183 = vpack.c.b16 %v2171, %v2167
        %v2184 = vpack.c.b16 %v2172, %v2168
        %v2185 = vpack.c.b16 %v2173, %v2169
        %v2186 = vpack.c.b16 %v2178, %v2174
        %v2187 = vpack.c.b16 %v2179, %v2175
        %v2188 = vpack.c.b16 %v2180, %v2176
        %v2189 = vpack.c.b16 %v2181, %v2177
        %v2199 = vsel %vm308, %v2149, 0
        %2201 = vmatpush.bf16.msra.mxu0 0
        %2202 = vmatpush.bf16.msra.mxu0 0
        %2203 = vmatpush.bf16.msra.mxu0 0
        %2204 = vmatpush.bf16.msra.mxu0 0
        %2205 = vmatpush.bf16.msra.mxu0 0
        %2206 = vmatpush.bf16.msra.mxu0 0
        %2207 = vmatpush.bf16.msra.mxu0 %v2186
        %2208 = vmatpush.bf16.msra.mxu0 %v2182
        %2209 = vmatmul.bf16.gmra.mxu0 %v2199
        %v2210 = vpop.f32.mrf.mxu0
        %v2211 = vadd.f32 0.0, %v2210
        %v2212 = vpop.f32.mrf.mxu0
        %2213 = vdwg.mxu0
        %2214 = vmatpush.bf16.msra.mxu0 0
        %2215 = vmatpush.bf16.msra.mxu0 0
        %2216 = vmatpush.bf16.msra.mxu0 0
        %2217 = vmatpush.bf16.msra.mxu0 0
        %2218 = vmatpush.bf16.msra.mxu0 0
        %2219 = vmatpush.bf16.msra.mxu0 0
        %2220 = vmatpush.bf16.msra.mxu0 %v2187
        %2221 = vmatpush.bf16.msra.mxu0 %v2183
        %2222 = vmatmul.bf16.gmra.mxu0 %v2199
        %v2223 = vpop.f32.mrf.mxu0
        %v2224 = vadd.f32 0.0, %v2223
        %v2225 = vpop.f32.mrf.mxu0
        %2226 = vdwg.mxu0
        %2227 = vmatpush.bf16.msra.mxu0 0
        %2228 = vmatpush.bf16.msra.mxu0 0
        %2229 = vmatpush.bf16.msra.mxu0 0
        %2230 = vmatpush.bf16.msra.mxu0 0
        %2231 = vmatpush.bf16.msra.mxu0 0
        %2232 = vmatpush.bf16.msra.mxu0 0
        %2233 = vmatpush.bf16.msra.mxu0 %v2188
        %2234 = vmatpush.bf16.msra.mxu0 %v2184
        %2235 = vmatmul.bf16.gmra.mxu0 %v2199
        %v2236 = vpop.f32.mrf.mxu0
        %v2237 = vadd.f32 0.0, %v2236
        %v2238 = vpop.f32.mrf.mxu0
        %2239 = vdwg.mxu0
        %2240 = vmatpush.bf16.msra.mxu0 0
        %2241 = vmatpush.bf16.msra.mxu0 0
        %2242 = vmatpush.bf16.msra.mxu0 0
        %2243 = vmatpush.bf16.msra.mxu0 0
        %2244 = vmatpush.bf16.msra.mxu0 0
        %2245 = vmatpush.bf16.msra.mxu0 0
        %2246 = vmatpush.bf16.msra.mxu0 %v2189
        %2247 = vmatpush.bf16.msra.mxu0 %v2185
        %2248 = vmatmul.bf16.gmra.mxu0 %v2199
        %v2249 = vpop.f32.mrf.mxu0
        %v2250 = vadd.f32 0.0, %v2249
        %v2251 = vpop.f32.mrf.mxu0
        %2252 = vdwg.mxu0
        %v2253 = vpack.c.bf16 %v2224, %v2211
        %v2254 = vpack.c.bf16 %v2250, %v2237
        %s2255 = scalar_lea.vmem %s4, 1
        %v2256 = vld [vmem:[%s2255] ss:$2 sm:$0xf]
        %v2258 = vperm.slane %v2256, 0
        %v2259 = vperm.slane %v2256, 1
        %v2260 = vperm.slane %v2256, 2
        %v2261 = vperm.slane %v2256, 3
        %v2266 = vpack.c.bf16 %v2259, %v2258
        %v2267 = vpack.c.bf16 %v2261, %v2260
        %v2270 = vunpack.c.l.b16 %v2266
        %v2271 = vunpack.c.h.b16 %v2266
        %v2272 = vunpack.c.l.b16 %v2267
        %v2273 = vunpack.c.h.b16 %v2267
        %v2274 = vpack.c.b16 %v2270, %v2270
        %v2275 = vpack.c.b16 %v2271, %v2271
        %v2276 = vpack.c.b16 %v2272, %v2272
        %v2277 = vpack.c.b16 %v2273, %v2273
        %v2279 = vpack.i.b16 %v2274, %v2274
        %v2281 = vperm.slane %v2279, 0
        %v2283 = vpack.i.b16 %v2275, %v2275
        %v2285 = vperm.slane %v2283, 0
        %v2287 = vpack.i.b16 %v2276, %v2276
        %v2289 = vperm.slane %v2287, 0
        %v2291 = vpack.i.b16 %v2277, %v2277
        %v2293 = vperm.slane %v2291, 0
        %v2294 = vunpack.c.l.bf16 %v2253
        %v2295 = vunpack.c.h.bf16 %v2253
        %v2296 = vunpack.c.l.bf16 %v2254
        %v2297 = vunpack.c.h.bf16 %v2254
        %v2298 = vunpack.c.l.bf16 %v2281
        %v2299 = vunpack.c.l.bf16 %v2285
        %v2300 = vunpack.c.l.bf16 %v2289
        %v2301 = vunpack.c.l.bf16 %v2293
        %v2302 = vadd.f32 %v2294, %v2298
        %v2303 = vadd.f32 %v2295, %v2299
        %v2304 = vadd.f32 %v2296, %v2300
        %v2305 = vadd.f32 %v2297, %v2301
        %v2306 = vpack.c.bf16 %v2303, %v2302
        %v2307 = vpack.c.bf16 %v2305, %v2304
        %v2308 = vunpack.c.l.bf16 %v2306
        %v2309 = vunpack.c.h.bf16 %v2306
        %v2310 = vunpack.c.l.bf16 %v2307
        %v2311 = vunpack.c.h.bf16 %v2307
        %v2312 = vmax.f32 %v2308, 0.0
        %v2313 = vmax.f32 %v2309, 0.0
        %v2314 = vmax.f32 %v2310, 0.0
        %v2315 = vmax.f32 %v2311, 0.0
        %v2316 = vpack.c.bf16 %v2312, %v2312
        %v2317 = vpack.c.bf16 %v2313, %v2313
        %v2318 = vpack.c.bf16 %v2314, %v2314
        %v2319 = vpack.c.bf16 %v2315, %v2315
        %v2320 = vld [vmem:[#allocation5 + $0xe4] sm:$0xff]
        %v2321 = vld [vmem:[#allocation5 + $0xec] sm:$0xff]
        %v2322 = vld [vmem:[#allocation5 + $0x208] sm:$0xff]
        %v2323 = vld [vmem:[#allocation5 + $0x210] sm:$0xff]
        %v2324 = vld [vmem:[#allocation5 + $0x32c] sm:$0xff]
        %v2325 = vld [vmem:[#allocation5 + $0x334] sm:$0xff]
        %v2326 = vld [vmem:[#allocation5 + $0x450] sm:$0xff]
        %v2327 = vld [vmem:[#allocation5 + $0x458] sm:$0xff]
        %v2328 = vld [vmem:[#allocation5 + $0xb4] sm:$0xff]
        %v2329 = vld [vmem:[#allocation5 + $0xbc] sm:$0xff]
        %v2330 = vld [vmem:[#allocation5 + $0x1d8] sm:$0xff]
        %v2331 = vld [vmem:[#allocation5 + $0x1e0] sm:$0xff]
        %v2332 = vld [vmem:[#allocation5 + $0x2fc] sm:$0xff]
        %v2333 = vld [vmem:[#allocation5 + $0x304] sm:$0xff]
        %v2334 = vld [vmem:[#allocation5 + $0x420] sm:$0xff]
        %v2335 = vld [vmem:[#allocation5 + $0x428] sm:$0xff]
        %v2344 = vunpack.c.l.b16 %v2328
        %v2345 = vunpack.c.h.b16 %v2328
        %v2346 = vunpack.c.l.b16 %v2329
        %v2347 = vunpack.c.h.b16 %v2329
        %v2348 = vunpack.c.l.b16 %v2330
        %v2349 = vunpack.c.h.b16 %v2330
        %v2350 = vunpack.c.l.b16 %v2331
        %v2351 = vunpack.c.h.b16 %v2331
        %v2352 = vunpack.c.l.b16 %v2332
        %v2353 = vunpack.c.h.b16 %v2332
        %v2354 = vunpack.c.l.b16 %v2333
        %v2355 = vunpack.c.h.b16 %v2333
        %v2356 = vunpack.c.l.b16 %v2334
        %v2357 = vunpack.c.h.b16 %v2334
        %v2358 = vunpack.c.l.b16 %v2335
        %v2359 = vunpack.c.h.b16 %v2335
        %v2360 = vpack.c.b16 %v2348, %v2344
        %v2361 = vpack.c.b16 %v2349, %v2345
        %v2362 = vpack.c.b16 %v2350, %v2346
        %v2363 = vpack.c.b16 %v2351, %v2347
        %v2364 = vpack.c.b16 %v2356, %v2352
        %v2365 = vpack.c.b16 %v2357, %v2353
        %v2366 = vpack.c.b16 %v2358, %v2354
        %v2367 = vpack.c.b16 %v2359, %v2355
        %2376 = vmatpush.bf16.msra.mxu0 0
        %2377 = vmatpush.bf16.msra.mxu0 0
        %2378 = vmatpush.bf16.msra.mxu0 0
        %2379 = vmatpush.bf16.msra.mxu0 0
        %2380 = vmatpush.bf16.msra.mxu0 0
        %2381 = vmatpush.bf16.msra.mxu0 0
        %2382 = vmatpush.bf16.msra.mxu0 %v2364
        %2383 = vmatpush.bf16.msra.mxu0 %v2360
        %2384 = vmatmul.bf16.gmra.mxu0 %v2199
        %v2385 = vpop.f32.mrf.mxu0
        %v2386 = vadd.f32 0.0, %v2385
        %v2387 = vpop.f32.mrf.mxu0
        %2388 = vdwg.mxu0
        %2389 = vmatpush.bf16.msra.mxu0 0
        %2390 = vmatpush.bf16.msra.mxu0 0
        %2391 = vmatpush.bf16.msra.mxu0 0
        %2392 = vmatpush.bf16.msra.mxu0 0
        %2393 = vmatpush.bf16.msra.mxu0 0
        %2394 = vmatpush.bf16.msra.mxu0 0
        %2395 = vmatpush.bf16.msra.mxu0 %v2365
        %2396 = vmatpush.bf16.msra.mxu0 %v2361
        %2397 = vmatmul.bf16.gmra.mxu0 %v2199
        %v2398 = vpop.f32.mrf.mxu0
        %v2399 = vadd.f32 0.0, %v2398
        %v2400 = vpop.f32.mrf.mxu0
        %2401 = vdwg.mxu0
        %2402 = vmatpush.bf16.msra.mxu0 0
        %2403 = vmatpush.bf16.msra.mxu0 0
        %2404 = vmatpush.bf16.msra.mxu0 0
        %2405 = vmatpush.bf16.msra.mxu0 0
        %2406 = vmatpush.bf16.msra.mxu0 0
        %2407 = vmatpush.bf16.msra.mxu0 0
        %2408 = vmatpush.bf16.msra.mxu0 %v2366
        %2409 = vmatpush.bf16.msra.mxu0 %v2362
        %2410 = vmatmul.bf16.gmra.mxu0 %v2199
        %v2411 = vpop.f32.mrf.mxu0
        %v2412 = vadd.f32 0.0, %v2411
        %v2413 = vpop.f32.mrf.mxu0
        %2414 = vdwg.mxu0
        %2415 = vmatpush.bf16.msra.mxu0 0
        %2416 = vmatpush.bf16.msra.mxu0 0
        %2417 = vmatpush.bf16.msra.mxu0 0
        %2418 = vmatpush.bf16.msra.mxu0 0
        %2419 = vmatpush.bf16.msra.mxu0 0
        %2420 = vmatpush.bf16.msra.mxu0 0
        %2421 = vmatpush.bf16.msra.mxu0 %v2367
        %2422 = vmatpush.bf16.msra.mxu0 %v2363
        %2423 = vmatmul.bf16.gmra.mxu0 %v2199
        %v2424 = vpop.f32.mrf.mxu0
        %v2425 = vadd.f32 0.0, %v2424
        %v2426 = vpop.f32.mrf.mxu0
        %2427 = vdwg.mxu0
        %v2428 = vpack.c.bf16 %v2399, %v2386
        %v2429 = vpack.c.bf16 %v2425, %v2412
        %s2430 = scalar_lea.vmem %s4, 9
        %v2431 = vld [vmem:[%s2430] ss:$2 sm:$0xf]
        %v2433 = vperm.slane %v2431, 0
        %v2434 = vperm.slane %v2431, 1
        %v2435 = vperm.slane %v2431, 2
        %v2436 = vperm.slane %v2431, 3
        %v2441 = vpack.c.bf16 %v2434, %v2433
        %v2442 = vpack.c.bf16 %v2436, %v2435
        %v2445 = vunpack.c.l.b16 %v2441
        %v2446 = vunpack.c.h.b16 %v2441
        %v2447 = vunpack.c.l.b16 %v2442
        %v2448 = vunpack.c.h.b16 %v2442
        %v2449 = vpack.c.b16 %v2445, %v2445
        %v2450 = vpack.c.b16 %v2446, %v2446
        %v2451 = vpack.c.b16 %v2447, %v2447
        %v2452 = vpack.c.b16 %v2448, %v2448
        %v2454 = vpack.i.b16 %v2449, %v2449
        %v2456 = vperm.slane %v2454, 0
        %v2458 = vpack.i.b16 %v2450, %v2450
        %v2460 = vperm.slane %v2458, 0
        %v2462 = vpack.i.b16 %v2451, %v2451
        %v2464 = vperm.slane %v2462, 0
        %v2466 = vpack.i.b16 %v2452, %v2452
        %v2468 = vperm.slane %v2466, 0
        %v2469 = vunpack.c.l.bf16 %v2428
        %v2470 = vunpack.c.h.bf16 %v2428
        %v2471 = vunpack.c.l.bf16 %v2429
        %v2472 = vunpack.c.h.bf16 %v2429
        %v2473 = vunpack.c.l.bf16 %v2456
        %v2474 = vunpack.c.l.bf16 %v2460
        %v2475 = vunpack.c.l.bf16 %v2464
        %v2476 = vunpack.c.l.bf16 %v2468
        %v2477 = vadd.f32 %v2469, %v2473
        %v2478 = vadd.f32 %v2470, %v2474
        %v2479 = vadd.f32 %v2471, %v2475
        %v2480 = vadd.f32 %v2472, %v2476
        %v2481 = vpack.c.bf16 %v2478, %v2477
        %v2482 = vpack.c.bf16 %v2480, %v2479
        %v2483 = vunpack.c.l.bf16 %v2481
        %v2484 = vunpack.c.h.bf16 %v2481
        %v2485 = vunpack.c.l.bf16 %v2482
        %v2486 = vunpack.c.h.bf16 %v2482
        %v2487 = vmax.f32 %v2483, 0.0
        %v2488 = vmax.f32 %v2484, 0.0
        %v2489 = vmax.f32 %v2485, 0.0
        %v2490 = vmax.f32 %v2486, 0.0
        %v2491 = vpack.c.bf16 %v2487, %v2487
        %v2492 = vpack.c.bf16 %v2488, %v2488
        %v2493 = vpack.c.bf16 %v2489, %v2489
        %v2494 = vpack.c.bf16 %v2490, %v2490
        %v2495 = vld [vmem:[#allocation5 + $0xf4] sm:$0xff]
        %v2496 = vld [vmem:[#allocation5 + $0xfc] sm:$0xff]
        %v2497 = vld [vmem:[#allocation5 + $0x218] sm:$0xff]
        %v2498 = vld [vmem:[#allocation5 + $0x220] sm:$0xff]
        %v2499 = vld [vmem:[#allocation5 + $0x33c] sm:$0xff]
        %v2500 = vld [vmem:[#allocation5 + $0x344] sm:$0xff]
        %v2501 = vld [vmem:[#allocation5 + $0x460] sm:$0xff]
        %v2502 = vld [vmem:[#allocation5 + $0x468] sm:$0xff]
        %v2511 = vunpack.c.l.b16 %v2495
        %v2512 = vunpack.c.h.b16 %v2495
        %v2513 = vunpack.c.l.b16 %v2496
        %v2514 = vunpack.c.h.b16 %v2496
        %v2515 = vunpack.c.l.b16 %v2497
        %v2516 = vunpack.c.h.b16 %v2497
        %v2517 = vunpack.c.l.b16 %v2498
        %v2518 = vunpack.c.h.b16 %v2498
        %v2519 = vunpack.c.l.b16 %v2499
        %v2520 = vunpack.c.h.b16 %v2499
        %v2521 = vunpack.c.l.b16 %v2500
        %v2522 = vunpack.c.h.b16 %v2500
        %v2523 = vunpack.c.l.b16 %v2501
        %v2524 = vunpack.c.h.b16 %v2501
        %v2525 = vunpack.c.l.b16 %v2502
        %v2526 = vunpack.c.h.b16 %v2502
        %v2527 = vpack.c.b16 %v2515, %v2511
        %v2528 = vpack.c.b16 %v2516, %v2512
        %v2529 = vpack.c.b16 %v2517, %v2513
        %v2530 = vpack.c.b16 %v2518, %v2514
        %v2531 = vpack.c.b16 %v2523, %v2519
        %v2532 = vpack.c.b16 %v2524, %v2520
        %v2533 = vpack.c.b16 %v2525, %v2521
        %v2534 = vpack.c.b16 %v2526, %v2522
        %2543 = vmatpush.bf16.xpose.msra.mxu0 0
        %2544 = vmatpush.bf16.xpose.msra.mxu0 0
        %2545 = vmatpush.bf16.xpose.msra.mxu0 0
        %2546 = vmatpush.bf16.xpose.msra.mxu0 0
        %2547 = vmatpush.bf16.xpose.msra.mxu0 0
        %2548 = vmatpush.bf16.xpose.msra.mxu0 0
        %2549 = vmatpush.bf16.xpose.msra.mxu0 %v2531
        %2550 = vmatpush.bf16.xpose.msra.mxu0 %v2527
        %2551 = vmatmul.bf16.gmra.mxu0 %v2491
        %v2552 = vpop.f32.mrf.mxu0
        %v2553 = vadd.f32 0.0, %v2552
        %v2554 = vpop.f32.mrf.mxu0
        %2555 = vdwg.mxu0
        %2556 = vmatpush.bf16.xpose.msra.mxu0 0
        %2557 = vmatpush.bf16.xpose.msra.mxu0 0
        %2558 = vmatpush.bf16.xpose.msra.mxu0 0
        %2559 = vmatpush.bf16.xpose.msra.mxu0 0
        %2560 = vmatpush.bf16.xpose.msra.mxu0 0
        %2561 = vmatpush.bf16.xpose.msra.mxu0 0
        %2562 = vmatpush.bf16.xpose.msra.mxu0 %v2532
        %2563 = vmatpush.bf16.xpose.msra.mxu0 %v2528
        %2564 = vmatmul.bf16.gmra.mxu0 %v2492
        %v2565 = vpop.f32.mrf.mxu0
        %v2566 = vadd.f32 %v2553, %v2565
        %v2567 = vpop.f32.mrf.mxu0
        %2568 = vdwg.mxu0
        %2569 = vmatpush.bf16.xpose.msra.mxu0 0
        %2570 = vmatpush.bf16.xpose.msra.mxu0 0
        %2571 = vmatpush.bf16.xpose.msra.mxu0 0
        %2572 = vmatpush.bf16.xpose.msra.mxu0 0
        %2573 = vmatpush.bf16.xpose.msra.mxu0 0
        %2574 = vmatpush.bf16.xpose.msra.mxu0 0
        %2575 = vmatpush.bf16.xpose.msra.mxu0 %v2533
        %2576 = vmatpush.bf16.xpose.msra.mxu0 %v2529
        %2577 = vmatmul.bf16.gmra.mxu0 %v2493
        %v2578 = vpop.f32.mrf.mxu0
        %v2579 = vadd.f32 %v2566, %v2578
        %v2580 = vpop.f32.mrf.mxu0
        %2581 = vdwg.mxu0
        %2582 = vmatpush.bf16.xpose.msra.mxu0 0
        %2583 = vmatpush.bf16.xpose.msra.mxu0 0
        %2584 = vmatpush.bf16.xpose.msra.mxu0 0
        %2585 = vmatpush.bf16.xpose.msra.mxu0 0
        %2586 = vmatpush.bf16.xpose.msra.mxu0 0
        %2587 = vmatpush.bf16.xpose.msra.mxu0 0
        %2588 = vmatpush.bf16.xpose.msra.mxu0 %v2534
        %2589 = vmatpush.bf16.xpose.msra.mxu0 %v2530
        %2590 = vmatmul.bf16.gmra.mxu0 %v2494
        %v2591 = vpop.f32.mrf.mxu0
        %v2592 = vadd.f32 %v2579, %v2591
        %v2593 = vpop.f32.mrf.mxu0
        %2594 = vdwg.mxu0
        %v2603 = vunpack.c.l.b16 %v2320
        %v2604 = vunpack.c.h.b16 %v2320
        %v2605 = vunpack.c.l.b16 %v2321
        %v2606 = vunpack.c.h.b16 %v2321
        %v2607 = vunpack.c.l.b16 %v2322
        %v2608 = vunpack.c.h.b16 %v2322
        %v2609 = vunpack.c.l.b16 %v2323
        %v2610 = vunpack.c.h.b16 %v2323
        %v2611 = vunpack.c.l.b16 %v2324
        %v2612 = vunpack.c.h.b16 %v2324
        %v2613 = vunpack.c.l.b16 %v2325
        %v2614 = vunpack.c.h.b16 %v2325
        %v2615 = vunpack.c.l.b16 %v2326
        %v2616 = vunpack.c.h.b16 %v2326
        %v2617 = vunpack.c.l.b16 %v2327
        %v2618 = vunpack.c.h.b16 %v2327
        %v2619 = vpack.c.b16 %v2607, %v2603
        %v2620 = vpack.c.b16 %v2608, %v2604
        %v2621 = vpack.c.b16 %v2609, %v2605
        %v2622 = vpack.c.b16 %v2610, %v2606
        %v2623 = vpack.c.b16 %v2615, %v2611
        %v2624 = vpack.c.b16 %v2616, %v2612
        %v2625 = vpack.c.b16 %v2617, %v2613
        %v2626 = vpack.c.b16 %v2618, %v2614
        %2635 = vmatpush.bf16.xpose.msra.mxu0 0
        %2636 = vmatpush.bf16.xpose.msra.mxu0 0
        %2637 = vmatpush.bf16.xpose.msra.mxu0 0
        %2638 = vmatpush.bf16.xpose.msra.mxu0 0
        %2639 = vmatpush.bf16.xpose.msra.mxu0 0
        %2640 = vmatpush.bf16.xpose.msra.mxu0 0
        %2641 = vmatpush.bf16.xpose.msra.mxu0 %v2623
        %2642 = vmatpush.bf16.xpose.msra.mxu0 %v2619
        %2643 = vmatmul.bf16.gmra.mxu0 %v2316
        %v2644 = vpop.f32.mrf.mxu0
        %v2645 = vadd.f32 %v2592, %v2644
        %v2646 = vpop.f32.mrf.mxu0
        %2647 = vdwg.mxu0
        %2648 = vmatpush.bf16.xpose.msra.mxu0 0
        %2649 = vmatpush.bf16.xpose.msra.mxu0 0
        %2650 = vmatpush.bf16.xpose.msra.mxu0 0
        %2651 = vmatpush.bf16.xpose.msra.mxu0 0
        %2652 = vmatpush.bf16.xpose.msra.mxu0 0
        %2653 = vmatpush.bf16.xpose.msra.mxu0 0
        %2654 = vmatpush.bf16.xpose.msra.mxu0 %v2624
        %2655 = vmatpush.bf16.xpose.msra.mxu0 %v2620
        %2656 = vmatmul.bf16.gmra.mxu0 %v2317
        %v2657 = vpop.f32.mrf.mxu0
        %v2658 = vadd.f32 %v2645, %v2657
        %v2659 = vpop.f32.mrf.mxu0
        %2660 = vdwg.mxu0
        %2661 = vmatpush.bf16.xpose.msra.mxu0 0
        %2662 = vmatpush.bf16.xpose.msra.mxu0 0
        %2663 = vmatpush.bf16.xpose.msra.mxu0 0
        %2664 = vmatpush.bf16.xpose.msra.mxu0 0
        %2665 = vmatpush.bf16.xpose.msra.mxu0 0
        %2666 = vmatpush.bf16.xpose.msra.mxu0 0
        %2667 = vmatpush.bf16.xpose.msra.mxu0 %v2625
        %2668 = vmatpush.bf16.xpose.msra.mxu0 %v2621
        %2669 = vmatmul.bf16.gmra.mxu0 %v2318
        %v2670 = vpop.f32.mrf.mxu0
        %v2671 = vadd.f32 %v2658, %v2670
        %v2672 = vpop.f32.mrf.mxu0
        %2673 = vdwg.mxu0
        %2674 = vmatpush.bf16.xpose.msra.mxu0 0
        %2675 = vmatpush.bf16.xpose.msra.mxu0 0
        %2676 = vmatpush.bf16.xpose.msra.mxu0 0
        %2677 = vmatpush.bf16.xpose.msra.mxu0 0
        %2678 = vmatpush.bf16.xpose.msra.mxu0 0
        %2679 = vmatpush.bf16.xpose.msra.mxu0 0
        %2680 = vmatpush.bf16.xpose.msra.mxu0 %v2626
        %2681 = vmatpush.bf16.xpose.msra.mxu0 %v2622
        %2682 = vmatmul.bf16.gmra.mxu0 %v2319
        %v2683 = vpop.f32.mrf.mxu0
        %v2684 = vadd.f32 %v2671, %v2683
        %v2685 = vpop.f32.mrf.mxu0
        %2686 = vdwg.mxu0
        %v2687 = vld [vmem:[#allocation5 + $0xc4] sm:$0xff]
        %v2688 = vld [vmem:[#allocation5 + $0xcc] sm:$0xff]
        %v2689 = vld [vmem:[#allocation5 + $0x1e8] sm:$0xff]
        %v2690 = vld [vmem:[#allocation5 + $0x1f0] sm:$0xff]
        %v2691 = vld [vmem:[#allocation5 + $0x30c] sm:$0xff]
        %v2692 = vld [vmem:[#allocation5 + $0x314] sm:$0xff]
        %v2693 = vld [vmem:[#allocation5 + $0x430] sm:$0xff]
        %v2694 = vld [vmem:[#allocation5 + $0x438] sm:$0xff]
        %v2703 = vunpack.c.l.b16 %v2687
        %v2704 = vunpack.c.h.b16 %v2687
        %v2705 = vunpack.c.l.b16 %v2688
        %v2706 = vunpack.c.h.b16 %v2688
        %v2707 = vunpack.c.l.b16 %v2689
        %v2708 = vunpack.c.h.b16 %v2689
        %v2709 = vunpack.c.l.b16 %v2690
        %v2710 = vunpack.c.h.b16 %v2690
        %v2711 = vunpack.c.l.b16 %v2691
        %v2712 = vunpack.c.h.b16 %v2691
        %v2713 = vunpack.c.l.b16 %v2692
        %v2714 = vunpack.c.h.b16 %v2692
        %v2715 = vunpack.c.l.b16 %v2693
        %v2716 = vunpack.c.h.b16 %v2693
        %v2717 = vunpack.c.l.b16 %v2694
        %v2718 = vunpack.c.h.b16 %v2694
        %v2719 = vpack.c.b16 %v2707, %v2703
        %v2720 = vpack.c.b16 %v2708, %v2704
        %v2721 = vpack.c.b16 %v2709, %v2705
        %v2722 = vpack.c.b16 %v2710, %v2706
        %v2723 = vpack.c.b16 %v2715, %v2711
        %v2724 = vpack.c.b16 %v2716, %v2712
        %v2725 = vpack.c.b16 %v2717, %v2713
        %v2726 = vpack.c.b16 %v2718, %v2714
        %2735 = vmatpush.bf16.msra.mxu0 0
        %2736 = vmatpush.bf16.msra.mxu0 0
        %2737 = vmatpush.bf16.msra.mxu0 0
        %2738 = vmatpush.bf16.msra.mxu0 0
        %2739 = vmatpush.bf16.msra.mxu0 0
        %2740 = vmatpush.bf16.msra.mxu0 0
        %2741 = vmatpush.bf16.msra.mxu0 %v2723
        %2742 = vmatpush.bf16.msra.mxu0 %v2719
        %2743 = vmatmul.bf16.gmra.mxu0 %v2199
        %v2744 = vpop.f32.mrf.mxu0
        %v2745 = vadd.f32 0.0, %v2744
        %v2746 = vpop.f32.mrf.mxu0
        %2747 = vdwg.mxu0
        %2748 = vmatpush.bf16.msra.mxu0 0
        %2749 = vmatpush.bf16.msra.mxu0 0
        %2750 = vmatpush.bf16.msra.mxu0 0
        %2751 = vmatpush.bf16.msra.mxu0 0
        %2752 = vmatpush.bf16.msra.mxu0 0
        %2753 = vmatpush.bf16.msra.mxu0 0
        %2754 = vmatpush.bf16.msra.mxu0 %v2724
        %2755 = vmatpush.bf16.msra.mxu0 %v2720
        %2756 = vmatmul.bf16.gmra.mxu0 %v2199
        %v2757 = vpop.f32.mrf.mxu0
        %v2758 = vadd.f32 0.0, %v2757
        %v2759 = vpop.f32.mrf.mxu0
        %2760 = vdwg.mxu0
        %2761 = vmatpush.bf16.msra.mxu0 0
        %2762 = vmatpush.bf16.msra.mxu0 0
        %2763 = vmatpush.bf16.msra.mxu0 0
        %2764 = vmatpush.bf16.msra.mxu0 0
        %2765 = vmatpush.bf16.msra.mxu0 0
        %2766 = vmatpush.bf16.msra.mxu0 0
        %2767 = vmatpush.bf16.msra.mxu0 %v2725
        %2768 = vmatpush.bf16.msra.mxu0 %v2721
        %2769 = vmatmul.bf16.gmra.mxu0 %v2199
        %v2770 = vpop.f32.mrf.mxu0
        %v2771 = vadd.f32 0.0, %v2770
        %v2772 = vpop.f32.mrf.mxu0
        %2773 = vdwg.mxu0
        %2774 = vmatpush.bf16.msra.mxu0 0
        %2775 = vmatpush.bf16.msra.mxu0 0
        %2776 = vmatpush.bf16.msra.mxu0 0
        %2777 = vmatpush.bf16.msra.mxu0 0
        %2778 = vmatpush.bf16.msra.mxu0 0
        %2779 = vmatpush.bf16.msra.mxu0 0
        %2780 = vmatpush.bf16.msra.mxu0 %v2726
        %2781 = vmatpush.bf16.msra.mxu0 %v2722
        %2782 = vmatmul.bf16.gmra.mxu0 %v2199
        %v2783 = vpop.f32.mrf.mxu0
        %v2784 = vadd.f32 0.0, %v2783
        %v2785 = vpop.f32.mrf.mxu0
        %2786 = vdwg.mxu0
        %v2787 = vpack.c.bf16 %v2758, %v2745
        %v2788 = vpack.c.bf16 %v2784, %v2771
        %s2789 = scalar_lea.vmem %s4, 17
        %v2790 = vld [vmem:[%s2789] ss:$2 sm:$0xf]
        %v2792 = vperm.slane %v2790, 0
        %v2793 = vperm.slane %v2790, 1
        %v2794 = vperm.slane %v2790, 2
        %v2795 = vperm.slane %v2790, 3
        %v2800 = vpack.c.bf16 %v2793, %v2792
        %v2801 = vpack.c.bf16 %v2795, %v2794
        %v2804 = vunpack.c.l.b16 %v2800
        %v2805 = vunpack.c.h.b16 %v2800
        %v2806 = vunpack.c.l.b16 %v2801
        %v2807 = vunpack.c.h.b16 %v2801
        %v2808 = vpack.c.b16 %v2804, %v2804
        %v2809 = vpack.c.b16 %v2805, %v2805
        %v2810 = vpack.c.b16 %v2806, %v2806
        %v2811 = vpack.c.b16 %v2807, %v2807
        %v2813 = vpack.i.b16 %v2808, %v2808
        %v2815 = vperm.slane %v2813, 0
        %v2817 = vpack.i.b16 %v2809, %v2809
        %v2819 = vperm.slane %v2817, 0
        %v2821 = vpack.i.b16 %v2810, %v2810
        %v2823 = vperm.slane %v2821, 0
        %v2825 = vpack.i.b16 %v2811, %v2811
        %v2827 = vperm.slane %v2825, 0
        %v2828 = vunpack.c.l.bf16 %v2787
        %v2829 = vunpack.c.h.bf16 %v2787
        %v2830 = vunpack.c.l.bf16 %v2788
        %v2831 = vunpack.c.h.bf16 %v2788
        %v2832 = vunpack.c.l.bf16 %v2815
        %v2833 = vunpack.c.l.bf16 %v2819
        %v2834 = vunpack.c.l.bf16 %v2823
        %v2835 = vunpack.c.l.bf16 %v2827
        %v2836 = vadd.f32 %v2828, %v2832
        %v2837 = vadd.f32 %v2829, %v2833
        %v2838 = vadd.f32 %v2830, %v2834
        %v2839 = vadd.f32 %v2831, %v2835
        %v2840 = vpack.c.bf16 %v2837, %v2836
        %v2841 = vpack.c.bf16 %v2839, %v2838
        %v2842 = vunpack.c.l.bf16 %v2840
        %v2843 = vunpack.c.h.bf16 %v2840
        %v2844 = vunpack.c.l.bf16 %v2841
        %v2845 = vunpack.c.h.bf16 %v2841
        %v2846 = vmax.f32 %v2842, 0.0
        %v2847 = vmax.f32 %v2843, 0.0
        %v2848 = vmax.f32 %v2844, 0.0
        %v2849 = vmax.f32 %v2845, 0.0
        %v2850 = vpack.c.bf16 %v2846, %v2846
        %v2851 = vpack.c.bf16 %v2847, %v2847
        %v2852 = vpack.c.bf16 %v2848, %v2848
        %v2853 = vpack.c.bf16 %v2849, %v2849
        %v2854 = vld [vmem:[#allocation5 + $0x104] sm:$0xff]
        %v2855 = vld [vmem:[#allocation5 + $0x10c] sm:$0xff]
        %v2856 = vld [vmem:[#allocation5 + $0x228] sm:$0xff]
        %v2857 = vld [vmem:[#allocation5 + $0x230] sm:$0xff]
        %v2858 = vld [vmem:[#allocation5 + $0x34c] sm:$0xff]
        %v2859 = vld [vmem:[#allocation5 + $0x354] sm:$0xff]
        %v2860 = vld [vmem:[#allocation5 + $0x470] sm:$0xff]
        %v2861 = vld [vmem:[#allocation5 + $0x478] sm:$0xff]
        %v2870 = vunpack.c.l.b16 %v2854
        %v2871 = vunpack.c.h.b16 %v2854
        %v2872 = vunpack.c.l.b16 %v2855
        %v2873 = vunpack.c.h.b16 %v2855
        %v2874 = vunpack.c.l.b16 %v2856
        %v2875 = vunpack.c.h.b16 %v2856
        %v2876 = vunpack.c.l.b16 %v2857
        %v2877 = vunpack.c.h.b16 %v2857
        %v2878 = vunpack.c.l.b16 %v2858
        %v2879 = vunpack.c.h.b16 %v2858
        %v2880 = vunpack.c.l.b16 %v2859
        %v2881 = vunpack.c.h.b16 %v2859
        %v2882 = vunpack.c.l.b16 %v2860
        %v2883 = vunpack.c.h.b16 %v2860
        %v2884 = vunpack.c.l.b16 %v2861
        %v2885 = vunpack.c.h.b16 %v2861
        %v2886 = vpack.c.b16 %v2874, %v2870
        %v2887 = vpack.c.b16 %v2875, %v2871
        %v2888 = vpack.c.b16 %v2876, %v2872
        %v2889 = vpack.c.b16 %v2877, %v2873
        %v2890 = vpack.c.b16 %v2882, %v2878
        %v2891 = vpack.c.b16 %v2883, %v2879
        %v2892 = vpack.c.b16 %v2884, %v2880
        %v2893 = vpack.c.b16 %v2885, %v2881
        %2902 = vmatpush.bf16.xpose.msra.mxu0 0
        %2903 = vmatpush.bf16.xpose.msra.mxu0 0
        %2904 = vmatpush.bf16.xpose.msra.mxu0 0
        %2905 = vmatpush.bf16.xpose.msra.mxu0 0
        %2906 = vmatpush.bf16.xpose.msra.mxu0 0
        %2907 = vmatpush.bf16.xpose.msra.mxu0 0
        %2908 = vmatpush.bf16.xpose.msra.mxu0 %v2890
        %2909 = vmatpush.bf16.xpose.msra.mxu0 %v2886
        %2910 = vmatmul.bf16.gmra.mxu0 %v2850
        %v2911 = vpop.f32.mrf.mxu0
        %v2912 = vadd.f32 0.0, %v2911
        %v2913 = vpop.f32.mrf.mxu0
        %2914 = vdwg.mxu0
        %2915 = vmatpush.bf16.xpose.msra.mxu0 0
        %2916 = vmatpush.bf16.xpose.msra.mxu0 0
        %2917 = vmatpush.bf16.xpose.msra.mxu0 0
        %2918 = vmatpush.bf16.xpose.msra.mxu0 0
        %2919 = vmatpush.bf16.xpose.msra.mxu0 0
        %2920 = vmatpush.bf16.xpose.msra.mxu0 0
        %2921 = vmatpush.bf16.xpose.msra.mxu0 %v2891
        %2922 = vmatpush.bf16.xpose.msra.mxu0 %v2887
        %2923 = vmatmul.bf16.gmra.mxu0 %v2851
        %v2924 = vpop.f32.mrf.mxu0
        %v2925 = vadd.f32 %v2912, %v2924
        %v2926 = vpop.f32.mrf.mxu0
        %2927 = vdwg.mxu0
        %2928 = vmatpush.bf16.xpose.msra.mxu0 0
        %2929 = vmatpush.bf16.xpose.msra.mxu0 0
        %2930 = vmatpush.bf16.xpose.msra.mxu0 0
        %2931 = vmatpush.bf16.xpose.msra.mxu0 0
        %2932 = vmatpush.bf16.xpose.msra.mxu0 0
        %2933 = vmatpush.bf16.xpose.msra.mxu0 0
        %2934 = vmatpush.bf16.xpose.msra.mxu0 %v2892
        %2935 = vmatpush.bf16.xpose.msra.mxu0 %v2888
        %2936 = vmatmul.bf16.gmra.mxu0 %v2852
        %v2937 = vpop.f32.mrf.mxu0
        %v2938 = vadd.f32 %v2925, %v2937
        %v2939 = vpop.f32.mrf.mxu0
        %2940 = vdwg.mxu0
        %2941 = vmatpush.bf16.xpose.msra.mxu0 0
        %2942 = vmatpush.bf16.xpose.msra.mxu0 0
        %2943 = vmatpush.bf16.xpose.msra.mxu0 0
        %2944 = vmatpush.bf16.xpose.msra.mxu0 0
        %2945 = vmatpush.bf16.xpose.msra.mxu0 0
        %2946 = vmatpush.bf16.xpose.msra.mxu0 0
        %2947 = vmatpush.bf16.xpose.msra.mxu0 %v2893
        %2948 = vmatpush.bf16.xpose.msra.mxu0 %v2889
        %2949 = vmatmul.bf16.gmra.mxu0 %v2853
        %v2950 = vpop.f32.mrf.mxu0
        %v2951 = vadd.f32 %v2938, %v2950
        %v2952 = vpop.f32.mrf.mxu0
        %2953 = vdwg.mxu0
        %v2954 = vadd.f32 %v2684, %v2951
        %v2955 = vld [vmem:[#allocation5 + $0xd4] sm:$0xff]
        %v2956 = vld [vmem:[#allocation5 + $0xdc] sm:$0xff]
        %v2957 = vld [vmem:[#allocation5 + $0x1f8] sm:$0xff]
        %v2958 = vld [vmem:[#allocation5 + $0x200] sm:$0xff]
        %v2959 = vld [vmem:[#allocation5 + $0x31c] sm:$0xff]
        %v2960 = vld [vmem:[#allocation5 + $0x324] sm:$0xff]
        %v2961 = vld [vmem:[#allocation5 + $0x440] sm:$0xff]
        %v2962 = vld [vmem:[#allocation5 + $0x448] sm:$0xff]
        %v2971 = vunpack.c.l.b16 %v2955
        %v2972 = vunpack.c.h.b16 %v2955
        %v2973 = vunpack.c.l.b16 %v2956
        %v2974 = vunpack.c.h.b16 %v2956
        %v2975 = vunpack.c.l.b16 %v2957
        %v2976 = vunpack.c.h.b16 %v2957
        %v2977 = vunpack.c.l.b16 %v2958
        %v2978 = vunpack.c.h.b16 %v2958
        %v2979 = vunpack.c.l.b16 %v2959
        %v2980 = vunpack.c.h.b16 %v2959
        %v2981 = vunpack.c.l.b16 %v2960
        %v2982 = vunpack.c.h.b16 %v2960
        %v2983 = vunpack.c.l.b16 %v2961
        %v2984 = vunpack.c.h.b16 %v2961
        %v2985 = vunpack.c.l.b16 %v2962
        %v2986 = vunpack.c.h.b16 %v2962
        %v2987 = vpack.c.b16 %v2975, %v2971
        %v2988 = vpack.c.b16 %v2976, %v2972
        %v2989 = vpack.c.b16 %v2977, %v2973
        %v2990 = vpack.c.b16 %v2978, %v2974
        %v2991 = vpack.c.b16 %v2983, %v2979
        %v2992 = vpack.c.b16 %v2984, %v2980
        %v2993 = vpack.c.b16 %v2985, %v2981
        %v2994 = vpack.c.b16 %v2986, %v2982
        %3003 = vmatpush.bf16.msra.mxu0 0
        %3004 = vmatpush.bf16.msra.mxu0 0
        %3005 = vmatpush.bf16.msra.mxu0 0
        %3006 = vmatpush.bf16.msra.mxu0 0
        %3007 = vmatpush.bf16.msra.mxu0 0
        %3008 = vmatpush.bf16.msra.mxu0 0
        %3009 = vmatpush.bf16.msra.mxu0 %v2991
        %3010 = vmatpush.bf16.msra.mxu0 %v2987
        %3011 = vmatmul.bf16.gmra.mxu0 %v2199
        %v3012 = vpop.f32.mrf.mxu0
        %v3013 = vadd.f32 0.0, %v3012
        %v3014 = vpop.f32.mrf.mxu0
        %3015 = vdwg.mxu0
        %3016 = vmatpush.bf16.msra.mxu0 0
        %3017 = vmatpush.bf16.msra.mxu0 0
        %3018 = vmatpush.bf16.msra.mxu0 0
        %3019 = vmatpush.bf16.msra.mxu0 0
        %3020 = vmatpush.bf16.msra.mxu0 0
        %3021 = vmatpush.bf16.msra.mxu0 0
        %3022 = vmatpush.bf16.msra.mxu0 %v2992
        %3023 = vmatpush.bf16.msra.mxu0 %v2988
        %3024 = vmatmul.bf16.gmra.mxu0 %v2199
        %v3025 = vpop.f32.mrf.mxu0
        %v3026 = vadd.f32 0.0, %v3025
        %v3027 = vpop.f32.mrf.mxu0
        %3028 = vdwg.mxu0
        %3029 = vmatpush.bf16.msra.mxu0 0
        %3030 = vmatpush.bf16.msra.mxu0 0
        %3031 = vmatpush.bf16.msra.mxu0 0
        %3032 = vmatpush.bf16.msra.mxu0 0
        %3033 = vmatpush.bf16.msra.mxu0 0
        %3034 = vmatpush.bf16.msra.mxu0 0
        %3035 = vmatpush.bf16.msra.mxu0 %v2993
        %3036 = vmatpush.bf16.msra.mxu0 %v2989
        %3037 = vmatmul.bf16.gmra.mxu0 %v2199
        %v3038 = vpop.f32.mrf.mxu0
        %v3039 = vadd.f32 0.0, %v3038
        %v3040 = vpop.f32.mrf.mxu0
        %3041 = vdwg.mxu0
        %3042 = vmatpush.bf16.msra.mxu0 0
        %3043 = vmatpush.bf16.msra.mxu0 0
        %3044 = vmatpush.bf16.msra.mxu0 0
        %3045 = vmatpush.bf16.msra.mxu0 0
        %3046 = vmatpush.bf16.msra.mxu0 0
        %3047 = vmatpush.bf16.msra.mxu0 0
        %3048 = vmatpush.bf16.msra.mxu0 %v2994
        %3049 = vmatpush.bf16.msra.mxu0 %v2990
        %3050 = vmatmul.bf16.gmra.mxu0 %v2199
        %v3051 = vpop.f32.mrf.mxu0
        %v3052 = vadd.f32 0.0, %v3051
        %v3053 = vpop.f32.mrf.mxu0
        %3054 = vdwg.mxu0
        %v3055 = vpack.c.bf16 %v3026, %v3013
        %v3056 = vpack.c.bf16 %v3052, %v3039
        %s3057 = scalar_lea.vmem %s4, 25
        %v3058 = vld [vmem:[%s3057] ss:$2 sm:$0xf]
        %v3060 = vperm.slane %v3058, 0
        %v3061 = vperm.slane %v3058, 1
        %v3062 = vperm.slane %v3058, 2
        %v3063 = vperm.slane %v3058, 3
        %v3068 = vpack.c.bf16 %v3061, %v3060
        %v3069 = vpack.c.bf16 %v3063, %v3062
        %v3072 = vunpack.c.l.b16 %v3068
        %v3073 = vunpack.c.h.b16 %v3068
        %v3074 = vunpack.c.l.b16 %v3069
        %v3075 = vunpack.c.h.b16 %v3069
        %v3076 = vpack.c.b16 %v3072, %v3072
        %v3077 = vpack.c.b16 %v3073, %v3073
        %v3078 = vpack.c.b16 %v3074, %v3074
        %v3079 = vpack.c.b16 %v3075, %v3075
        %v3081 = vpack.i.b16 %v3076, %v3076
        %v3083 = vperm.slane %v3081, 0
        %v3085 = vpack.i.b16 %v3077, %v3077
        %v3087 = vperm.slane %v3085, 0
        %v3089 = vpack.i.b16 %v3078, %v3078
        %v3091 = vperm.slane %v3089, 0
        %v3093 = vpack.i.b16 %v3079, %v3079
        %v3095 = vperm.slane %v3093, 0
        %v3096 = vunpack.c.l.bf16 %v3055
        %v3097 = vunpack.c.h.bf16 %v3055
        %v3098 = vunpack.c.l.bf16 %v3056
        %v3099 = vunpack.c.h.bf16 %v3056
        %v3100 = vunpack.c.l.bf16 %v3083
        %v3101 = vunpack.c.l.bf16 %v3087
        %v3102 = vunpack.c.l.bf16 %v3091
        %v3103 = vunpack.c.l.bf16 %v3095
        %v3104 = vadd.f32 %v3096, %v3100
        %v3105 = vadd.f32 %v3097, %v3101
        %v3106 = vadd.f32 %v3098, %v3102
        %v3107 = vadd.f32 %v3099, %v3103
        %v3108 = vpack.c.bf16 %v3105, %v3104
        %v3109 = vpack.c.bf16 %v3107, %v3106
        %v3110 = vunpack.c.l.bf16 %v3108
        %v3111 = vunpack.c.h.bf16 %v3108
        %v3112 = vunpack.c.l.bf16 %v3109
        %v3113 = vunpack.c.h.bf16 %v3109
        %v3114 = vmax.f32 %v3110, 0.0
        %v3115 = vmax.f32 %v3111, 0.0
        %v3116 = vmax.f32 %v3112, 0.0
        %v3117 = vmax.f32 %v3113, 0.0
        %v3118 = vpack.c.bf16 %v3114, %v3114
        %v3119 = vpack.c.bf16 %v3115, %v3115
        %v3120 = vpack.c.bf16 %v3116, %v3116
        %v3121 = vpack.c.bf16 %v3117, %v3117
        %v3122 = vld [vmem:[#allocation5 + $0x114] sm:$0xff]
        %v3123 = vld [vmem:[#allocation5 + $0x11c] sm:$0xff]
        %v3124 = vld [vmem:[#allocation5 + $0x238] sm:$0xff]
        %v3125 = vld [vmem:[#allocation5 + $0x240] sm:$0xff]
        %v3126 = vld [vmem:[#allocation5 + $0x35c] sm:$0xff]
        %v3127 = vld [vmem:[#allocation5 + $0x364] sm:$0xff]
        %v3128 = vld [vmem:[#allocation5 + $0x480] sm:$0xff]
        %v3129 = vld [vmem:[#allocation5 + $0x488] sm:$0xff]
        %v3138 = vunpack.c.l.b16 %v3122
        %v3139 = vunpack.c.h.b16 %v3122
        %v3140 = vunpack.c.l.b16 %v3123
        %v3141 = vunpack.c.h.b16 %v3123
        %v3142 = vunpack.c.l.b16 %v3124
        %v3143 = vunpack.c.h.b16 %v3124
        %v3144 = vunpack.c.l.b16 %v3125
        %v3145 = vunpack.c.h.b16 %v3125
        %v3146 = vunpack.c.l.b16 %v3126
        %v3147 = vunpack.c.h.b16 %v3126
        %v3148 = vunpack.c.l.b16 %v3127
        %v3149 = vunpack.c.h.b16 %v3127
        %v3150 = vunpack.c.l.b16 %v3128
        %v3151 = vunpack.c.h.b16 %v3128
        %v3152 = vunpack.c.l.b16 %v3129
        %v3153 = vunpack.c.h.b16 %v3129
        %v3154 = vpack.c.b16 %v3142, %v3138
        %v3155 = vpack.c.b16 %v3143, %v3139
        %v3156 = vpack.c.b16 %v3144, %v3140
        %v3157 = vpack.c.b16 %v3145, %v3141
        %v3158 = vpack.c.b16 %v3150, %v3146
        %v3159 = vpack.c.b16 %v3151, %v3147
        %v3160 = vpack.c.b16 %v3152, %v3148
        %v3161 = vpack.c.b16 %v3153, %v3149
        %3170 = vmatpush.bf16.xpose.msra.mxu0 0
        %3171 = vmatpush.bf16.xpose.msra.mxu0 0
        %3172 = vmatpush.bf16.xpose.msra.mxu0 0
        %3173 = vmatpush.bf16.xpose.msra.mxu0 0
        %3174 = vmatpush.bf16.xpose.msra.mxu0 0
        %3175 = vmatpush.bf16.xpose.msra.mxu0 0
        %3176 = vmatpush.bf16.xpose.msra.mxu0 %v3158
        %3177 = vmatpush.bf16.xpose.msra.mxu0 %v3154
        %3178 = vmatmul.bf16.gmra.mxu0 %v3118
        %v3179 = vpop.f32.mrf.mxu0
        %v3180 = vadd.f32 0.0, %v3179
        %v3181 = vpop.f32.mrf.mxu0
        %3182 = vdwg.mxu0
        %3183 = vmatpush.bf16.xpose.msra.mxu0 0
        %3184 = vmatpush.bf16.xpose.msra.mxu0 0
        %3185 = vmatpush.bf16.xpose.msra.mxu0 0
        %3186 = vmatpush.bf16.xpose.msra.mxu0 0
        %3187 = vmatpush.bf16.xpose.msra.mxu0 0
        %3188 = vmatpush.bf16.xpose.msra.mxu0 0
        %3189 = vmatpush.bf16.xpose.msra.mxu0 %v3159
        %3190 = vmatpush.bf16.xpose.msra.mxu0 %v3155
        %3191 = vmatmul.bf16.gmra.mxu0 %v3119
        %v3192 = vpop.f32.mrf.mxu0
        %v3193 = vadd.f32 %v3180, %v3192
        %v3194 = vpop.f32.mrf.mxu0
        %3195 = vdwg.mxu0
        %3196 = vmatpush.bf16.xpose.msra.mxu0 0
        %3197 = vmatpush.bf16.xpose.msra.mxu0 0
        %3198 = vmatpush.bf16.xpose.msra.mxu0 0
        %3199 = vmatpush.bf16.xpose.msra.mxu0 0
        %3200 = vmatpush.bf16.xpose.msra.mxu0 0
        %3201 = vmatpush.bf16.xpose.msra.mxu0 0
        %3202 = vmatpush.bf16.xpose.msra.mxu0 %v3160
        %3203 = vmatpush.bf16.xpose.msra.mxu0 %v3156
        %3204 = vmatmul.bf16.gmra.mxu0 %v3120
        %v3205 = vpop.f32.mrf.mxu0
        %v3206 = vadd.f32 %v3193, %v3205
        %v3207 = vpop.f32.mrf.mxu0
        %3208 = vdwg.mxu0
        %3209 = vmatpush.bf16.xpose.msra.mxu0 0
        %3210 = vmatpush.bf16.xpose.msra.mxu0 0
        %3211 = vmatpush.bf16.xpose.msra.mxu0 0
        %3212 = vmatpush.bf16.xpose.msra.mxu0 0
        %3213 = vmatpush.bf16.xpose.msra.mxu0 0
        %3214 = vmatpush.bf16.xpose.msra.mxu0 0
        %3215 = vmatpush.bf16.xpose.msra.mxu0 %v3161
        %3216 = vmatpush.bf16.xpose.msra.mxu0 %v3157
        %3217 = vmatmul.bf16.gmra.mxu0 %v3121
        %v3218 = vpop.f32.mrf.mxu0
        %v3219 = vadd.f32 %v3206, %v3218
        %v3220 = vpop.f32.mrf.mxu0
        %3221 = vdwg.mxu0
        %v3222 = vadd.f32 %v2954, %v3219
        %v3223 = vld [vmem:[#allocation8 + $0x5a] sm:$0x1]
        %v3224 = vperm.slane %v3223, 0
        %v3225 = vadd.f32 %v3222, %v3224
        %v3226 = vadd.f32 %v2148, %v3225
        %v3227 = vsel %vm308, %v3226, 0.0
        %3228 = vadd.xlane.f32.xlu0 %v3227
        %v3229 = vpop.xlane.xlu0 %3228
        %v3230 = vmul.f32 %v3229, %v448
        %v3231 = vsub.f32 %v3226, %v3230
        %v3232 = vmul.f32 %v3231, %v3231
        %v3233 = vsel %vm308, %v3232, 0.0
        %3234 = vadd.xlane.f32.xlu0 %v3233
        %v3235 = vpop.xlane.xlu0 %3234
        %v3236 = vmul.f32 %v3235, %v448
        %v3237 = vadd.f32 %v3236, 1e-05
        %v3238 = vrsqrt.pop %v3237
        %v3239 = vmul.f32 %v3238, %v3237
        %v3240 = vmul.f32 %v3239, %v3238
        %v3241 = vmul.f32 0.5, %v3240
        %v3242 = vsub.f32 1.5, %v3241
        %v3243 = vmul.f32 %v3238, %v3242
        %vm3244 = vweird.f32 %v3237
        %vm3245 = vweird.f32 %v3238
        %vm3246 = vmor %vm3244, %vm3245
        %v3247 = vsel %vm3246, %v3238, %v3243
        %v3248 = vmul.f32 %v3231, %v3247
        %v3249 = vld [vmem:[#allocation8 + $0x57] sm:$0x1]
        %v3250 = vperm.slane %v3249, 0
        %v3251 = vmul.f32 %v3248, %v3250
        %v3252 = vld [vmem:[#allocation8 + $0x58] sm:$0x1]
        %v3253 = vperm.slane %v3252, 0
        %v3254 = vadd.f32 %v3251, %v3253
        %v3255 = vld [vmem:[#allocation5 + $0x20] sm:$0xf]
        %v3256 = vld [vmem:[#allocation5 + $0x144] sm:$0xf]
        %v3257 = vld [vmem:[#allocation5 + $0x268] sm:$0xf]
        %v3258 = vld [vmem:[#allocation5 + $0x38c] sm:$0xf]
        %v3259 = vpack.c.bf16 %v3254, %v3254
        %v3260 = vld [vmem:[#allocation8 + $0x5b] sm:$0x1]
        %v3261 = vperm.slane %v3260, 0
        %v3266 = vunpack.c.l.b16 %v3255
        %v3267 = vunpack.c.l.b16 %v3256
        %v3268 = vunpack.c.l.b16 %v3257
        %v3269 = vunpack.c.l.b16 %v3258
        %v3270 = vpack.c.b16 %v3267, %v3266
        %v3271 = vpack.c.b16 %v3269, %v3268
        %v3275 = vsel %vm308, %v3259, 0
        %3277 = vmatpush.bf16.msra.mxu0 0
        %3278 = vmatpush.bf16.msra.mxu0 0
        %3279 = vmatpush.bf16.msra.mxu0 0
        %3280 = vmatpush.bf16.msra.mxu0 0
        %3281 = vmatpush.bf16.msra.mxu0 0
        %3282 = vmatpush.bf16.msra.mxu0 0
        %3283 = vmatpush.bf16.msra.mxu0 %v3271
        %3284 = vmatpush.bf16.msra.mxu0 %v3270
        %3285 = vmatmul.bf16.gmra.mxu0 %v3275
        %v3286 = vpop.f32.mrf.mxu0
        %v3287 = vadd.f32 %v3261, %v3286
        %v3288 = vpop.f32.mrf.mxu0
        %3289 = vdwg.mxu0
        %3290 = vst [vmem:[%s233] sm:$0xff] %v3287
        %s3291 = sand.u32 %s126, 1
        %s3292 = scalar_lea.sflag [#allocation7], %s3291
        %s3293 = sand.u32 %s126, 1
        %s3294 = smul.addr %s3293, 8
        %s3295 = scalar_lea.vmem [#allocation10], %s3294
        // Predicated region
        $region45: #{tpu_custom_call.1} parent=35 // pred_check
          %p3296 = pneg %p136
        $region46: #{tpu_custom_call.1} parent=35 // pred_check_branch
          %3298 = sbr.rel (%p3296) target = $region48
        $region47: #{tpu_custom_call.1} parent=35 // pred_region
          %3300 = vsyncadd %s3292, 0
          %s3301 = smul.addr %s29, 8
          %s3302 = scalar_lea.hbm %s5, %s3301
          %s3304 = sshll.u32 %s3295, 4
          %s3305 = int_to_ptr.vmem [resolvable:$true] %s3304
          %s3306 = sshll.u32 %s3302, 4
          %s3307 = int_to_ptr.hbm [resolvable:$true] %s3306
          %3309 = dma.vmem_to_hbm [thread:$0]  %s3305, 128, %s3307, %s3292
        $region48: #{tpu_custom_call.1} parent=35 // pred_fallthru
          _
      $region36: #{tpu_custom_call.1} parent=5 // pred_fallthru
        _
      %p3310 = scmp.le.s32.totalorder 2, %s24
      // Predicated region
      $region49: #{tpu_custom_call.1} parent=5 // pred_check
        %p3311 = pneg %p3310
      $region50: #{tpu_custom_call.1} parent=5 // pred_check_branch
        %3313 = sbr.rel (%p3311) target = $region52
      $region51: #{tpu_custom_call.1} parent=5 // pred_region
        %s3314 = ssub.s32 %s24, 2
        // Predicated region
        $region53: #{tpu_custom_call.1} parent=51 // pred_check
          %p3315 = pneg %p142
        $region54: #{tpu_custom_call.1} parent=51 // pred_check_branch
          %3317 = sbr.rel (%p3315) target = $region56
        $region55: #{tpu_custom_call.1} parent=51 // pred_region
          %s3318 = sand.u32 %s127, 1
          %s3319 = scalar_lea.sflag [#allocation7], %s3318
          %s3320 = sand.u32 %s127, 1
          %s3321 = smul.addr %s3320, 8
          %s3322 = scalar_lea.vmem [#allocation10], %s3321
          %3324 = dma.done %s3319, 128
        $region56: #{tpu_custom_call.1} parent=51 // pred_fallthru
          _
      $region52: #{tpu_custom_call.1} parent=5 // pred_fallthru
        _
    $region6: #{tpu_custom_call.1} parent=1 // loop_footer
      %s28 = sadd.s32 1, %s24
    $region7: #{tpu_custom_call.1} parent=1 // loop_footer_branch
      %23 = sbr.rel target = $region3
    $region8: #{tpu_custom_call.1} parent=1 // loop_exit
      _
    %3325 = vsyncpa [#allocation6], 1
    %s3326 = scalar_lea.sflag [#allocation6], 1
    %3327 = vsyncpa %s3326, 1
    %3328 = vsyncpa [#allocation9], 1
    %3329 = vsyncpa [#allocation7], 1
    %s3330 = scalar_lea.sflag [#allocation7], 1
    %3331 = vsyncpa %s3330, 1

</llo_original>
